<compile_context>
chip_gen: v7x
topology: tpu7x:2x2x1
jax: 0.10.0
libtpu: 0.0.40
codegen_flags: <defaults>
</compile_context>

<pallas_src>
import jax
import jax.numpy as jnp
from jax.experimental import pallas as pl
from jax.experimental.pallas import tpu as pltpu


def attention_kernel(x_ref, mask_ref, w1_ref, b1_ref, w2_ref, out_ref):
    # Block shapes per grid step:
    #   x_ref    : (TB*seq, emb)   VMEM bf16 (lane-dense 2D MXU feed)
    #   mask_ref : (TB, seq)       VMEM int32 (nonzero => masked)
    #   w1_ref   : (emb, hidden)   VMEM bf16, grid-invariant
    #   b1_ref   : (1, hidden)     VMEM f32,  grid-invariant
    #   w2_ref   : (1, hidden)     VMEM f32,  second Linear weight as a row
    #   out_ref  : (TB, seq)       VMEM f32
    tb, seq = out_ref.shape

    # Linear(emb -> hidden) + ReLU over all TB*seq rows at once (fills MXU
    # rows).  bf16 inputs, f32 accumulation.
    h = jnp.dot(x_ref[...], w1_ref[...], preferred_element_type=jnp.float32)
    h = jnp.maximum(h + b1_ref[...], 0.0)
    # TODO(synk): Dropout(p=drop_ratio) omitted (p=0 / eval semantics -> identity).

    # Linear(hidden -> 1): N=1 matmul replaced by VPU multiply + XLU lane
    # reduce.  Second-Linear bias b2 dropped (softmax is shift-invariant).
    s = jnp.sum(h * w2_ref[...], axis=-1)          # (TB*seq,)
    s = s.reshape(tb, seq)                         # one relayout per TB-block

    # masked_fill_(mask.bool(), -inf)
    s = jnp.where(mask_ref[...] != 0, -jnp.inf, s)

    # softmax over seq (dim=1); masked lanes contribute exp(-inf) = 0.
    s_max = jnp.max(s, axis=1, keepdims=True)
    e = jnp.exp(s - s_max)
    denom = jnp.sum(e, axis=1, keepdims=True)
    # EUP approximate reciprocal + one Newton-Raphson step -> rows sum to 1
    # to f32 precision while the divide stays off the VALU critical path.
    r = pl.reciprocal(denom, approx=True)
    r = r * (2.0 - denom * r)
    out_ref[...] = e * r


def _default_block_b(bsz, seq, emb):
    """>= 4 grid steps when bsz allows (>= 2 pipelined steps per v7x TC), with
    the bf16 x block (lane-padded to >= 128) capped at ~8 MiB per buffer."""
    lane_emb = max(emb, 128)                       # VMEM lane padding
    cap = max(8, (8 * 1024 * 1024) // (seq * lane_emb * 2))
    tb = max(8, bsz // 4)
    tb = min(tb, cap, bsz)
    if bsz >= 8:
        tb = max(8, (tb // 8) * 8)                 # sublane-aligned (tb, seq) blocks
    return tb


def attention_layer(x, mask, w1, b1, w2, b2=None, *, block_b=None):
    """Pallas forward of AttentionLayer.

    x    : (bsz, seq, emb) float32
    mask : (bsz, seq)      int (nonzero => masked)
    w1   : (emb, hidden)   first Linear weight (pre-transposed for x @ w1)
    b1   : (1, hidden)
    w2   : (hidden, 1)     second Linear weight
    b2   : ignored - softmax is shift-invariant, so the second Linear's
           scalar bias cannot change the output.
    Returns (bsz, seq) float32 softmax attention weights.
    """
    del b2
    bsz, seq, emb = x.shape
    hidden = w1.shape[1]
    tb = min(block_b, bsz) if block_b is not None else _default_block_b(bsz, seq, emb)
    grid = (pl.cdiv(bsz, tb),)

    # bf16 MXU feed (f32 accumulation in-kernel) halves the dominant HBM read.
    x2d = x.reshape(bsz * seq, emb).astype(jnp.bfloat16)
    w1_bf = w1.astype(jnp.bfloat16)
    w2_row = w2.reshape(1, hidden).astype(jnp.float32)   # row layout for VPU mul + lane reduce
    b1_f32 = b1.reshape(1, hidden).astype(jnp.float32)
    # TODO(synk): an int8/bool mask would shrink mask DMA further (~1/emb of x
    # traffic) but needs (32,128)-aligned blocks; int32 blocks kept for safety.
    mask_i32 = mask if mask.dtype == jnp.int32 else mask.astype(jnp.int32)

    # Scoped-VMEM budget: ~75% of the chip's VMEM (=> ~48 MiB on v7x's 64 MiB,
    # ~96 MiB on v5e/v6e's 128 MiB), capped at 100 MiB.
    try:
        vmem_cap = int(pltpu.get_tpu_info().vmem_capacity_bytes)
    except Exception:
        vmem_cap = 64 * 1024 * 1024
    vmem_limit = min((vmem_cap * 3) // 4, 100 * 1024 * 1024)

    def _specs(invariant_mode):
        kw = {} if invariant_mode is None else {"pipeline_mode": invariant_mode}
        return [
            pl.BlockSpec((tb * seq, emb), lambda b: (b, 0)),
            pl.BlockSpec((tb, seq), lambda b: (b, 0)),
            pl.BlockSpec((emb, hidden), lambda b: (0, 0), **kw),
            pl.BlockSpec((1, hidden), lambda b: (0, 0), **kw),
            pl.BlockSpec((1, hidden), lambda b: (0, 0), **kw),
        ]

    def _call(in_specs):
        return pl.pallas_call(
            attention_kernel,
            out_shape=jax.ShapeDtypeStruct((bsz, seq), jnp.float32),
            grid_spec=pltpu.PrefetchScalarGridSpec(
                num_scalar_prefetch=0,
                grid=grid,
                in_specs=in_specs,
                out_specs=pl.BlockSpec((tb, seq), lambda b: (b, 0)),
            ),
            compiler_params=pltpu.CompilerParams(
                dimension_semantics=("parallel",),
                vmem_limit_bytes=vmem_limit,
            ),
        )(x2d, mask_i32, w1_bf, b1_f32, w2_row)

    try:
        # Grid-invariant operands single-buffered: no wasted VMEM / DMA.
        return _call(_specs(pl.Buffered(1)))
    except Exception:
        # Fallback for Pallas versions rejecting single-buffered pipeline_mode;
        # default double-buffering only costs a little extra VMEM here.
        return _call(_specs(None))


def reference(x, mask, w1, b1, w2, b2):
    h = jnp.maximum(jnp.einsum("bse,eh->bsh", x, w1) + b1[0], 0.0)
    s = jnp.einsum("bsh,ho->bso", h, w2)[..., 0] + b2[0, 0]
    s = jnp.where(mask != 0, -jnp.inf, s)
    return jax.nn.softmax(s, axis=1)


if __name__ == "__main__":
    bsz, seq, emb = 32, 128, 64
    hidden = emb // 2

    key = jax.random.PRNGKey(0)
    kx, kw1, kb1, kw2, kb2, km = jax.random.split(key, 6)

    x = jax.random.normal(kx, (bsz, seq, emb), dtype=jnp.float32)

    # Deterministic params (shapes match nn.Linear(emb, emb//2), nn.Linear(emb//2, 1)).
    w1 = jax.random.normal(kw1, (emb, hidden), dtype=jnp.float32) * 0.1
    b1 = jax.random.normal(kb1, (1, hidden), dtype=jnp.float32) * 0.1
    w2 = jax.random.normal(kw2, (hidden, 1), dtype=jnp.float32) * 0.1
    b2 = jax.random.normal(kb2, (1, 1), dtype=jnp.float32) * 0.1

    # Mask: nonzero => masked.  Keep column 0 unmasked so no row is all -inf
    # (a fully-masked row would be NaN in both kernel and PyTorch reference).
    mask = (jax.random.uniform(km, (bsz, seq)) > 0.6).astype(jnp.int32)
    mask = mask.at[:, 0].set(0)

    out = attention_layer(x, mask, w1, b1, w2, b2)
    out = jax.block_until_ready(out)

    ref = reference(x, mask, w1, b1, w2, b2)
    assert out.shape == (bsz, seq)
    # Rows sum to 1 (NR-refined reciprocal) and masked positions are exactly 0.
    assert jnp.allclose(jnp.sum(out, axis=1), 1.0, atol=1e-5)
    assert float(jnp.max(jnp.where(mask != 0, out, 0.0))) < 1e-6
    # bf16 MXU feed (f32 accumulation): small drift vs the pure-f32 reference.
    assert jnp.allclose(out, ref, atol=1e-2, rtol=1e-2), "mismatch vs reference"

    print("KERNEL_OK")
</pallas_src>

<mosaic_0001>
module attributes {stable_mosaic.version = 11 : i64} {
  func.func @attention_kernel(%arg0: i32, %arg1: memref<1024x64xbf16, #tpu.memory_space<vmem>>, %arg2: memref<8x128xi32, #tpu.memory_space<vmem>>, %arg3: memref<64x32xbf16, #tpu.memory_space<vmem>>, %arg4: memref<1x32xf32, #tpu.memory_space<vmem>>, %arg5: memref<1x32xf32, #tpu.memory_space<vmem>>, %arg6: memref<8x128xf32, #tpu.memory_space<vmem>>) attributes {dimension_semantics = [#tpu.dimension_semantics<parallel>], iteration_bounds = array<i64: 4>, scalar_prefetch = 0 : i64, scratch_operands = 0 : i64, tpu.core_type = #tpu.core_type<tc>, window_params = [{transform_indices = @transform_0, window_bounds = array<i64: 1024, 64>}, {transform_indices = @transform_1, window_bounds = array<i64: 8, 128>}, {pipeline_mode = #tpu.pipeline_mode<synchronous>, transform_indices = @transform_2, window_bounds = array<i64: 64, 32>}, {pipeline_mode = #tpu.pipeline_mode<synchronous>, transform_indices = @transform_3, window_bounds = array<i64: 1, 32>}, {pipeline_mode = #tpu.pipeline_mode<synchronous>, transform_indices = @transform_4, window_bounds = array<i64: 1, 32>}, {transform_indices = @transform_5, window_bounds = array<i64: 8, 128>}]} {
    %c0 = arith.constant 0 : index
    %c0_0 = arith.constant 0 : index
    %0 = vector.load %arg1[%c0, %c0_0] : memref<1024x64xbf16, #tpu.memory_space<vmem>>, vector<1024x64xbf16>
    %c0_1 = arith.constant 0 : index
    %c0_2 = arith.constant 0 : index
    %1 = vector.load %arg3[%c0_1, %c0_2] : memref<64x32xbf16, #tpu.memory_space<vmem>>, vector<64x32xbf16>
    %cst = arith.constant dense<0.000000e+00> : vector<1024x32xf32>
    %2 = tpu.matmul %0, %1, %cst {dimension_numbers = #tpu.dot_dimension_numbers<[1], [0], [0], [1], [0, 0, 1, 1], [], []>} : vector<1024x64xbf16>, vector<64x32xbf16>, vector<1024x32xf32> -> vector<1024x32xf32>
    %c0_3 = arith.constant 0 : index
    %c0_4 = arith.constant 0 : index
    %3 = vector.load %arg4[%c0_3, %c0_4] : memref<1x32xf32, #tpu.memory_space<vmem>>, vector<1x32xf32>
    %4 = vector.broadcast %3 : vector<1x32xf32> to vector<1024x32xf32>
    %5 = arith.addf %2, %4 : vector<1024x32xf32>
    %cst_5 = arith.constant 0.000000e+00 : f32
    %6 = vector.broadcast %cst_5 : f32 to vector<1024x32xf32>
    %7 = arith.maximumf %5, %6 : vector<1024x32xf32>
    %c0_6 = arith.constant 0 : index
    %c0_7 = arith.constant 0 : index
    %8 = vector.load %arg5[%c0_6, %c0_7] : memref<1x32xf32, #tpu.memory_space<vmem>>, vector<1x32xf32>
    %9 = vector.broadcast %8 : vector<1x32xf32> to vector<1024x32xf32>
    %10 = arith.mulf %7, %9 : vector<1024x32xf32>
    %cst_8 = arith.constant dense<0.000000e+00> : vector<1024xf32>
    %11 = vector.multi_reduction <add>, %10, %cst_8 [1] : vector<1024x32xf32> to vector<1024xf32>
    %12 = vector.shape_cast %11 : vector<1024xf32> to vector<8x128xf32>
    %c0_9 = arith.constant 0 : index
    %c0_10 = arith.constant 0 : index
    %13 = vector.load %arg2[%c0_9, %c0_10] : memref<8x128xi32, #tpu.memory_space<vmem>>, vector<8x128xi32>
    %c0_i32 = arith.constant 0 : i32
    %14 = vector.broadcast %c0_i32 : i32 to vector<8x128xi32>
    %15 = arith.cmpi ne, %13, %14 : vector<8x128xi32>
    %cst_11 = arith.constant 0xFF800000 : f32
    %16 = vector.broadcast %cst_11 : f32 to vector<8x128xf32>
    %17 = arith.select %15, %16, %12 : vector<8x128xi1>, vector<8x128xf32>
    %cst_12 = arith.constant dense<0xFF800000> : vector<8xf32>
    %18 = vector.multi_reduction <maximumf>, %17, %cst_12 [1] : vector<8x128xf32> to vector<8xf32>
    %19 = vector.shape_cast %18 : vector<8xf32> to vector<8x1xf32>
    %20 = vector.broadcast %19 : vector<8x1xf32> to vector<8x128xf32>
    %21 = arith.subf %17, %20 : vector<8x128xf32>
    %22 = math.exp %21 : vector<8x128xf32>
    %cst_13 = arith.constant dense<0.000000e+00> : vector<8xf32>
    %23 = vector.multi_reduction <add>, %22, %cst_13 [1] : vector<8x128xf32> to vector<8xf32>
    %24 = vector.shape_cast %23 : vector<8xf32> to vector<8x1xf32>
    %25 = tpu.reciprocal %24 {approx = true} : vector<8x1xf32> -> vector<8x1xf32>
    %26 = arith.mulf %24, %25 : vector<8x1xf32>
    %cst_14 = arith.constant 2.000000e+00 : f32
    %27 = vector.broadcast %cst_14 : f32 to vector<8x1xf32>
    %28 = arith.subf %27, %26 : vector<8x1xf32>
    %29 = arith.mulf %25, %28 : vector<8x1xf32>
    %30 = vector.broadcast %29 : vector<8x1xf32> to vector<8x128xf32>
    %31 = arith.mulf %22, %30 : vector<8x128xf32>
    %c0_15 = arith.constant 0 : index
    %c0_16 = arith.constant 0 : index
    %32 = vector.load %arg6[%c0_15, %c0_16] : memref<8x128xf32, #tpu.memory_space<vmem>>, vector<8x128xf32>
    tpu.vector_store %arg6[%c0_15, %c0_16], %31 {strides = array<i32>} : memref<8x128xf32, #tpu.memory_space<vmem>>, vector<8x128xf32>,
    return
  }
  func.func @transform_0(%arg0: i32) -> (i32, i32) {
    %c0_i32 = arith.constant 0 : i32
    %c0_i32_0 = arith.constant 0 : i32
    return %arg0, %c0_i32 : i32, i32
  }
  func.func @transform_1(%arg0: i32) -> (i32, i32) {
    %c0_i32 = arith.constant 0 : i32
    %c0_i32_0 = arith.constant 0 : i32
    return %arg0, %c0_i32 : i32, i32
  }
  func.func @transform_2(%arg0: i32) -> (i32, i32) {
    %c0_i32 = arith.constant 0 : i32
    %c0_i32_0 = arith.constant 0 : i32
    %c0_i32_1 = arith.constant 0 : i32
    return %c0_i32, %c0_i32_0 : i32, i32
  }
  func.func @transform_3(%arg0: i32) -> (i32, i32) {
    %c0_i32 = arith.constant 0 : i32
    %c0_i32_0 = arith.constant 0 : i32
    %c0_i32_1 = arith.constant 0 : i32
    return %c0_i32, %c0_i32_0 : i32, i32
  }
  func.func @transform_4(%arg0: i32) -> (i32, i32) {
    %c0_i32 = arith.constant 0 : i32
    %c0_i32_0 = arith.constant 0 : i32
    %c0_i32_1 = arith.constant 0 : i32
    return %c0_i32, %c0_i32_0 : i32, i32
  }
  func.func @transform_5(%arg0: i32) -> (i32, i32) {
    %c0_i32 = arith.constant 0 : i32
    %c0_i32_0 = arith.constant 0 : i32
    return %arg0, %c0_i32 : i32, i32
  }
}

module attributes {stable_mosaic.version = 11 : i64} {
  func.func @attention_kernel(%arg0: i32, %arg1: memref<1024x64xbf16, #tpu.memory_space<vmem>>, %arg2: memref<8x128xi32, #tpu.memory_space<vmem>>, %arg3: memref<64x32xbf16, #tpu.memory_space<vmem>>, %arg4: memref<1x32xf32, #tpu.memory_space<vmem>>, %arg5: memref<1x32xf32, #tpu.memory_space<vmem>>, %arg6: memref<8x128xf32, #tpu.memory_space<vmem>>) attributes {dimension_semantics = [#tpu.dimension_semantics<parallel>], iteration_bounds = array<i64: 4>, scalar_prefetch = 0 : i64, scratch_operands = 0 : i64, tpu.core_type = #tpu.core_type<tc>, window_params = [{transform_indices = @transform_0, window_bounds = array<i64: 1024, 64>}, {transform_indices = @transform_1, window_bounds = array<i64: 8, 128>}, {pipeline_mode = #tpu.pipeline_mode<synchronous>, transform_indices = @transform_2, window_bounds = array<i64: 64, 32>}, {pipeline_mode = #tpu.pipeline_mode<synchronous>, transform_indices = @transform_3, window_bounds = array<i64: 1, 32>}, {pipeline_mode = #tpu.pipeline_mode<synchronous>, transform_indices = @transform_4, window_bounds = array<i64: 1, 32>}, {transform_indices = @transform_5, window_bounds = array<i64: 8, 128>}]} {
    %c0 = arith.constant 0 : index
    %c0_0 = arith.constant 0 : index
    %0 = vector.load %arg1[%c0, %c0_0] : memref<1024x64xbf16, #tpu.memory_space<vmem>>, vector<1024x64xbf16>
    %c0_1 = arith.constant 0 : index
    %c0_2 = arith.constant 0 : index
    %1 = vector.load %arg3[%c0_1, %c0_2] : memref<64x32xbf16, #tpu.memory_space<vmem>>, vector<64x32xbf16>
    %cst = arith.constant dense<0.000000e+00> : vector<1024x32xf32>
    %2 = tpu.matmul %0, %1, %cst {dimension_numbers = #tpu.dot_dimension_numbers<[1], [0], [0], [1], [0, 0, 1, 1], [], []>} : vector<1024x64xbf16>, vector<64x32xbf16>, vector<1024x32xf32> -> vector<1024x32xf32>
    %c0_3 = arith.constant 0 : index
    %c0_4 = arith.constant 0 : index
    %3 = vector.load %arg4[%c0_3, %c0_4] : memref<1x32xf32, #tpu.memory_space<vmem>>, vector<1x32xf32>
    %4 = vector.broadcast %3 : vector<1x32xf32> to vector<1024x32xf32>
    %5 = arith.addf %2, %4 : vector<1024x32xf32>
    %cst_5 = arith.constant 0.000000e+00 : f32
    %6 = vector.broadcast %cst_5 : f32 to vector<1024x32xf32>
    %7 = arith.maximumf %5, %6 : vector<1024x32xf32>
    %c0_6 = arith.constant 0 : index
    %c0_7 = arith.constant 0 : index
    %8 = vector.load %arg5[%c0_6, %c0_7] : memref<1x32xf32, #tpu.memory_space<vmem>>, vector<1x32xf32>
    %9 = vector.broadcast %8 : vector<1x32xf32> to vector<1024x32xf32>
    %10 = arith.mulf %7, %9 : vector<1024x32xf32>
    %cst_8 = arith.constant dense<0.000000e+00> : vector<1024xf32>
    %11 = vector.multi_reduction <add>, %10, %cst_8 [1] : vector<1024x32xf32> to vector<1024xf32>
    %12 = vector.shape_cast %11 : vector<1024xf32> to vector<8x128xf32>
    %c0_9 = arith.constant 0 : index
    %c0_10 = arith.constant 0 : index
    %13 = vector.load %arg2[%c0_9, %c0_10] : memref<8x128xi32, #tpu.memory_space<vmem>>, vector<8x128xi32>
    %c0_i32 = arith.constant 0 : i32
    %14 = vector.broadcast %c0_i32 : i32 to vector<8x128xi32>
    %15 = arith.cmpi ne, %13, %14 : vector<8x128xi32>
    %cst_11 = arith.constant 0xFF800000 : f32
    %16 = vector.broadcast %cst_11 : f32 to vector<8x128xf32>
    %17 = arith.select %15, %16, %12 : vector<8x128xi1>, vector<8x128xf32>
    %cst_12 = arith.constant dense<0xFF800000> : vector<8xf32>
    %18 = vector.multi_reduction <maximumf>, %17, %cst_12 [1] : vector<8x128xf32> to vector<8xf32>
    %19 = vector.shape_cast %18 : vector<8xf32> to vector<8x1xf32>
    %20 = vector.broadcast %19 : vector<8x1xf32> to vector<8x128xf32>
    %21 = arith.subf %17, %20 : vector<8x128xf32>
    %22 = math.exp %21 : vector<8x128xf32>
    %cst_13 = arith.constant dense<0.000000e+00> : vector<8xf32>
    %23 = vector.multi_reduction <add>, %22, %cst_13 [1] : vector<8x128xf32> to vector<8xf32>
    %24 = vector.shape_cast %23 : vector<8xf32> to vector<8x1xf32>
    %25 = tpu.reciprocal %24 {approx = true} : vector<8x1xf32> -> vector<8x1xf32>
    %26 = arith.mulf %24, %25 : vector<8x1xf32>
    %cst_14 = arith.constant 2.000000e+00 : f32
    %27 = vector.broadcast %cst_14 : f32 to vector<8x1xf32>
    %28 = arith.subf %27, %26 : vector<8x1xf32>
    %29 = arith.mulf %25, %28 : vector<8x1xf32>
    %30 = vector.broadcast %29 : vector<8x1xf32> to vector<8x128xf32>
    %31 = arith.mulf %22, %30 : vector<8x128xf32>
    %c0_15 = arith.constant 0 : index
    %c0_16 = arith.constant 0 : index
    %32 = vector.load %arg6[%c0_15, %c0_16] : memref<8x128xf32, #tpu.memory_space<vmem>>, vector<8x128xf32>
    tpu.vector_store %arg6[%c0_15, %c0_16], %31 {strides = array<i32>} : memref<8x128xf32, #tpu.memory_space<vmem>>, vector<8x128xf32>,
    return
  }
  func.func @transform_0(%arg0: i32) -> (i32, i32) {
    %c0_i32 = arith.constant 0 : i32
    %c0_i32_0 = arith.constant 0 : i32
    return %arg0, %c0_i32 : i32, i32
  }
  func.func @transform_1(%arg0: i32) -> (i32, i32) {
    %c0_i32 = arith.constant 0 : i32
    %c0_i32_0 = arith.constant 0 : i32
    return %arg0, %c0_i32 : i32, i32
  }
  func.func @transform_2(%arg0: i32) -> (i32, i32) {
    %c0_i32 = arith.constant 0 : i32
    %c0_i32_0 = arith.constant 0 : i32
    %c0_i32_1 = arith.constant 0 : i32
    return %c0_i32, %c0_i32_0 : i32, i32
  }
  func.func @transform_3(%arg0: i32) -> (i32, i32) {
    %c0_i32 = arith.constant 0 : i32
    %c0_i32_0 = arith.constant 0 : i32
    %c0_i32_1 = arith.constant 0 : i32
    return %c0_i32, %c0_i32_0 : i32, i32
  }
  func.func @transform_4(%arg0: i32) -> (i32, i32) {
    %c0_i32 = arith.constant 0 : i32
    %c0_i32_0 = arith.constant 0 : i32
    %c0_i32_1 = arith.constant 0 : i32
    return %c0_i32, %c0_i32_0 : i32, i32
  }
  func.func @transform_5(%arg0: i32) -> (i32, i32) {
    %c0_i32 = arith.constant 0 : i32
    %c0_i32_0 = arith.constant 0 : i32
    return %arg0, %c0_i32 : i32, i32
  }
}

</mosaic_0001>

<llo_original>
// kernel: tpu_custom_call.1
$region0: #{tpu_custom_call.1}
  #allocation0 [shape = 'u32[]', space=smem, size = 0x4, offset = 0x4, fixed_abs, tag = 'smem constant byte address 0x4 - core index']
  #allocation1 [shape = 'u32[144,128]{1,0:T(1,128)}', space=vmem, size = 0x12000, scoped, tag = 'internal scratch']
  %s0 = inlined_call_operand.vmem [shape: bf16[4096,64], index: 0, kind: input, shape index: {}]
  %s1 = inlined_call_operand.vmem [shape: s32[32,128], index: 1, kind: input, shape index: {}]
  %s2 = inlined_call_operand.vmem [shape: bf16[64,32], index: 2, kind: input, shape index: {}]
  %s3 = inlined_call_operand.vmem [shape: f32[1,32], index: 3, kind: input, shape index: {}]
  %s4 = inlined_call_operand.vmem [shape: f32[1,32], index: 4, kind: input, shape index: {}]
  %s5 = inlined_call_operand.hbm [shape: f32[32,128], index: 5, kind: output, shape index: {}]
  %s6 = sld [smem:[#allocation0]]
  $region53: #{tpu_custom_call.1} parent=0
    _
  %s8 = ssub.s32 1, %s6
  %s9 = scalar_select 0, %s8, %s6
  $region1: #{tpu_custom_call.1} parent=0
    #allocation2 [shape = 'u8[8192]{0}', space=vmem, size = 0x2000, scoped, tag = 'output window, operand 0']
    #allocation3 [shape = 's32[2]{0}', space=sflag, size = 0x8, scoped, tag = 'scoped memory for tpu_custom_call.1']
    %10 = vsyncpa [#allocation3], 0
    %s11 = scalar_lea.sflag [#allocation3], 1
    %12 = vsyncpa %s11, 0
    loop: start=0, step=1, limit=6
    $region2: #{tpu_custom_call.1} parent=1 // loop_pre_header
      _
    $region3: #{tpu_custom_call.1} parent=1 // loop_header
      %s14 = sphi 0, %s18
      %p15 = scmp.ge.s32.totalorder %s14, 6
      %s24 = sphi 0, %s26
      %s27 = sphi 0, %s24
      %s28 = sphi 0, %s27
      %s44 = sphi 0, %s28
      %s50 = sphi 0, %s52
      %s53 = sphi 0, %s50
      %s54 = sphi 0, %s53
      %s70 = sphi 0, %s54
      %s74 = sphi 0, %s74
      %s76 = sphi 0, %s74
      %s77 = sphi 0, %s76
      %s91 = sphi 0, %s77
      %s95 = sphi 0, %s95
      %s97 = sphi 0, %s95
      %s98 = sphi 0, %s97
      %s112 = sphi 0, %s98
      %s116 = sphi 0, %s116
      %s118 = sphi 0, %s116
      %s119 = sphi 0, %s118
      %s133 = sphi 0, %s119
      %s139 = sphi 0, %s141
      %s142 = sphi 0, %s139
      %s143 = sphi 0, %s142
      %s159 = sphi 0, %s143
    $region4: #{tpu_custom_call.1} parent=1 // loop_header_branch
      %17 = sbr.rel (%p15) target = $region8
    $region5: #{tpu_custom_call.1} parent=1 // loop_body
      %s19 = ssub.s32 %s14, 1
      %s20 = ssub.s32 %s14, 2
      %s21 = sadd.s32 %s14, 1
      %s22 = ssub.s32 %s14, %s21
      %p23 = scmp.eq.s32.totalorder %s22, 0
      %s25 = sadd.s32 %s24, 1
      %s26 = scalar_select %p23, %s24, %s25
      %p29 = pneg %p23
      %p30 = scmp.eq.s32.totalorder %s14, 3
      %p31 = por %p29, %p30
      %p32 = scmp.ne.s32.totalorder %s24, %s27
      %p33 = scmp.eq.s32.totalorder %s14, 0
      %p34 = por %p32, %p33
      %p35 = scmp.ne.s32.totalorder %s24, %s27
      %p36 = scmp.eq.s32.totalorder %s19, 3
      %p37 = por %p35, %p36
      %p38 = scmp.ne.s32.totalorder %s27, %s28
      %p39 = scmp.eq.s32.totalorder %s19, 0
      %p40 = por %p38, %p39
      %p41 = scmp.ne.s32.totalorder %s27, %s28
      %p42 = scmp.eq.s32.totalorder %s20, 3
      %p43 = por %p41, %p42
      %p45 = scmp.ne.s32.totalorder %s28, %s44
      %p46 = scmp.eq.s32.totalorder %s20, 0
      %p47 = por %p45, %p46
      %s48 = ssub.s32 %s14, %s21
      %p49 = scmp.eq.s32.totalorder %s48, 0
      %s51 = sadd.s32 %s50, 1
      %s52 = scalar_select %p49, %s50, %s51
      %p55 = pneg %p49
      %p56 = scmp.eq.s32.totalorder %s14, 3
      %p57 = por %p55, %p56
      %p58 = scmp.ne.s32.totalorder %s50, %s53
      %p59 = scmp.eq.s32.totalorder %s14, 0
      %p60 = por %p58, %p59
      %p61 = scmp.ne.s32.totalorder %s50, %s53
      %p62 = scmp.eq.s32.totalorder %s19, 3
      %p63 = por %p61, %p62
      %p64 = scmp.ne.s32.totalorder %s53, %s54
      %p65 = scmp.eq.s32.totalorder %s19, 0
      %p66 = por %p64, %p65
      %p67 = scmp.ne.s32.totalorder %s53, %s54
      %p68 = scmp.eq.s32.totalorder %s20, 3
      %p69 = por %p67, %p68
      %p71 = scmp.ne.s32.totalorder %s54, %s70
      %p72 = scmp.eq.s32.totalorder %s20, 0
      %p73 = por %p71, %p72
      %s75 = sadd.s32 %s74, 1
      %p78 = scmp.eq.s32.totalorder %s14, 3
      %p79 = scmp.ne.s32.totalorder %s74, %s76
      %p80 = scmp.eq.s32.totalorder %s14, 0
      %p81 = por %p79, %p80
      %p82 = scmp.ne.s32.totalorder %s74, %s76
      %p83 = scmp.eq.s32.totalorder %s19, 3
      %p84 = por %p82, %p83
      %p85 = scmp.ne.s32.totalorder %s76, %s77
      %p86 = scmp.eq.s32.totalorder %s19, 0
      %p87 = por %p85, %p86
      %p88 = scmp.ne.s32.totalorder %s76, %s77
      %p89 = scmp.eq.s32.totalorder %s20, 3
      %p90 = por %p88, %p89
      %p92 = scmp.ne.s32.totalorder %s77, %s91
      %p93 = scmp.eq.s32.totalorder %s20, 0
      %p94 = por %p92, %p93
      %s96 = sadd.s32 %s95, 1
      %p99 = scmp.eq.s32.totalorder %s14, 3
      %p100 = scmp.ne.s32.totalorder %s95, %s97
      %p101 = scmp.eq.s32.totalorder %s14, 0
      %p102 = por %p100, %p101
      %p103 = scmp.ne.s32.totalorder %s95, %s97
      %p104 = scmp.eq.s32.totalorder %s19, 3
      %p105 = por %p103, %p104
      %p106 = scmp.ne.s32.totalorder %s97, %s98
      %p107 = scmp.eq.s32.totalorder %s19, 0
      %p108 = por %p106, %p107
      %p109 = scmp.ne.s32.totalorder %s97, %s98
      %p110 = scmp.eq.s32.totalorder %s20, 3
      %p111 = por %p109, %p110
      %p113 = scmp.ne.s32.totalorder %s98, %s112
      %p114 = scmp.eq.s32.totalorder %s20, 0
      %p115 = por %p113, %p114
      %s117 = sadd.s32 %s116, 1
      %p120 = scmp.eq.s32.totalorder %s14, 3
      %p121 = scmp.ne.s32.totalorder %s116, %s118
      %p122 = scmp.eq.s32.totalorder %s14, 0
      %p123 = por %p121, %p122
      %p124 = scmp.ne.s32.totalorder %s116, %s118
      %p125 = scmp.eq.s32.totalorder %s19, 3
      %p126 = por %p124, %p125
      %p127 = scmp.ne.s32.totalorder %s118, %s119
      %p128 = scmp.eq.s32.totalorder %s19, 0
      %p129 = por %p127, %p128
      %p130 = scmp.ne.s32.totalorder %s118, %s119
      %p131 = scmp.eq.s32.totalorder %s20, 3
      %p132 = por %p130, %p131
      %p134 = scmp.ne.s32.totalorder %s119, %s133
      %p135 = scmp.eq.s32.totalorder %s20, 0
      %p136 = por %p134, %p135
      %s137 = ssub.s32 %s14, %s21
      %p138 = scmp.eq.s32.totalorder %s137, 0
      %s140 = sadd.s32 %s139, 1
      %s141 = scalar_select %p138, %s139, %s140
      %p144 = pneg %p138
      %p145 = scmp.eq.s32.totalorder %s14, 3
      %p146 = por %p144, %p145
      %p147 = scmp.ne.s32.totalorder %s139, %s142
      %p148 = scmp.eq.s32.totalorder %s14, 0
      %p149 = por %p147, %p148
      %p150 = scmp.ne.s32.totalorder %s139, %s142
      %p151 = scmp.eq.s32.totalorder %s19, 3
      %p152 = por %p150, %p151
      %p153 = scmp.ne.s32.totalorder %s142, %s143
      %p154 = scmp.eq.s32.totalorder %s19, 0
      %p155 = por %p153, %p154
      %p156 = scmp.ne.s32.totalorder %s142, %s143
      %p157 = scmp.eq.s32.totalorder %s20, 3
      %p158 = por %p156, %p157
      %p160 = scmp.ne.s32.totalorder %s143, %s159
      %p161 = scmp.eq.s32.totalorder %s20, 0
      %p162 = por %p160, %p161
      %p163 = scmp.le.s32.totalorder 1, %s14
      %p164 = scmp.lt.s32.totalorder %s14, 5
      %p165 = pnand %p163, %p164
      %p166 = pneg %p165
      // Predicated region
      $region9: #{tpu_custom_call.1} parent=5 // pred_check
        _
      $region10: #{tpu_custom_call.1} parent=5 // pred_check_branch
        %168 = sbr.rel (%p165) target = $region12
      $region11: #{tpu_custom_call.1} parent=5 // pred_region
        %s169 = ssub.s32 %s14, 1
        // Predicated region
        $region13: #{tpu_custom_call.1} parent=11 // pred_check
          %p170 = pneg %p87
        $region14: #{tpu_custom_call.1} parent=11 // pred_check_branch
          %172 = sbr.rel (%p170) target = $region16
        $region15: #{tpu_custom_call.1} parent=11 // pred_region
          _
        $region16: #{tpu_custom_call.1} parent=11 // pred_fallthru
          _
        // Predicated region
        $region17: #{tpu_custom_call.1} parent=11 // pred_check
          %p173 = pneg %p108
        $region18: #{tpu_custom_call.1} parent=11 // pred_check_branch
          %175 = sbr.rel (%p173) target = $region20
        $region19: #{tpu_custom_call.1} parent=11 // pred_region
          _
        $region20: #{tpu_custom_call.1} parent=11 // pred_fallthru
          _
        // Predicated region
        $region21: #{tpu_custom_call.1} parent=11 // pred_check
          %p176 = pneg %p129
        $region22: #{tpu_custom_call.1} parent=11 // pred_check_branch
          %178 = sbr.rel (%p176) target = $region24
        $region23: #{tpu_custom_call.1} parent=11 // pred_region
          _
        $region24: #{tpu_custom_call.1} parent=11 // pred_fallthru
          _
      $region12: #{tpu_custom_call.1} parent=5 // pred_fallthru
        _
      %p179 = scmp.lt.s32.totalorder %s14, 4
      // Predicated region
      $region25: #{tpu_custom_call.1} parent=5 // pred_check
        %p180 = pneg %p179
      $region26: #{tpu_custom_call.1} parent=5 // pred_check_branch
        %182 = sbr.rel (%p180) target = $region28
      $region27: #{tpu_custom_call.1} parent=5 // pred_region
        // Predicated region
        $region29: #{tpu_custom_call.1} parent=27 // pred_check
          %p183 = pneg %p34
        $region30: #{tpu_custom_call.1} parent=27 // pred_check_branch
          %185 = sbr.rel (%p183) target = $region32
        $region31: #{tpu_custom_call.1} parent=27 // pred_region
          %s186 = smul.u32 128, %s14
          %p187 = scmp.lt.s32.totalorder %s186, 511
          %s188 = scalar_select %p187, %s186, 511
          %s189 = smul.addr %s188, 4
          %s190 = scalar_lea.vmem %s0, %s189
          %s191 = smul.u32 128, %s14
        $region32: #{tpu_custom_call.1} parent=27 // pred_fallthru
          _
        // Predicated region
        $region33: #{tpu_custom_call.1} parent=27 // pred_check
          %p192 = pneg %p60
        $region34: #{tpu_custom_call.1} parent=27 // pred_check_branch
          %194 = sbr.rel (%p192) target = $region36
        $region35: #{tpu_custom_call.1} parent=27 // pred_region
          %p195 = scmp.lt.s32.totalorder %s14, 3
          %s196 = scalar_select %p195, %s14, 3
          %s197 = smul.addr %s196, 8
          %s198 = scalar_lea.vmem %s1, %s197
        $region36: #{tpu_custom_call.1} parent=27 // pred_fallthru
          _
      $region28: #{tpu_custom_call.1} parent=5 // pred_fallthru
        _
      %p199 = scmp.le.s32.totalorder 1, %s14
      %p200 = scmp.lt.s32.totalorder %s14, 5
      %p201 = pnand %p199, %p200
      %p202 = pneg %p201
      // Predicated region
      $region37: #{tpu_custom_call.1} parent=5 // pred_check
        _
      $region38: #{tpu_custom_call.1} parent=5 // pred_check_branch
        %204 = sbr.rel (%p201) target = $region40
      $region39: #{tpu_custom_call.1} parent=5 // pred_region
        %s205 = ssub.s32 %s14, 1
        %s206 = smul.u32 128, %s19
        %p207 = scmp.lt.s32.totalorder %s206, 511
        %s208 = scalar_select %p207, %s206, 511
        %s209 = smul.addr %s208, 4
        %s210 = scalar_lea.vmem %s0, %s209
        %p211 = pneg %p40
        %p212 = pneg %p37
        %p213 = scmp.lt.s32.totalorder %s19, 3
        %s214 = scalar_select %p213, %s19, 3
        %s215 = smul.addr %s214, 8
        %s216 = scalar_lea.vmem %s1, %s215
        %p217 = pneg %p66
        %p218 = pneg %p63
        %p219 = pneg %p87
        %p220 = pneg %p84
        %p221 = pneg %p108
        %p222 = pneg %p105
        %p223 = pneg %p129
        %p224 = pneg %p126
        %p225 = pneg %p155
        %p226 = pneg %p152
        %s227 = sand.u32 %s142, 1
        %s228 = scalar_lea.sflag [#allocation3], %s227
        %s229 = sand.u32 %s142, 1
        %s230 = smul.addr %s229, 8
        %s231 = scalar_lea.vmem [#allocation2], %s230
        %s232 = smul.u32 128, %s19
        %p233 = scmp.lt.s32.totalorder %s232, 511
        %s234 = scalar_select %p233, %s232, 511
        %s235 = smul.addr %s234, 4
        %s236 = scalar_lea.vmem %s0, %s235
        %s237 = smul.u32 128, %s19
        %p238 = scmp.lt.s32.totalorder %s19, 3
        %s239 = scalar_select %p238, %s19, 3
        %s240 = smul.addr %s239, 8
        %s241 = scalar_lea.vmem %s1, %s240
        %v243 = vld [vmem:[%s236] sm:$0xf]
        %v244 = vld [vmem:[%s236 + $0x4] sm:$0xf]
        %v245 = vld [vmem:[%s236 + $0x8] sm:$0xf]
        %v246 = vld [vmem:[%s236 + $0xc] sm:$0xf]
        %v247 = vld [vmem:[%s236 + $0x10] sm:$0xf]
        %v248 = vld [vmem:[%s236 + $0x14] sm:$0xf]
        %v249 = vld [vmem:[%s236 + $0x18] sm:$0xf]
        %v250 = vld [vmem:[%s236 + $0x1c] sm:$0xf]
        %v251 = vld [vmem:[%s236 + $0x20] sm:$0xf]
        %v252 = vld [vmem:[%s236 + $0x24] sm:$0xf]
        %v253 = vld [vmem:[%s236 + $0x28] sm:$0xf]
        %v254 = vld [vmem:[%s236 + $0x2c] sm:$0xf]
        %v255 = vld [vmem:[%s236 + $0x30] sm:$0xf]
        %v256 = vld [vmem:[%s236 + $0x34] sm:$0xf]
        %v257 = vld [vmem:[%s236 + $0x38] sm:$0xf]
        %v258 = vld [vmem:[%s236 + $0x3c] sm:$0xf]
        %v259 = vld [vmem:[%s236 + $0x40] sm:$0xf]
        %v260 = vld [vmem:[%s236 + $0x44] sm:$0xf]
        %v261 = vld [vmem:[%s236 + $0x48] sm:$0xf]
        %v262 = vld [vmem:[%s236 + $0x4c] sm:$0xf]
        %v263 = vld [vmem:[%s236 + $0x50] sm:$0xf]
        %v264 = vld [vmem:[%s236 + $0x54] sm:$0xf]
        %v265 = vld [vmem:[%s236 + $0x58] sm:$0xf]
        %v266 = vld [vmem:[%s236 + $0x5c] sm:$0xf]
        %v267 = vld [vmem:[%s236 + $0x60] sm:$0xf]
        %v268 = vld [vmem:[%s236 + $0x64] sm:$0xf]
        %v269 = vld [vmem:[%s236 + $0x68] sm:$0xf]
        %v270 = vld [vmem:[%s236 + $0x6c] sm:$0xf]
        %v271 = vld [vmem:[%s236 + $0x70] sm:$0xf]
        %v272 = vld [vmem:[%s236 + $0x74] sm:$0xf]
        %v273 = vld [vmem:[%s236 + $0x78] sm:$0xf]
        %v274 = vld [vmem:[%s236 + $0x7c] sm:$0xf]
        %v275 = vld [vmem:[%s236 + $0x80] sm:$0xf]
        %v276 = vld [vmem:[%s236 + $0x84] sm:$0xf]
        %v277 = vld [vmem:[%s236 + $0x88] sm:$0xf]
        %v278 = vld [vmem:[%s236 + $0x8c] sm:$0xf]
        %v279 = vld [vmem:[%s236 + $0x90] sm:$0xf]
        %v280 = vld [vmem:[%s236 + $0x94] sm:$0xf]
        %v281 = vld [vmem:[%s236 + $0x98] sm:$0xf]
        %v282 = vld [vmem:[%s236 + $0x9c] sm:$0xf]
        %v283 = vld [vmem:[%s236 + $0xa0] sm:$0xf]
        %v284 = vld [vmem:[%s236 + $0xa4] sm:$0xf]
        %v285 = vld [vmem:[%s236 + $0xa8] sm:$0xf]
        %v286 = vld [vmem:[%s236 + $0xac] sm:$0xf]
        %v287 = vld [vmem:[%s236 + $0xb0] sm:$0xf]
        %v288 = vld [vmem:[%s236 + $0xb4] sm:$0xf]
        %v289 = vld [vmem:[%s236 + $0xb8] sm:$0xf]
        %v290 = vld [vmem:[%s236 + $0xbc] sm:$0xf]
        %v291 = vld [vmem:[%s236 + $0xc0] sm:$0xf]
        %v292 = vld [vmem:[%s236 + $0xc4] sm:$0xf]
        %v293 = vld [vmem:[%s236 + $0xc8] sm:$0xf]
        %v294 = vld [vmem:[%s236 + $0xcc] sm:$0xf]
        %v295 = vld [vmem:[%s236 + $0xd0] sm:$0xf]
        %v296 = vld [vmem:[%s236 + $0xd4] sm:$0xf]
        %v297 = vld [vmem:[%s236 + $0xd8] sm:$0xf]
        %v298 = vld [vmem:[%s236 + $0xdc] sm:$0xf]
        %v299 = vld [vmem:[%s236 + $0xe0] sm:$0xf]
        %v300 = vld [vmem:[%s236 + $0xe4] sm:$0xf]
        %v301 = vld [vmem:[%s236 + $0xe8] sm:$0xf]
        %v302 = vld [vmem:[%s236 + $0xec] sm:$0xf]
        %v303 = vld [vmem:[%s236 + $0xf0] sm:$0xf]
        %v304 = vld [vmem:[%s236 + $0xf4] sm:$0xf]
        %v305 = vld [vmem:[%s236 + $0xf8] sm:$0xf]
        %v306 = vld [vmem:[%s236 + $0xfc] sm:$0xf]
        %v307 = vld [vmem:[%s236 + $0x100] sm:$0xf]
        %v308 = vld [vmem:[%s236 + $0x104] sm:$0xf]
        %v309 = vld [vmem:[%s236 + $0x108] sm:$0xf]
        %v310 = vld [vmem:[%s236 + $0x10c] sm:$0xf]
        %v311 = vld [vmem:[%s236 + $0x110] sm:$0xf]
        %v312 = vld [vmem:[%s236 + $0x114] sm:$0xf]
        %v313 = vld [vmem:[%s236 + $0x118] sm:$0xf]
        %v314 = vld [vmem:[%s236 + $0x11c] sm:$0xf]
        %v315 = vld [vmem:[%s236 + $0x120] sm:$0xf]
        %v316 = vld [vmem:[%s236 + $0x124] sm:$0xf]
        %v317 = vld [vmem:[%s236 + $0x128] sm:$0xf]
        %v318 = vld [vmem:[%s236 + $0x12c] sm:$0xf]
        %v319 = vld [vmem:[%s236 + $0x130] sm:$0xf]
        %v320 = vld [vmem:[%s236 + $0x134] sm:$0xf]
        %v321 = vld [vmem:[%s236 + $0x138] sm:$0xf]
        %v322 = vld [vmem:[%s236 + $0x13c] sm:$0xf]
        %v323 = vld [vmem:[%s236 + $0x140] sm:$0xf]
        %v324 = vld [vmem:[%s236 + $0x144] sm:$0xf]
        %v325 = vld [vmem:[%s236 + $0x148] sm:$0xf]
        %v326 = vld [vmem:[%s236 + $0x14c] sm:$0xf]
        %v327 = vld [vmem:[%s236 + $0x150] sm:$0xf]
        %v328 = vld [vmem:[%s236 + $0x154] sm:$0xf]
        %v329 = vld [vmem:[%s236 + $0x158] sm:$0xf]
        %v330 = vld [vmem:[%s236 + $0x15c] sm:$0xf]
        %v331 = vld [vmem:[%s236 + $0x160] sm:$0xf]
        %v332 = vld [vmem:[%s236 + $0x164] sm:$0xf]
        %v333 = vld [vmem:[%s236 + $0x168] sm:$0xf]
        %v334 = vld [vmem:[%s236 + $0x16c] sm:$0xf]
        %v335 = vld [vmem:[%s236 + $0x170] sm:$0xf]
        %v336 = vld [vmem:[%s236 + $0x174] sm:$0xf]
        %v337 = vld [vmem:[%s236 + $0x178] sm:$0xf]
        %v338 = vld [vmem:[%s236 + $0x17c] sm:$0xf]
        %v339 = vld [vmem:[%s236 + $0x180] sm:$0xf]
        %v340 = vld [vmem:[%s236 + $0x184] sm:$0xf]
        %v341 = vld [vmem:[%s236 + $0x188] sm:$0xf]
        %v342 = vld [vmem:[%s236 + $0x18c] sm:$0xf]
        %v343 = vld [vmem:[%s236 + $0x190] sm:$0xf]
        %v344 = vld [vmem:[%s236 + $0x194] sm:$0xf]
        %v345 = vld [vmem:[%s236 + $0x198] sm:$0xf]
        %v346 = vld [vmem:[%s236 + $0x19c] sm:$0xf]
        %v347 = vld [vmem:[%s236 + $0x1a0] sm:$0xf]
        %v348 = vld [vmem:[%s236 + $0x1a4] sm:$0xf]
        %v349 = vld [vmem:[%s236 + $0x1a8] sm:$0xf]
        %v350 = vld [vmem:[%s236 + $0x1ac] sm:$0xf]
        %v351 = vld [vmem:[%s236 + $0x1b0] sm:$0xf]
        %v352 = vld [vmem:[%s236 + $0x1b4] sm:$0xf]
        %v353 = vld [vmem:[%s236 + $0x1b8] sm:$0xf]
        %v354 = vld [vmem:[%s236 + $0x1bc] sm:$0xf]
        %v355 = vld [vmem:[%s236 + $0x1c0] sm:$0xf]
        %v356 = vld [vmem:[%s236 + $0x1c4] sm:$0xf]
        %v357 = vld [vmem:[%s236 + $0x1c8] sm:$0xf]
        %v358 = vld [vmem:[%s236 + $0x1cc] sm:$0xf]
        %v359 = vld [vmem:[%s236 + $0x1d0] sm:$0xf]
        %v360 = vld [vmem:[%s236 + $0x1d4] sm:$0xf]
        %v361 = vld [vmem:[%s236 + $0x1d8] sm:$0xf]
        %v362 = vld [vmem:[%s236 + $0x1dc] sm:$0xf]
        %v363 = vld [vmem:[%s236 + $0x1e0] sm:$0xf]
        %v364 = vld [vmem:[%s236 + $0x1e4] sm:$0xf]
        %v365 = vld [vmem:[%s236 + $0x1e8] sm:$0xf]
        %v366 = vld [vmem:[%s236 + $0x1ec] sm:$0xf]
        %v367 = vld [vmem:[%s236 + $0x1f0] sm:$0xf]
        %v368 = vld [vmem:[%s236 + $0x1f4] sm:$0xf]
        %v369 = vld [vmem:[%s236 + $0x1f8] sm:$0xf]
        %v370 = vld [vmem:[%s236 + $0x1fc] sm:$0xf]
        %v371 = vld [vmem:[%s2] sm:$0xf]
        %v372 = vld [vmem:[%s2 + $0x4] sm:$0xf]
        %v373 = vld [vmem:[%s2 + $0x8] sm:$0xf]
        %v374 = vld [vmem:[%s2 + $0xc] sm:$0xf]
        %v375 = vld [vmem:[%s2 + $0x10] sm:$0xf]
        %v376 = vld [vmem:[%s2 + $0x14] sm:$0xf]
        %v377 = vld [vmem:[%s2 + $0x18] sm:$0xf]
        %v378 = vld [vmem:[%s2 + $0x1c] sm:$0xf]
        %v379 = vld [vmem:[%s3] sm:$0x1]
        %v381 = vlaneseq
        %v382 = vshrl.u32 %v381, 7
        %v383 = vsub.s32 0, %v382
        %v384 = vrot.slane %v379, %v383
        %v514 = vunpack.c.l.b16 %v243
        %v515 = vunpack.c.l.b16 %v244
        %v516 = vunpack.c.l.b16 %v245
        %v517 = vunpack.c.l.b16 %v246
        %v518 = vunpack.c.l.b16 %v247
        %v519 = vunpack.c.l.b16 %v248
        %v520 = vunpack.c.l.b16 %v249
        %v521 = vunpack.c.l.b16 %v250
        %v522 = vunpack.c.l.b16 %v251
        %v523 = vunpack.c.l.b16 %v252
        %v524 = vunpack.c.l.b16 %v253
        %v525 = vunpack.c.l.b16 %v254
        %v526 = vunpack.c.l.b16 %v255
        %v527 = vunpack.c.l.b16 %v256
        %v528 = vunpack.c.l.b16 %v257
        %v529 = vunpack.c.l.b16 %v258
        %v530 = vunpack.c.l.b16 %v259
        %v531 = vunpack.c.l.b16 %v260
        %v532 = vunpack.c.l.b16 %v261
        %v533 = vunpack.c.l.b16 %v262
        %v534 = vunpack.c.l.b16 %v263
        %v535 = vunpack.c.l.b16 %v264
        %v536 = vunpack.c.l.b16 %v265
        %v537 = vunpack.c.l.b16 %v266
        %v538 = vunpack.c.l.b16 %v267
        %v539 = vunpack.c.l.b16 %v268
        %v540 = vunpack.c.l.b16 %v269
        %v541 = vunpack.c.l.b16 %v270
        %v542 = vunpack.c.l.b16 %v271
        %v543 = vunpack.c.l.b16 %v272
        %v544 = vunpack.c.l.b16 %v273
        %v545 = vunpack.c.l.b16 %v274
        %v546 = vunpack.c.l.b16 %v275
        %v547 = vunpack.c.l.b16 %v276
        %v548 = vunpack.c.l.b16 %v277
        %v549 = vunpack.c.l.b16 %v278
        %v550 = vunpack.c.l.b16 %v279
        %v551 = vunpack.c.l.b16 %v280
        %v552 = vunpack.c.l.b16 %v281
        %v553 = vunpack.c.l.b16 %v282
        %v554 = vunpack.c.l.b16 %v283
        %v555 = vunpack.c.l.b16 %v284
        %v556 = vunpack.c.l.b16 %v285
        %v557 = vunpack.c.l.b16 %v286
        %v558 = vunpack.c.l.b16 %v287
        %v559 = vunpack.c.l.b16 %v288
        %v560 = vunpack.c.l.b16 %v289
        %v561 = vunpack.c.l.b16 %v290
        %v562 = vunpack.c.l.b16 %v291
        %v563 = vunpack.c.l.b16 %v292
        %v564 = vunpack.c.l.b16 %v293
        %v565 = vunpack.c.l.b16 %v294
        %v566 = vunpack.c.l.b16 %v295
        %v567 = vunpack.c.l.b16 %v296
        %v568 = vunpack.c.l.b16 %v297
        %v569 = vunpack.c.l.b16 %v298
        %v570 = vunpack.c.l.b16 %v299
        %v571 = vunpack.c.l.b16 %v300
        %v572 = vunpack.c.l.b16 %v301
        %v573 = vunpack.c.l.b16 %v302
        %v574 = vunpack.c.l.b16 %v303
        %v575 = vunpack.c.l.b16 %v304
        %v576 = vunpack.c.l.b16 %v305
        %v577 = vunpack.c.l.b16 %v306
        %v578 = vunpack.c.l.b16 %v307
        %v579 = vunpack.c.l.b16 %v308
        %v580 = vunpack.c.l.b16 %v309
        %v581 = vunpack.c.l.b16 %v310
        %v582 = vunpack.c.l.b16 %v311
        %v583 = vunpack.c.l.b16 %v312
        %v584 = vunpack.c.l.b16 %v313
        %v585 = vunpack.c.l.b16 %v314
        %v586 = vunpack.c.l.b16 %v315
        %v587 = vunpack.c.l.b16 %v316
        %v588 = vunpack.c.l.b16 %v317
        %v589 = vunpack.c.l.b16 %v318
        %v590 = vunpack.c.l.b16 %v319
        %v591 = vunpack.c.l.b16 %v320
        %v592 = vunpack.c.l.b16 %v321
        %v593 = vunpack.c.l.b16 %v322
        %v594 = vunpack.c.l.b16 %v323
        %v595 = vunpack.c.l.b16 %v324
        %v596 = vunpack.c.l.b16 %v325
        %v597 = vunpack.c.l.b16 %v326
        %v598 = vunpack.c.l.b16 %v327
        %v599 = vunpack.c.l.b16 %v328
        %v600 = vunpack.c.l.b16 %v329
        %v601 = vunpack.c.l.b16 %v330
        %v602 = vunpack.c.l.b16 %v331
        %v603 = vunpack.c.l.b16 %v332
        %v604 = vunpack.c.l.b16 %v333
        %v605 = vunpack.c.l.b16 %v334
        %v606 = vunpack.c.l.b16 %v335
        %v607 = vunpack.c.l.b16 %v336
        %v608 = vunpack.c.l.b16 %v337
        %v609 = vunpack.c.l.b16 %v338
        %v610 = vunpack.c.l.b16 %v339
        %v611 = vunpack.c.l.b16 %v340
        %v612 = vunpack.c.l.b16 %v341
        %v613 = vunpack.c.l.b16 %v342
        %v614 = vunpack.c.l.b16 %v343
        %v615 = vunpack.c.l.b16 %v344
        %v616 = vunpack.c.l.b16 %v345
        %v617 = vunpack.c.l.b16 %v346
        %v618 = vunpack.c.l.b16 %v347
        %v619 = vunpack.c.l.b16 %v348
        %v620 = vunpack.c.l.b16 %v349
        %v621 = vunpack.c.l.b16 %v350
        %v622 = vunpack.c.l.b16 %v351
        %v623 = vunpack.c.l.b16 %v352
        %v624 = vunpack.c.l.b16 %v353
        %v625 = vunpack.c.l.b16 %v354
        %v626 = vunpack.c.l.b16 %v355
        %v627 = vunpack.c.l.b16 %v356
        %v628 = vunpack.c.l.b16 %v357
        %v629 = vunpack.c.l.b16 %v358
        %v630 = vunpack.c.l.b16 %v359
        %v631 = vunpack.c.l.b16 %v360
        %v632 = vunpack.c.l.b16 %v361
        %v633 = vunpack.c.l.b16 %v362
        %v634 = vunpack.c.l.b16 %v363
        %v635 = vunpack.c.l.b16 %v364
        %v636 = vunpack.c.l.b16 %v365
        %v637 = vunpack.c.l.b16 %v366
        %v638 = vunpack.c.l.b16 %v367
        %v639 = vunpack.c.l.b16 %v368
        %v640 = vunpack.c.l.b16 %v369
        %v641 = vunpack.c.l.b16 %v370
        %v642 = vpack.c.b16 %v515, %v514
        %v643 = vpack.c.b16 %v517, %v516
        %v644 = vpack.c.b16 %v519, %v518
        %v645 = vpack.c.b16 %v521, %v520
        %v646 = vpack.c.b16 %v523, %v522
        %v647 = vpack.c.b16 %v525, %v524
        %v648 = vpack.c.b16 %v527, %v526
        %v649 = vpack.c.b16 %v529, %v528
        %v650 = vpack.c.b16 %v531, %v530
        %v651 = vpack.c.b16 %v533, %v532
        %v652 = vpack.c.b16 %v535, %v534
        %v653 = vpack.c.b16 %v537, %v536
        %v654 = vpack.c.b16 %v539, %v538
        %v655 = vpack.c.b16 %v541, %v540
        %v656 = vpack.c.b16 %v543, %v542
        %v657 = vpack.c.b16 %v545, %v544
        %v658 = vpack.c.b16 %v547, %v546
        %v659 = vpack.c.b16 %v549, %v548
        %v660 = vpack.c.b16 %v551, %v550
        %v661 = vpack.c.b16 %v553, %v552
        %v662 = vpack.c.b16 %v555, %v554
        %v663 = vpack.c.b16 %v557, %v556
        %v664 = vpack.c.b16 %v559, %v558
        %v665 = vpack.c.b16 %v561, %v560
        %v666 = vpack.c.b16 %v563, %v562
        %v667 = vpack.c.b16 %v565, %v564
        %v668 = vpack.c.b16 %v567, %v566
        %v669 = vpack.c.b16 %v569, %v568
        %v670 = vpack.c.b16 %v571, %v570
        %v671 = vpack.c.b16 %v573, %v572
        %v672 = vpack.c.b16 %v575, %v574
        %v673 = vpack.c.b16 %v577, %v576
        %v674 = vpack.c.b16 %v579, %v578
        %v675 = vpack.c.b16 %v581, %v580
        %v676 = vpack.c.b16 %v583, %v582
        %v677 = vpack.c.b16 %v585, %v584
        %v678 = vpack.c.b16 %v587, %v586
        %v679 = vpack.c.b16 %v589, %v588
        %v680 = vpack.c.b16 %v591, %v590
        %v681 = vpack.c.b16 %v593, %v592
        %v682 = vpack.c.b16 %v595, %v594
        %v683 = vpack.c.b16 %v597, %v596
        %v684 = vpack.c.b16 %v599, %v598
        %v685 = vpack.c.b16 %v601, %v600
        %v686 = vpack.c.b16 %v603, %v602
        %v687 = vpack.c.b16 %v605, %v604
        %v688 = vpack.c.b16 %v607, %v606
        %v689 = vpack.c.b16 %v609, %v608
        %v690 = vpack.c.b16 %v611, %v610
        %v691 = vpack.c.b16 %v613, %v612
        %v692 = vpack.c.b16 %v615, %v614
        %v693 = vpack.c.b16 %v617, %v616
        %v694 = vpack.c.b16 %v619, %v618
        %v695 = vpack.c.b16 %v621, %v620
        %v696 = vpack.c.b16 %v623, %v622
        %v697 = vpack.c.b16 %v625, %v624
        %v698 = vpack.c.b16 %v627, %v626
        %v699 = vpack.c.b16 %v629, %v628
        %v700 = vpack.c.b16 %v631, %v630
        %v701 = vpack.c.b16 %v633, %v632
        %v702 = vpack.c.b16 %v635, %v634
        %v703 = vpack.c.b16 %v637, %v636
        %v704 = vpack.c.b16 %v639, %v638
        %v705 = vpack.c.b16 %v641, %v640
        %v714 = vunpack.c.l.b16 %v371
        %v715 = vunpack.c.l.b16 %v372
        %v716 = vunpack.c.l.b16 %v373
        %v717 = vunpack.c.l.b16 %v374
        %v718 = vunpack.c.l.b16 %v375
        %v719 = vunpack.c.l.b16 %v376
        %v720 = vunpack.c.l.b16 %v377
        %v721 = vunpack.c.l.b16 %v378
        %v722 = vpack.c.b16 %v715, %v714
        %v723 = vpack.c.b16 %v717, %v716
        %v724 = vpack.c.b16 %v719, %v718
        %v725 = vpack.c.b16 %v721, %v720
        %vm730 = vcmask 523264
        %v732 = vsel %vm730, %v642, 0
        %v735 = vsel %vm730, %v643, 0
        %v738 = vsel %vm730, %v644, 0
        %v741 = vsel %vm730, %v645, 0
        %v744 = vsel %vm730, %v646, 0
        %v747 = vsel %vm730, %v647, 0
        %v750 = vsel %vm730, %v648, 0
        %v753 = vsel %vm730, %v649, 0
        %v756 = vsel %vm730, %v650, 0
        %v759 = vsel %vm730, %v651, 0
        %v762 = vsel %vm730, %v652, 0
        %v765 = vsel %vm730, %v653, 0
        %v768 = vsel %vm730, %v654, 0
        %v771 = vsel %vm730, %v655, 0
        %v774 = vsel %vm730, %v656, 0
        %v777 = vsel %vm730, %v657, 0
        %v780 = vsel %vm730, %v658, 0
        %v783 = vsel %vm730, %v659, 0
        %v786 = vsel %vm730, %v660, 0
        %v789 = vsel %vm730, %v661, 0
        %v792 = vsel %vm730, %v662, 0
        %v795 = vsel %vm730, %v663, 0
        %v798 = vsel %vm730, %v664, 0
        %v801 = vsel %vm730, %v665, 0
        %v804 = vsel %vm730, %v666, 0
        %v807 = vsel %vm730, %v667, 0
        %v810 = vsel %vm730, %v668, 0
        %v813 = vsel %vm730, %v669, 0
        %v816 = vsel %vm730, %v670, 0
        %v819 = vsel %vm730, %v671, 0
        %v822 = vsel %vm730, %v672, 0
        %v825 = vsel %vm730, %v673, 0
        %v828 = vsel %vm730, %v674, 0
        %v831 = vsel %vm730, %v675, 0
        %v834 = vsel %vm730, %v676, 0
        %v837 = vsel %vm730, %v677, 0
        %v840 = vsel %vm730, %v678, 0
        %v843 = vsel %vm730, %v679, 0
        %v846 = vsel %vm730, %v680, 0
        %v849 = vsel %vm730, %v681, 0
        %v852 = vsel %vm730, %v682, 0
        %v855 = vsel %vm730, %v683, 0
        %v858 = vsel %vm730, %v684, 0
        %v861 = vsel %vm730, %v685, 0
        %v864 = vsel %vm730, %v686, 0
        %v867 = vsel %vm730, %v687, 0
        %v870 = vsel %vm730, %v688, 0
        %v873 = vsel %vm730, %v689, 0
        %v876 = vsel %vm730, %v690, 0
        %v879 = vsel %vm730, %v691, 0
        %v882 = vsel %vm730, %v692, 0
        %v885 = vsel %vm730, %v693, 0
        %v888 = vsel %vm730, %v694, 0
        %v891 = vsel %vm730, %v695, 0
        %v894 = vsel %vm730, %v696, 0
        %v897 = vsel %vm730, %v697, 0
        %v900 = vsel %vm730, %v698, 0
        %v903 = vsel %vm730, %v699, 0
        %v906 = vsel %vm730, %v700, 0
        %v909 = vsel %vm730, %v701, 0
        %v912 = vsel %vm730, %v702, 0
        %v915 = vsel %vm730, %v703, 0
        %v918 = vsel %vm730, %v704, 0
        %v921 = vsel %vm730, %v705, 0
        %923 = vmatprep.subr.bf16.mxu0 0
        %924 = vmatpush1.bf16.msra.mxu0 %v722
        %925 = vmatprep.subr.bf16.mxu0 0
        %926 = vmatpush1.bf16.msra.mxu0 %v723
        %927 = vmatprep.subr.bf16.mxu0 0
        %928 = vmatpush1.bf16.msra.mxu0 %v724
        %929 = vmatprep.subr.bf16.mxu0 0
        %930 = vmatpush1.bf16.msra.mxu0 %v725
        %931 = vmatprep.subr.bf16.mxu0 0
        %932 = vmatpush1.bf16.msra.mxu0 0
        %933 = vmatprep.subr.bf16.mxu0 0
        %934 = vmatpush1.bf16.msra.mxu0 0
        %935 = vmatprep.subr.bf16.mxu0 0
        %936 = vmatpush1.bf16.msra.mxu0 0
        %937 = vmatprep.subr.bf16.mxu0 0
        %938 = vmatpush1.bf16.msra.mxu0 0
        %939 = vmatprep.subr.bf16.mxu0 0
        %940 = vmatpush1.bf16.msra.mxu0 0
        %941 = vmatprep.subr.bf16.mxu0 0
        %942 = vmatpush1.bf16.msra.mxu0 0
        %943 = vmatprep.subr.bf16.mxu0 0
        %944 = vmatpush1.bf16.msra.mxu0 0
        %945 = vmatprep.subr.bf16.mxu0 0
        %946 = vmatpush1.bf16.msra.mxu0 0
        %947 = vmatprep.subr.bf16.mxu0 0
        %948 = vmatpush1.bf16.msra.mxu0 0
        %949 = vmatprep.subr.bf16.mxu0 0
        %950 = vmatpush1.bf16.msra.mxu0 0
        %951 = vmatprep.subr.bf16.mxu0 0
        %952 = vmatpush1.bf16.msra.mxu0 0
        %953 = vmatprep.subr.bf16.mxu0 0
        %954 = vmatpush1.bf16.msra.mxu0 0
        %955 = vmatprep.mubr.bf16.mxu0 0
        %956 = vmatmul.mubr.bf16.gmra.mrb[0].mxu0 %v732
        %v957 = vpop.f32.mrb[0].mxu0
        %v958 = vadd.f32 %v384, %v957
        %v959 = vpop.f32.mrb[0].mxu0
        %v960 = vpop.f32.mrb[0].mxu0
        %v961 = vadd.f32 %v384, %v960
        %v962 = vpop.f32.mrb[0].mxu0
        %963 = vmatprep.mubr.bf16.mxu0 0
        %964 = vmatmul.mubr.bf16.gmra.mrb[0].mxu0 %v735
        %v965 = vpop.f32.mrb[0].mxu0
        %v966 = vadd.f32 %v384, %v965
        %v967 = vpop.f32.mrb[0].mxu0
        %v968 = vpop.f32.mrb[0].mxu0
        %v969 = vadd.f32 %v384, %v968
        %v970 = vpop.f32.mrb[0].mxu0
        %971 = vmatprep.mubr.bf16.mxu0 0
        %972 = vmatmul.mubr.bf16.gmra.mrb[0].mxu0 %v738
        %v973 = vpop.f32.mrb[0].mxu0
        %v974 = vadd.f32 %v384, %v973
        %v975 = vpop.f32.mrb[0].mxu0
        %v976 = vpop.f32.mrb[0].mxu0
        %v977 = vadd.f32 %v384, %v976
        %v978 = vpop.f32.mrb[0].mxu0
        %979 = vmatprep.mubr.bf16.mxu0 0
        %980 = vmatmul.mubr.bf16.gmra.mrb[0].mxu0 %v741
        %v981 = vpop.f32.mrb[0].mxu0
        %v982 = vadd.f32 %v384, %v981
        %v983 = vpop.f32.mrb[0].mxu0
        %v984 = vpop.f32.mrb[0].mxu0
        %v985 = vadd.f32 %v384, %v984
        %v986 = vpop.f32.mrb[0].mxu0
        %987 = vmatprep.mubr.bf16.mxu0 0
        %988 = vmatmul.mubr.bf16.gmra.mrb[0].mxu0 %v744
        %v989 = vpop.f32.mrb[0].mxu0
        %v990 = vadd.f32 %v384, %v989
        %v991 = vpop.f32.mrb[0].mxu0
        %v992 = vpop.f32.mrb[0].mxu0
        %v993 = vadd.f32 %v384, %v992
        %v994 = vpop.f32.mrb[0].mxu0
        %995 = vmatprep.mubr.bf16.mxu0 0
        %996 = vmatmul.mubr.bf16.gmra.mrb[0].mxu0 %v747
        %v997 = vpop.f32.mrb[0].mxu0
        %v998 = vadd.f32 %v384, %v997
        %v999 = vpop.f32.mrb[0].mxu0
        %v1000 = vpop.f32.mrb[0].mxu0
        %v1001 = vadd.f32 %v384, %v1000
        %v1002 = vpop.f32.mrb[0].mxu0
        %1003 = vmatprep.mubr.bf16.mxu0 0
        %1004 = vmatmul.mubr.bf16.gmra.mrb[0].mxu0 %v750
        %v1005 = vpop.f32.mrb[0].mxu0
        %v1006 = vadd.f32 %v384, %v1005
        %v1007 = vpop.f32.mrb[0].mxu0
        %v1008 = vpop.f32.mrb[0].mxu0
        %v1009 = vadd.f32 %v384, %v1008
        %v1010 = vpop.f32.mrb[0].mxu0
        %1011 = vmatprep.mubr.bf16.mxu0 0
        %1012 = vmatmul.mubr.bf16.gmra.mrb[0].mxu0 %v753
        %v1013 = vpop.f32.mrb[0].mxu0
        %v1014 = vadd.f32 %v384, %v1013
        %v1015 = vpop.f32.mrb[0].mxu0
        %v1016 = vpop.f32.mrb[0].mxu0
        %v1017 = vadd.f32 %v384, %v1016
        %v1018 = vpop.f32.mrb[0].mxu0
        %1019 = vmatprep.mubr.bf16.mxu0 0
        %1020 = vmatmul.mubr.bf16.gmra.mrb[0].mxu0 %v756
        %v1021 = vpop.f32.mrb[0].mxu0
        %v1022 = vadd.f32 %v384, %v1021
        %v1023 = vpop.f32.mrb[0].mxu0
        %v1024 = vpop.f32.mrb[0].mxu0
        %v1025 = vadd.f32 %v384, %v1024
        %v1026 = vpop.f32.mrb[0].mxu0
        %1027 = vmatprep.mubr.bf16.mxu0 0
        %1028 = vmatmul.mubr.bf16.gmra.mrb[0].mxu0 %v759
        %v1029 = vpop.f32.mrb[0].mxu0
        %v1030 = vadd.f32 %v384, %v1029
        %v1031 = vpop.f32.mrb[0].mxu0
        %v1032 = vpop.f32.mrb[0].mxu0
        %v1033 = vadd.f32 %v384, %v1032
        %v1034 = vpop.f32.mrb[0].mxu0
        %1035 = vmatprep.mubr.bf16.mxu0 0
        %1036 = vmatmul.mubr.bf16.gmra.mrb[0].mxu0 %v762
        %v1037 = vpop.f32.mrb[0].mxu0
        %v1038 = vadd.f32 %v384, %v1037
        %v1039 = vpop.f32.mrb[0].mxu0
        %v1040 = vpop.f32.mrb[0].mxu0
        %v1041 = vadd.f32 %v384, %v1040
        %v1042 = vpop.f32.mrb[0].mxu0
        %1043 = vmatprep.mubr.bf16.mxu0 0
        %1044 = vmatmul.mubr.bf16.gmra.mrb[0].mxu0 %v765
        %v1045 = vpop.f32.mrb[0].mxu0
        %v1046 = vadd.f32 %v384, %v1045
        %v1047 = vpop.f32.mrb[0].mxu0
        %v1048 = vpop.f32.mrb[0].mxu0
        %v1049 = vadd.f32 %v384, %v1048
        %v1050 = vpop.f32.mrb[0].mxu0
        %1051 = vmatprep.mubr.bf16.mxu0 0
        %1052 = vmatmul.mubr.bf16.gmra.mrb[0].mxu0 %v768
        %v1053 = vpop.f32.mrb[0].mxu0
        %v1054 = vadd.f32 %v384, %v1053
        %v1055 = vpop.f32.mrb[0].mxu0
        %v1056 = vpop.f32.mrb[0].mxu0
        %v1057 = vadd.f32 %v384, %v1056
        %v1058 = vpop.f32.mrb[0].mxu0
        %1059 = vmatprep.mubr.bf16.mxu0 0
        %1060 = vmatmul.mubr.bf16.gmra.mrb[0].mxu0 %v771
        %v1061 = vpop.f32.mrb[0].mxu0
        %v1062 = vadd.f32 %v384, %v1061
        %v1063 = vpop.f32.mrb[0].mxu0
        %v1064 = vpop.f32.mrb[0].mxu0
        %v1065 = vadd.f32 %v384, %v1064
        %v1066 = vpop.f32.mrb[0].mxu0
        %1067 = vmatprep.mubr.bf16.mxu0 0
        %1068 = vmatmul.mubr.bf16.gmra.mrb[0].mxu0 %v774
        %v1069 = vpop.f32.mrb[0].mxu0
        %v1070 = vadd.f32 %v384, %v1069
        %v1071 = vpop.f32.mrb[0].mxu0
        %v1072 = vpop.f32.mrb[0].mxu0
        %v1073 = vadd.f32 %v384, %v1072
        %v1074 = vpop.f32.mrb[0].mxu0
        %1075 = vmatprep.mubr.bf16.mxu0 0
        %1076 = vmatmul.mubr.bf16.gmra.mrb[0].mxu0 %v777
        %v1077 = vpop.f32.mrb[0].mxu0
        %v1078 = vadd.f32 %v384, %v1077
        %v1079 = vpop.f32.mrb[0].mxu0
        %v1080 = vpop.f32.mrb[0].mxu0
        %v1081 = vadd.f32 %v384, %v1080
        %v1082 = vpop.f32.mrb[0].mxu0
        %1083 = vmatprep.mubr.bf16.mxu0 0
        %1084 = vmatmul.mubr.bf16.gmra.mrb[0].mxu0 %v780
        %v1085 = vpop.f32.mrb[0].mxu0
        %v1086 = vadd.f32 %v384, %v1085
        %v1087 = vpop.f32.mrb[0].mxu0
        %v1088 = vpop.f32.mrb[0].mxu0
        %v1089 = vadd.f32 %v384, %v1088
        %v1090 = vpop.f32.mrb[0].mxu0
        %1091 = vmatprep.mubr.bf16.mxu0 0
        %1092 = vmatmul.mubr.bf16.gmra.mrb[0].mxu0 %v783
        %v1093 = vpop.f32.mrb[0].mxu0
        %v1094 = vadd.f32 %v384, %v1093
        %v1095 = vpop.f32.mrb[0].mxu0
        %v1096 = vpop.f32.mrb[0].mxu0
        %v1097 = vadd.f32 %v384, %v1096
        %v1098 = vpop.f32.mrb[0].mxu0
        %1099 = vmatprep.mubr.bf16.mxu0 0
        %1100 = vmatmul.mubr.bf16.gmra.mrb[0].mxu0 %v786
        %v1101 = vpop.f32.mrb[0].mxu0
        %v1102 = vadd.f32 %v384, %v1101
        %v1103 = vpop.f32.mrb[0].mxu0
        %v1104 = vpop.f32.mrb[0].mxu0
        %v1105 = vadd.f32 %v384, %v1104
        %v1106 = vpop.f32.mrb[0].mxu0
        %1107 = vmatprep.mubr.bf16.mxu0 0
        %1108 = vmatmul.mubr.bf16.gmra.mrb[0].mxu0 %v789
        %v1109 = vpop.f32.mrb[0].mxu0
        %v1110 = vadd.f32 %v384, %v1109
        %v1111 = vpop.f32.mrb[0].mxu0
        %v1112 = vpop.f32.mrb[0].mxu0
        %v1113 = vadd.f32 %v384, %v1112
        %v1114 = vpop.f32.mrb[0].mxu0
        %1115 = vmatprep.mubr.bf16.mxu0 0
        %1116 = vmatmul.mubr.bf16.gmra.mrb[0].mxu0 %v792
        %v1117 = vpop.f32.mrb[0].mxu0
        %v1118 = vadd.f32 %v384, %v1117
        %v1119 = vpop.f32.mrb[0].mxu0
        %v1120 = vpop.f32.mrb[0].mxu0
        %v1121 = vadd.f32 %v384, %v1120
        %v1122 = vpop.f32.mrb[0].mxu0
        %1123 = vmatprep.mubr.bf16.mxu0 0
        %1124 = vmatmul.mubr.bf16.gmra.mrb[0].mxu0 %v795
        %v1125 = vpop.f32.mrb[0].mxu0
        %v1126 = vadd.f32 %v384, %v1125
        %v1127 = vpop.f32.mrb[0].mxu0
        %v1128 = vpop.f32.mrb[0].mxu0
        %v1129 = vadd.f32 %v384, %v1128
        %v1130 = vpop.f32.mrb[0].mxu0
        %1131 = vmatprep.mubr.bf16.mxu0 0
        %1132 = vmatmul.mubr.bf16.gmra.mrb[0].mxu0 %v798
        %v1133 = vpop.f32.mrb[0].mxu0
        %v1134 = vadd.f32 %v384, %v1133
        %v1135 = vpop.f32.mrb[0].mxu0
        %v1136 = vpop.f32.mrb[0].mxu0
        %v1137 = vadd.f32 %v384, %v1136
        %v1138 = vpop.f32.mrb[0].mxu0
        %1139 = vmatprep.mubr.bf16.mxu0 0
        %1140 = vmatmul.mubr.bf16.gmra.mrb[0].mxu0 %v801
        %v1141 = vpop.f32.mrb[0].mxu0
        %v1142 = vadd.f32 %v384, %v1141
        %v1143 = vpop.f32.mrb[0].mxu0
        %v1144 = vpop.f32.mrb[0].mxu0
        %v1145 = vadd.f32 %v384, %v1144
        %v1146 = vpop.f32.mrb[0].mxu0
        %1147 = vmatprep.mubr.bf16.mxu0 0
        %1148 = vmatmul.mubr.bf16.gmra.mrb[0].mxu0 %v804
        %v1149 = vpop.f32.mrb[0].mxu0
        %v1150 = vadd.f32 %v384, %v1149
        %v1151 = vpop.f32.mrb[0].mxu0
        %v1152 = vpop.f32.mrb[0].mxu0
        %v1153 = vadd.f32 %v384, %v1152
        %v1154 = vpop.f32.mrb[0].mxu0
        %1155 = vmatprep.mubr.bf16.mxu0 0
        %1156 = vmatmul.mubr.bf16.gmra.mrb[0].mxu0 %v807
        %v1157 = vpop.f32.mrb[0].mxu0
        %v1158 = vadd.f32 %v384, %v1157
        %v1159 = vpop.f32.mrb[0].mxu0
        %v1160 = vpop.f32.mrb[0].mxu0
        %v1161 = vadd.f32 %v384, %v1160
        %v1162 = vpop.f32.mrb[0].mxu0
        %1163 = vmatprep.mubr.bf16.mxu0 0
        %1164 = vmatmul.mubr.bf16.gmra.mrb[0].mxu0 %v810
        %v1165 = vpop.f32.mrb[0].mxu0
        %v1166 = vadd.f32 %v384, %v1165
        %v1167 = vpop.f32.mrb[0].mxu0
        %v1168 = vpop.f32.mrb[0].mxu0
        %v1169 = vadd.f32 %v384, %v1168
        %v1170 = vpop.f32.mrb[0].mxu0
        %1171 = vmatprep.mubr.bf16.mxu0 0
        %1172 = vmatmul.mubr.bf16.gmra.mrb[0].mxu0 %v813
        %v1173 = vpop.f32.mrb[0].mxu0
        %v1174 = vadd.f32 %v384, %v1173
        %v1175 = vpop.f32.mrb[0].mxu0
        %v1176 = vpop.f32.mrb[0].mxu0
        %v1177 = vadd.f32 %v384, %v1176
        %v1178 = vpop.f32.mrb[0].mxu0
        %1179 = vmatprep.mubr.bf16.mxu0 0
        %1180 = vmatmul.mubr.bf16.gmra.mrb[0].mxu0 %v816
        %v1181 = vpop.f32.mrb[0].mxu0
        %v1182 = vadd.f32 %v384, %v1181
        %v1183 = vpop.f32.mrb[0].mxu0
        %v1184 = vpop.f32.mrb[0].mxu0
        %v1185 = vadd.f32 %v384, %v1184
        %v1186 = vpop.f32.mrb[0].mxu0
        %1187 = vmatprep.mubr.bf16.mxu0 0
        %1188 = vmatmul.mubr.bf16.gmra.mrb[0].mxu0 %v819
        %v1189 = vpop.f32.mrb[0].mxu0
        %v1190 = vadd.f32 %v384, %v1189
        %v1191 = vpop.f32.mrb[0].mxu0
        %v1192 = vpop.f32.mrb[0].mxu0
        %v1193 = vadd.f32 %v384, %v1192
        %v1194 = vpop.f32.mrb[0].mxu0
        %1195 = vmatprep.mubr.bf16.mxu0 0
        %1196 = vmatmul.mubr.bf16.gmra.mrb[0].mxu0 %v822
        %v1197 = vpop.f32.mrb[0].mxu0
        %v1198 = vadd.f32 %v384, %v1197
        %v1199 = vpop.f32.mrb[0].mxu0
        %v1200 = vpop.f32.mrb[0].mxu0
        %v1201 = vadd.f32 %v384, %v1200
        %v1202 = vpop.f32.mrb[0].mxu0
        %1203 = vmatprep.mubr.bf16.mxu0 0
        %1204 = vmatmul.mubr.bf16.gmra.mrb[0].mxu0 %v825
        %v1205 = vpop.f32.mrb[0].mxu0
        %v1206 = vadd.f32 %v384, %v1205
        %v1207 = vpop.f32.mrb[0].mxu0
        %v1208 = vpop.f32.mrb[0].mxu0
        %v1209 = vadd.f32 %v384, %v1208
        %v1210 = vpop.f32.mrb[0].mxu0
        %1211 = vmatprep.mubr.bf16.mxu0 0
        %1212 = vmatmul.mubr.bf16.gmra.mrb[0].mxu0 %v828
        %v1213 = vpop.f32.mrb[0].mxu0
        %v1214 = vadd.f32 %v384, %v1213
        %v1215 = vpop.f32.mrb[0].mxu0
        %v1216 = vpop.f32.mrb[0].mxu0
        %v1217 = vadd.f32 %v384, %v1216
        %v1218 = vpop.f32.mrb[0].mxu0
        %1219 = vmatprep.mubr.bf16.mxu0 0
        %1220 = vmatmul.mubr.bf16.gmra.mrb[0].mxu0 %v831
        %v1221 = vpop.f32.mrb[0].mxu0
        %v1222 = vadd.f32 %v384, %v1221
        %v1223 = vpop.f32.mrb[0].mxu0
        %v1224 = vpop.f32.mrb[0].mxu0
        %v1225 = vadd.f32 %v384, %v1224
        %v1226 = vpop.f32.mrb[0].mxu0
        %1227 = vmatprep.mubr.bf16.mxu0 0
        %1228 = vmatmul.mubr.bf16.gmra.mrb[0].mxu0 %v834
        %v1229 = vpop.f32.mrb[0].mxu0
        %v1230 = vadd.f32 %v384, %v1229
        %v1231 = vpop.f32.mrb[0].mxu0
        %v1232 = vpop.f32.mrb[0].mxu0
        %v1233 = vadd.f32 %v384, %v1232
        %v1234 = vpop.f32.mrb[0].mxu0
        %1235 = vmatprep.mubr.bf16.mxu0 0
        %1236 = vmatmul.mubr.bf16.gmra.mrb[0].mxu0 %v837
        %v1237 = vpop.f32.mrb[0].mxu0
        %v1238 = vadd.f32 %v384, %v1237
        %v1239 = vpop.f32.mrb[0].mxu0
        %v1240 = vpop.f32.mrb[0].mxu0
        %v1241 = vadd.f32 %v384, %v1240
        %v1242 = vpop.f32.mrb[0].mxu0
        %1243 = vmatprep.mubr.bf16.mxu0 0
        %1244 = vmatmul.mubr.bf16.gmra.mrb[0].mxu0 %v840
        %v1245 = vpop.f32.mrb[0].mxu0
        %v1246 = vadd.f32 %v384, %v1245
        %v1247 = vpop.f32.mrb[0].mxu0
        %v1248 = vpop.f32.mrb[0].mxu0
        %v1249 = vadd.f32 %v384, %v1248
        %v1250 = vpop.f32.mrb[0].mxu0
        %1251 = vmatprep.mubr.bf16.mxu0 0
        %1252 = vmatmul.mubr.bf16.gmra.mrb[0].mxu0 %v843
        %v1253 = vpop.f32.mrb[0].mxu0
        %v1254 = vadd.f32 %v384, %v1253
        %v1255 = vpop.f32.mrb[0].mxu0
        %v1256 = vpop.f32.mrb[0].mxu0
        %v1257 = vadd.f32 %v384, %v1256
        %v1258 = vpop.f32.mrb[0].mxu0
        %1259 = vmatprep.mubr.bf16.mxu0 0
        %1260 = vmatmul.mubr.bf16.gmra.mrb[0].mxu0 %v846
        %v1261 = vpop.f32.mrb[0].mxu0
        %v1262 = vadd.f32 %v384, %v1261
        %v1263 = vpop.f32.mrb[0].mxu0
        %v1264 = vpop.f32.mrb[0].mxu0
        %v1265 = vadd.f32 %v384, %v1264
        %v1266 = vpop.f32.mrb[0].mxu0
        %1267 = vmatprep.mubr.bf16.mxu0 0
        %1268 = vmatmul.mubr.bf16.gmra.mrb[0].mxu0 %v849
        %v1269 = vpop.f32.mrb[0].mxu0
        %v1270 = vadd.f32 %v384, %v1269
        %v1271 = vpop.f32.mrb[0].mxu0
        %v1272 = vpop.f32.mrb[0].mxu0
        %v1273 = vadd.f32 %v384, %v1272
        %v1274 = vpop.f32.mrb[0].mxu0
        %1275 = vmatprep.mubr.bf16.mxu0 0
        %1276 = vmatmul.mubr.bf16.gmra.mrb[0].mxu0 %v852
        %v1277 = vpop.f32.mrb[0].mxu0
        %v1278 = vadd.f32 %v384, %v1277
        %v1279 = vpop.f32.mrb[0].mxu0
        %v1280 = vpop.f32.mrb[0].mxu0
        %v1281 = vadd.f32 %v384, %v1280
        %v1282 = vpop.f32.mrb[0].mxu0
        %1283 = vmatprep.mubr.bf16.mxu0 0
        %1284 = vmatmul.mubr.bf16.gmra.mrb[0].mxu0 %v855
        %v1285 = vpop.f32.mrb[0].mxu0
        %v1286 = vadd.f32 %v384, %v1285
        %v1287 = vpop.f32.mrb[0].mxu0
        %v1288 = vpop.f32.mrb[0].mxu0
        %v1289 = vadd.f32 %v384, %v1288
        %v1290 = vpop.f32.mrb[0].mxu0
        %1291 = vmatprep.mubr.bf16.mxu0 0
        %1292 = vmatmul.mubr.bf16.gmra.mrb[0].mxu0 %v858
        %v1293 = vpop.f32.mrb[0].mxu0
        %v1294 = vadd.f32 %v384, %v1293
        %v1295 = vpop.f32.mrb[0].mxu0
        %v1296 = vpop.f32.mrb[0].mxu0
        %v1297 = vadd.f32 %v384, %v1296
        %v1298 = vpop.f32.mrb[0].mxu0
        %1299 = vmatprep.mubr.bf16.mxu0 0
        %1300 = vmatmul.mubr.bf16.gmra.mrb[0].mxu0 %v861
        %v1301 = vpop.f32.mrb[0].mxu0
        %v1302 = vadd.f32 %v384, %v1301
        %v1303 = vpop.f32.mrb[0].mxu0
        %v1304 = vpop.f32.mrb[0].mxu0
        %v1305 = vadd.f32 %v384, %v1304
        %v1306 = vpop.f32.mrb[0].mxu0
        %1307 = vmatprep.mubr.bf16.mxu0 0
        %1308 = vmatmul.mubr.bf16.gmra.mrb[0].mxu0 %v864
        %v1309 = vpop.f32.mrb[0].mxu0
        %v1310 = vadd.f32 %v384, %v1309
        %v1311 = vpop.f32.mrb[0].mxu0
        %v1312 = vpop.f32.mrb[0].mxu0
        %v1313 = vadd.f32 %v384, %v1312
        %v1314 = vpop.f32.mrb[0].mxu0
        %1315 = vmatprep.mubr.bf16.mxu0 0
        %1316 = vmatmul.mubr.bf16.gmra.mrb[0].mxu0 %v867
        %v1317 = vpop.f32.mrb[0].mxu0
        %v1318 = vadd.f32 %v384, %v1317
        %v1319 = vpop.f32.mrb[0].mxu0
        %v1320 = vpop.f32.mrb[0].mxu0
        %v1321 = vadd.f32 %v384, %v1320
        %v1322 = vpop.f32.mrb[0].mxu0
        %1323 = vmatprep.mubr.bf16.mxu0 0
        %1324 = vmatmul.mubr.bf16.gmra.mrb[0].mxu0 %v870
        %v1325 = vpop.f32.mrb[0].mxu0
        %v1326 = vadd.f32 %v384, %v1325
        %v1327 = vpop.f32.mrb[0].mxu0
        %v1328 = vpop.f32.mrb[0].mxu0
        %v1329 = vadd.f32 %v384, %v1328
        %v1330 = vpop.f32.mrb[0].mxu0
        %1331 = vmatprep.mubr.bf16.mxu0 0
        %1332 = vmatmul.mubr.bf16.gmra.mrb[0].mxu0 %v873
        %v1333 = vpop.f32.mrb[0].mxu0
        %v1334 = vadd.f32 %v384, %v1333
        %v1335 = vpop.f32.mrb[0].mxu0
        %v1336 = vpop.f32.mrb[0].mxu0
        %v1337 = vadd.f32 %v384, %v1336
        %v1338 = vpop.f32.mrb[0].mxu0
        %1339 = vmatprep.mubr.bf16.mxu0 0
        %1340 = vmatmul.mubr.bf16.gmra.mrb[0].mxu0 %v876
        %v1341 = vpop.f32.mrb[0].mxu0
        %v1342 = vadd.f32 %v384, %v1341
        %v1343 = vpop.f32.mrb[0].mxu0
        %v1344 = vpop.f32.mrb[0].mxu0
        %v1345 = vadd.f32 %v384, %v1344
        %v1346 = vpop.f32.mrb[0].mxu0
        %1347 = vmatprep.mubr.bf16.mxu0 0
        %1348 = vmatmul.mubr.bf16.gmra.mrb[0].mxu0 %v879
        %v1349 = vpop.f32.mrb[0].mxu0
        %v1350 = vadd.f32 %v384, %v1349
        %v1351 = vpop.f32.mrb[0].mxu0
        %v1352 = vpop.f32.mrb[0].mxu0
        %v1353 = vadd.f32 %v384, %v1352
        %v1354 = vpop.f32.mrb[0].mxu0
        %1355 = vmatprep.mubr.bf16.mxu0 0
        %1356 = vmatmul.mubr.bf16.gmra.mrb[0].mxu0 %v882
        %v1357 = vpop.f32.mrb[0].mxu0
        %v1358 = vadd.f32 %v384, %v1357
        %v1359 = vpop.f32.mrb[0].mxu0
        %v1360 = vpop.f32.mrb[0].mxu0
        %v1361 = vadd.f32 %v384, %v1360
        %v1362 = vpop.f32.mrb[0].mxu0
        %1363 = vmatprep.mubr.bf16.mxu0 0
        %1364 = vmatmul.mubr.bf16.gmra.mrb[0].mxu0 %v885
        %v1365 = vpop.f32.mrb[0].mxu0
        %v1366 = vadd.f32 %v384, %v1365
        %v1367 = vpop.f32.mrb[0].mxu0
        %v1368 = vpop.f32.mrb[0].mxu0
        %v1369 = vadd.f32 %v384, %v1368
        %v1370 = vpop.f32.mrb[0].mxu0
        %1371 = vmatprep.mubr.bf16.mxu0 0
        %1372 = vmatmul.mubr.bf16.gmra.mrb[0].mxu0 %v888
        %v1373 = vpop.f32.mrb[0].mxu0
        %v1374 = vadd.f32 %v384, %v1373
        %v1375 = vpop.f32.mrb[0].mxu0
        %v1376 = vpop.f32.mrb[0].mxu0
        %v1377 = vadd.f32 %v384, %v1376
        %v1378 = vpop.f32.mrb[0].mxu0
        %1379 = vmatprep.mubr.bf16.mxu0 0
        %1380 = vmatmul.mubr.bf16.gmra.mrb[0].mxu0 %v891
        %v1381 = vpop.f32.mrb[0].mxu0
        %v1382 = vadd.f32 %v384, %v1381
        %v1383 = vpop.f32.mrb[0].mxu0
        %v1384 = vpop.f32.mrb[0].mxu0
        %v1385 = vadd.f32 %v384, %v1384
        %v1386 = vpop.f32.mrb[0].mxu0
        %1387 = vmatprep.mubr.bf16.mxu0 0
        %1388 = vmatmul.mubr.bf16.gmra.mrb[0].mxu0 %v894
        %v1389 = vpop.f32.mrb[0].mxu0
        %v1390 = vadd.f32 %v384, %v1389
        %v1391 = vpop.f32.mrb[0].mxu0
        %v1392 = vpop.f32.mrb[0].mxu0
        %v1393 = vadd.f32 %v384, %v1392
        %v1394 = vpop.f32.mrb[0].mxu0
        %1395 = vmatprep.mubr.bf16.mxu0 0
        %1396 = vmatmul.mubr.bf16.gmra.mrb[0].mxu0 %v897
        %v1397 = vpop.f32.mrb[0].mxu0
        %v1398 = vadd.f32 %v384, %v1397
        %v1399 = vpop.f32.mrb[0].mxu0
        %v1400 = vpop.f32.mrb[0].mxu0
        %v1401 = vadd.f32 %v384, %v1400
        %v1402 = vpop.f32.mrb[0].mxu0
        %1403 = vmatprep.mubr.bf16.mxu0 0
        %1404 = vmatmul.mubr.bf16.gmra.mrb[0].mxu0 %v900
        %v1405 = vpop.f32.mrb[0].mxu0
        %v1406 = vadd.f32 %v384, %v1405
        %v1407 = vpop.f32.mrb[0].mxu0
        %v1408 = vpop.f32.mrb[0].mxu0
        %v1409 = vadd.f32 %v384, %v1408
        %v1410 = vpop.f32.mrb[0].mxu0
        %1411 = vmatprep.mubr.bf16.mxu0 0
        %1412 = vmatmul.mubr.bf16.gmra.mrb[0].mxu0 %v903
        %v1413 = vpop.f32.mrb[0].mxu0
        %v1414 = vadd.f32 %v384, %v1413
        %v1415 = vpop.f32.mrb[0].mxu0
        %v1416 = vpop.f32.mrb[0].mxu0
        %v1417 = vadd.f32 %v384, %v1416
        %v1418 = vpop.f32.mrb[0].mxu0
        %1419 = vmatprep.mubr.bf16.mxu0 0
        %1420 = vmatmul.mubr.bf16.gmra.mrb[0].mxu0 %v906
        %v1421 = vpop.f32.mrb[0].mxu0
        %v1422 = vadd.f32 %v384, %v1421
        %v1423 = vpop.f32.mrb[0].mxu0
        %v1424 = vpop.f32.mrb[0].mxu0
        %v1425 = vadd.f32 %v384, %v1424
        %v1426 = vpop.f32.mrb[0].mxu0
        %1427 = vmatprep.mubr.bf16.mxu0 0
        %1428 = vmatmul.mubr.bf16.gmra.mrb[0].mxu0 %v909
        %v1429 = vpop.f32.mrb[0].mxu0
        %v1430 = vadd.f32 %v384, %v1429
        %v1431 = vpop.f32.mrb[0].mxu0
        %v1432 = vpop.f32.mrb[0].mxu0
        %v1433 = vadd.f32 %v384, %v1432
        %v1434 = vpop.f32.mrb[0].mxu0
        %1435 = vmatprep.mubr.bf16.mxu0 0
        %1436 = vmatmul.mubr.bf16.gmra.mrb[0].mxu0 %v912
        %v1437 = vpop.f32.mrb[0].mxu0
        %v1438 = vadd.f32 %v384, %v1437
        %v1439 = vpop.f32.mrb[0].mxu0
        %v1440 = vpop.f32.mrb[0].mxu0
        %v1441 = vadd.f32 %v384, %v1440
        %v1442 = vpop.f32.mrb[0].mxu0
        %1443 = vmatprep.mubr.bf16.mxu0 0
        %1444 = vmatmul.mubr.bf16.gmra.mrb[0].mxu0 %v915
        %v1445 = vpop.f32.mrb[0].mxu0
        %v1446 = vadd.f32 %v384, %v1445
        %v1447 = vpop.f32.mrb[0].mxu0
        %v1448 = vpop.f32.mrb[0].mxu0
        %v1449 = vadd.f32 %v384, %v1448
        %v1450 = vpop.f32.mrb[0].mxu0
        %1451 = vmatprep.mubr.bf16.mxu0 0
        %1452 = vmatmul.mubr.bf16.gmra.mrb[0].mxu0 %v918
        %v1453 = vpop.f32.mrb[0].mxu0
        %v1454 = vadd.f32 %v384, %v1453
        %v1455 = vpop.f32.mrb[0].mxu0
        %v1456 = vpop.f32.mrb[0].mxu0
        %v1457 = vadd.f32 %v384, %v1456
        %v1458 = vpop.f32.mrb[0].mxu0
        %1459 = vmatprep.mubr.bf16.mxu0 0
        %1460 = vmatmul.mubr.bf16.gmra.mrb[0].mxu0 %v921
        %v1461 = vpop.f32.mrb[0].mxu0
        %v1462 = vadd.f32 %v384, %v1461
        %v1463 = vpop.f32.mrb[0].mxu0
        %v1464 = vpop.f32.mrb[0].mxu0
        %v1465 = vadd.f32 %v384, %v1464
        %v1466 = vpop.f32.mrb[0].mxu0
        %1467 = vdwg.mxu0
        %v1468 = vmax.f32 %v958, 0.0
        %v1469 = vmax.f32 %v961, 0.0
        %v1470 = vmax.f32 %v966, 0.0
        %v1471 = vmax.f32 %v969, 0.0
        %v1472 = vmax.f32 %v974, 0.0
        %v1473 = vmax.f32 %v977, 0.0
        %v1474 = vmax.f32 %v982, 0.0
        %v1475 = vmax.f32 %v985, 0.0
        %v1476 = vmax.f32 %v990, 0.0
        %v1477 = vmax.f32 %v993, 0.0
        %v1478 = vmax.f32 %v998, 0.0
        %v1479 = vmax.f32 %v1001, 0.0
        %v1480 = vmax.f32 %v1006, 0.0
        %v1481 = vmax.f32 %v1009, 0.0
        %v1482 = vmax.f32 %v1014, 0.0
        %v1483 = vmax.f32 %v1017, 0.0
        %v1484 = vmax.f32 %v1022, 0.0
        %v1485 = vmax.f32 %v1025, 0.0
        %v1486 = vmax.f32 %v1030, 0.0
        %v1487 = vmax.f32 %v1033, 0.0
        %v1488 = vmax.f32 %v1038, 0.0
        %v1489 = vmax.f32 %v1041, 0.0
        %v1490 = vmax.f32 %v1046, 0.0
        %v1491 = vmax.f32 %v1049, 0.0
        %v1492 = vmax.f32 %v1054, 0.0
        %v1493 = vmax.f32 %v1057, 0.0
        %v1494 = vmax.f32 %v1062, 0.0
        %v1495 = vmax.f32 %v1065, 0.0
        %v1496 = vmax.f32 %v1070, 0.0
        %v1497 = vmax.f32 %v1073, 0.0
        %v1498 = vmax.f32 %v1078, 0.0
        %v1499 = vmax.f32 %v1081, 0.0
        %v1500 = vmax.f32 %v1086, 0.0
        %v1501 = vmax.f32 %v1089, 0.0
        %v1502 = vmax.f32 %v1094, 0.0
        %v1503 = vmax.f32 %v1097, 0.0
        %v1504 = vmax.f32 %v1102, 0.0
        %v1505 = vmax.f32 %v1105, 0.0
        %v1506 = vmax.f32 %v1110, 0.0
        %v1507 = vmax.f32 %v1113, 0.0
        %v1508 = vmax.f32 %v1118, 0.0
        %v1509 = vmax.f32 %v1121, 0.0
        %v1510 = vmax.f32 %v1126, 0.0
        %v1511 = vmax.f32 %v1129, 0.0
        %v1512 = vmax.f32 %v1134, 0.0
        %v1513 = vmax.f32 %v1137, 0.0
        %v1514 = vmax.f32 %v1142, 0.0
        %v1515 = vmax.f32 %v1145, 0.0
        %v1516 = vmax.f32 %v1150, 0.0
        %v1517 = vmax.f32 %v1153, 0.0
        %v1518 = vmax.f32 %v1158, 0.0
        %v1519 = vmax.f32 %v1161, 0.0
        %v1520 = vmax.f32 %v1166, 0.0
        %v1521 = vmax.f32 %v1169, 0.0
        %v1522 = vmax.f32 %v1174, 0.0
        %v1523 = vmax.f32 %v1177, 0.0
        %v1524 = vmax.f32 %v1182, 0.0
        %v1525 = vmax.f32 %v1185, 0.0
        %v1526 = vmax.f32 %v1190, 0.0
        %v1527 = vmax.f32 %v1193, 0.0
        %v1528 = vmax.f32 %v1198, 0.0
        %v1529 = vmax.f32 %v1201, 0.0
        %v1530 = vmax.f32 %v1206, 0.0
        %v1531 = vmax.f32 %v1209, 0.0
        %v1532 = vmax.f32 %v1214, 0.0
        %v1533 = vmax.f32 %v1217, 0.0
        %v1534 = vmax.f32 %v1222, 0.0
        %v1535 = vmax.f32 %v1225, 0.0
        %v1536 = vmax.f32 %v1230, 0.0
        %v1537 = vmax.f32 %v1233, 0.0
        %v1538 = vmax.f32 %v1238, 0.0
        %v1539 = vmax.f32 %v1241, 0.0
        %v1540 = vmax.f32 %v1246, 0.0
        %v1541 = vmax.f32 %v1249, 0.0
        %v1542 = vmax.f32 %v1254, 0.0
        %v1543 = vmax.f32 %v1257, 0.0
        %v1544 = vmax.f32 %v1262, 0.0
        %v1545 = vmax.f32 %v1265, 0.0
        %v1546 = vmax.f32 %v1270, 0.0
        %v1547 = vmax.f32 %v1273, 0.0
        %v1548 = vmax.f32 %v1278, 0.0
        %v1549 = vmax.f32 %v1281, 0.0
        %v1550 = vmax.f32 %v1286, 0.0
        %v1551 = vmax.f32 %v1289, 0.0
        %v1552 = vmax.f32 %v1294, 0.0
        %v1553 = vmax.f32 %v1297, 0.0
        %v1554 = vmax.f32 %v1302, 0.0
        %v1555 = vmax.f32 %v1305, 0.0
        %v1556 = vmax.f32 %v1310, 0.0
        %v1557 = vmax.f32 %v1313, 0.0
        %v1558 = vmax.f32 %v1318, 0.0
        %v1559 = vmax.f32 %v1321, 0.0
        %v1560 = vmax.f32 %v1326, 0.0
        %v1561 = vmax.f32 %v1329, 0.0
        %v1562 = vmax.f32 %v1334, 0.0
        %v1563 = vmax.f32 %v1337, 0.0
        %v1564 = vmax.f32 %v1342, 0.0
        %v1565 = vmax.f32 %v1345, 0.0
        %v1566 = vmax.f32 %v1350, 0.0
        %v1567 = vmax.f32 %v1353, 0.0
        %v1568 = vmax.f32 %v1358, 0.0
        %v1569 = vmax.f32 %v1361, 0.0
        %v1570 = vmax.f32 %v1366, 0.0
        %v1571 = vmax.f32 %v1369, 0.0
        %v1572 = vmax.f32 %v1374, 0.0
        %v1573 = vmax.f32 %v1377, 0.0
        %v1574 = vmax.f32 %v1382, 0.0
        %v1575 = vmax.f32 %v1385, 0.0
        %v1576 = vmax.f32 %v1390, 0.0
        %v1577 = vmax.f32 %v1393, 0.0
        %v1578 = vmax.f32 %v1398, 0.0
        %v1579 = vmax.f32 %v1401, 0.0
        %v1580 = vmax.f32 %v1406, 0.0
        %v1581 = vmax.f32 %v1409, 0.0
        %v1582 = vmax.f32 %v1414, 0.0
        %v1583 = vmax.f32 %v1417, 0.0
        %v1584 = vmax.f32 %v1422, 0.0
        %v1585 = vmax.f32 %v1425, 0.0
        %v1586 = vmax.f32 %v1430, 0.0
        %v1587 = vmax.f32 %v1433, 0.0
        %v1588 = vmax.f32 %v1438, 0.0
        %v1589 = vmax.f32 %v1441, 0.0
        %v1590 = vmax.f32 %v1446, 0.0
        %v1591 = vmax.f32 %v1449, 0.0
        %v1592 = vmax.f32 %v1454, 0.0
        %v1593 = vmax.f32 %v1457, 0.0
        %v1594 = vmax.f32 %v1462, 0.0
        %v1595 = vmax.f32 %v1465, 0.0
        %v1596 = vld [vmem:[%s4] sm:$0x1]
        %v1598 = vlaneseq
        %v1599 = vshrl.u32 %v1598, 7
        %v1600 = vsub.s32 0, %v1599
        %v1601 = vrot.slane %v1596, %v1600
        %v1603 = vmul.f32 %v1468, %v1601
        %v1604 = vmul.f32 %v1469, %v1601
        %v1605 = vmul.f32 %v1470, %v1601
        %v1606 = vmul.f32 %v1471, %v1601
        %v1607 = vmul.f32 %v1472, %v1601
        %v1608 = vmul.f32 %v1473, %v1601
        %v1609 = vmul.f32 %v1474, %v1601
        %v1610 = vmul.f32 %v1475, %v1601
        %v1611 = vmul.f32 %v1476, %v1601
        %v1612 = vmul.f32 %v1477, %v1601
        %v1613 = vmul.f32 %v1478, %v1601
        %v1614 = vmul.f32 %v1479, %v1601
        %v1615 = vmul.f32 %v1480, %v1601
        %v1616 = vmul.f32 %v1481, %v1601
        %v1617 = vmul.f32 %v1482, %v1601
        %v1618 = vmul.f32 %v1483, %v1601
        %v1619 = vmul.f32 %v1484, %v1601
        %v1620 = vmul.f32 %v1485, %v1601
        %v1621 = vmul.f32 %v1486, %v1601
        %v1622 = vmul.f32 %v1487, %v1601
        %v1623 = vmul.f32 %v1488, %v1601
        %v1624 = vmul.f32 %v1489, %v1601
        %v1625 = vmul.f32 %v1490, %v1601
        %v1626 = vmul.f32 %v1491, %v1601
        %v1627 = vmul.f32 %v1492, %v1601
        %v1628 = vmul.f32 %v1493, %v1601
        %v1629 = vmul.f32 %v1494, %v1601
        %v1630 = vmul.f32 %v1495, %v1601
        %v1631 = vmul.f32 %v1496, %v1601
        %v1632 = vmul.f32 %v1497, %v1601
        %v1633 = vmul.f32 %v1498, %v1601
        %v1634 = vmul.f32 %v1499, %v1601
        %v1635 = vmul.f32 %v1500, %v1601
        %v1636 = vmul.f32 %v1501, %v1601
        %v1637 = vmul.f32 %v1502, %v1601
        %v1638 = vmul.f32 %v1503, %v1601
        %v1639 = vmul.f32 %v1504, %v1601
        %v1640 = vmul.f32 %v1505, %v1601
        %v1641 = vmul.f32 %v1506, %v1601
        %v1642 = vmul.f32 %v1507, %v1601
        %v1643 = vmul.f32 %v1508, %v1601
        %v1644 = vmul.f32 %v1509, %v1601
        %v1645 = vmul.f32 %v1510, %v1601
        %v1646 = vmul.f32 %v1511, %v1601
        %v1647 = vmul.f32 %v1512, %v1601
        %v1648 = vmul.f32 %v1513, %v1601
        %v1649 = vmul.f32 %v1514, %v1601
        %v1650 = vmul.f32 %v1515, %v1601
        %v1651 = vmul.f32 %v1516, %v1601
        %v1652 = vmul.f32 %v1517, %v1601
        %v1653 = vmul.f32 %v1518, %v1601
        %v1654 = vmul.f32 %v1519, %v1601
        %v1655 = vmul.f32 %v1520, %v1601
        %v1656 = vmul.f32 %v1521, %v1601
        %v1657 = vmul.f32 %v1522, %v1601
        %v1658 = vmul.f32 %v1523, %v1601
        %v1659 = vmul.f32 %v1524, %v1601
        %v1660 = vmul.f32 %v1525, %v1601
        %v1661 = vmul.f32 %v1526, %v1601
        %v1662 = vmul.f32 %v1527, %v1601
        %v1663 = vmul.f32 %v1528, %v1601
        %v1664 = vmul.f32 %v1529, %v1601
        %v1665 = vmul.f32 %v1530, %v1601
        %v1666 = vmul.f32 %v1531, %v1601
        %v1667 = vmul.f32 %v1532, %v1601
        %v1668 = vmul.f32 %v1533, %v1601
        %v1669 = vmul.f32 %v1534, %v1601
        %v1670 = vmul.f32 %v1535, %v1601
        %v1671 = vmul.f32 %v1536, %v1601
        %v1672 = vmul.f32 %v1537, %v1601
        %v1673 = vmul.f32 %v1538, %v1601
        %v1674 = vmul.f32 %v1539, %v1601
        %v1675 = vmul.f32 %v1540, %v1601
        %v1676 = vmul.f32 %v1541, %v1601
        %v1677 = vmul.f32 %v1542, %v1601
        %v1678 = vmul.f32 %v1543, %v1601
        %v1679 = vmul.f32 %v1544, %v1601
        %v1680 = vmul.f32 %v1545, %v1601
        %v1681 = vmul.f32 %v1546, %v1601
        %v1682 = vmul.f32 %v1547, %v1601
        %v1683 = vmul.f32 %v1548, %v1601
        %v1684 = vmul.f32 %v1549, %v1601
        %v1685 = vmul.f32 %v1550, %v1601
        %v1686 = vmul.f32 %v1551, %v1601
        %v1687 = vmul.f32 %v1552, %v1601
        %v1688 = vmul.f32 %v1553, %v1601
        %v1689 = vmul.f32 %v1554, %v1601
        %v1690 = vmul.f32 %v1555, %v1601
        %v1691 = vmul.f32 %v1556, %v1601
        %v1692 = vmul.f32 %v1557, %v1601
        %v1693 = vmul.f32 %v1558, %v1601
        %v1694 = vmul.f32 %v1559, %v1601
        %v1695 = vmul.f32 %v1560, %v1601
        %v1696 = vmul.f32 %v1561, %v1601
        %v1697 = vmul.f32 %v1562, %v1601
        %v1698 = vmul.f32 %v1563, %v1601
        %v1699 = vmul.f32 %v1564, %v1601
        %v1700 = vmul.f32 %v1565, %v1601
        %v1701 = vmul.f32 %v1566, %v1601
        %v1702 = vmul.f32 %v1567, %v1601
        %v1703 = vmul.f32 %v1568, %v1601
        %v1704 = vmul.f32 %v1569, %v1601
        %v1705 = vmul.f32 %v1570, %v1601
        %v1706 = vmul.f32 %v1571, %v1601
        %v1707 = vmul.f32 %v1572, %v1601
        %v1708 = vmul.f32 %v1573, %v1601
        %v1709 = vmul.f32 %v1574, %v1601
        %v1710 = vmul.f32 %v1575, %v1601
        %v1711 = vmul.f32 %v1576, %v1601
        %v1712 = vmul.f32 %v1577, %v1601
        %v1713 = vmul.f32 %v1578, %v1601
        %v1714 = vmul.f32 %v1579, %v1601
        %v1715 = vmul.f32 %v1580, %v1601
        %v1716 = vmul.f32 %v1581, %v1601
        %v1717 = vmul.f32 %v1582, %v1601
        %v1718 = vmul.f32 %v1583, %v1601
        %v1719 = vmul.f32 %v1584, %v1601
        %v1720 = vmul.f32 %v1585, %v1601
        %v1721 = vmul.f32 %v1586, %v1601
        %v1722 = vmul.f32 %v1587, %v1601
        %v1723 = vmul.f32 %v1588, %v1601
        %v1724 = vmul.f32 %v1589, %v1601
        %v1725 = vmul.f32 %v1590, %v1601
        %v1726 = vmul.f32 %v1591, %v1601
        %v1727 = vmul.f32 %v1592, %v1601
        %v1728 = vmul.f32 %v1593, %v1601
        %v1729 = vmul.f32 %v1594, %v1601
        %v1730 = vmul.f32 %v1595, %v1601
        %vm1731 = vcmask 261120
        %v1732 = vsel %vm1731, %v1603, 0.0
        %1733 = vadd.xlane.f32.xlu0 %v1732
        %v1734 = vpop.xlane.xlu0 %1733
        %v1735 = vsel %vm1731, %v1604, 0.0
        %1736 = vadd.xlane.f32.xlu0 %v1735
        %v1737 = vpop.xlane.xlu0 %1736
        %v1738 = vsel %vm1731, %v1605, 0.0
        %1739 = vadd.xlane.f32.xlu0 %v1738
        %v1740 = vpop.xlane.xlu0 %1739
        %v1741 = vsel %vm1731, %v1606, 0.0
        %1742 = vadd.xlane.f32.xlu0 %v1741
        %v1743 = vpop.xlane.xlu0 %1742
        %v1744 = vsel %vm1731, %v1607, 0.0
        %1745 = vadd.xlane.f32.xlu0 %v1744
        %v1746 = vpop.xlane.xlu0 %1745
        %v1747 = vsel %vm1731, %v1608, 0.0
        %1748 = vadd.xlane.f32.xlu0 %v1747
        %v1749 = vpop.xlane.xlu0 %1748
        %v1750 = vsel %vm1731, %v1609, 0.0
        %1751 = vadd.xlane.f32.xlu0 %v1750
        %v1752 = vpop.xlane.xlu0 %1751
        %v1753 = vsel %vm1731, %v1610, 0.0
        %1754 = vadd.xlane.f32.xlu0 %v1753
        %v1755 = vpop.xlane.xlu0 %1754
        %v1756 = vsel %vm1731, %v1611, 0.0
        %1757 = vadd.xlane.f32.xlu0 %v1756
        %v1758 = vpop.xlane.xlu0 %1757
        %v1759 = vsel %vm1731, %v1612, 0.0
        %1760 = vadd.xlane.f32.xlu0 %v1759
        %v1761 = vpop.xlane.xlu0 %1760
        %v1762 = vsel %vm1731, %v1613, 0.0
        %1763 = vadd.xlane.f32.xlu0 %v1762
        %v1764 = vpop.xlane.xlu0 %1763
        %v1765 = vsel %vm1731, %v1614, 0.0
        %1766 = vadd.xlane.f32.xlu0 %v1765
        %v1767 = vpop.xlane.xlu0 %1766
        %v1768 = vsel %vm1731, %v1615, 0.0
        %1769 = vadd.xlane.f32.xlu0 %v1768
        %v1770 = vpop.xlane.xlu0 %1769
        %v1771 = vsel %vm1731, %v1616, 0.0
        %1772 = vadd.xlane.f32.xlu0 %v1771
        %v1773 = vpop.xlane.xlu0 %1772
        %v1774 = vsel %vm1731, %v1617, 0.0
        %1775 = vadd.xlane.f32.xlu0 %v1774
        %v1776 = vpop.xlane.xlu0 %1775
        %v1777 = vsel %vm1731, %v1618, 0.0
        %1778 = vadd.xlane.f32.xlu0 %v1777
        %v1779 = vpop.xlane.xlu0 %1778
        %v1780 = vsel %vm1731, %v1619, 0.0
        %1781 = vadd.xlane.f32.xlu0 %v1780
        %v1782 = vpop.xlane.xlu0 %1781
        %v1783 = vsel %vm1731, %v1620, 0.0
        %1784 = vadd.xlane.f32.xlu0 %v1783
        %v1785 = vpop.xlane.xlu0 %1784
        %v1786 = vsel %vm1731, %v1621, 0.0
        %1787 = vadd.xlane.f32.xlu0 %v1786
        %v1788 = vpop.xlane.xlu0 %1787
        %v1789 = vsel %vm1731, %v1622, 0.0
        %1790 = vadd.xlane.f32.xlu0 %v1789
        %v1791 = vpop.xlane.xlu0 %1790
        %v1792 = vsel %vm1731, %v1623, 0.0
        %1793 = vadd.xlane.f32.xlu0 %v1792
        %v1794 = vpop.xlane.xlu0 %1793
        %v1795 = vsel %vm1731, %v1624, 0.0
        %1796 = vadd.xlane.f32.xlu0 %v1795
        %v1797 = vpop.xlane.xlu0 %1796
        %v1798 = vsel %vm1731, %v1625, 0.0
        %1799 = vadd.xlane.f32.xlu0 %v1798
        %v1800 = vpop.xlane.xlu0 %1799
        %v1801 = vsel %vm1731, %v1626, 0.0
        %1802 = vadd.xlane.f32.xlu0 %v1801
        %v1803 = vpop.xlane.xlu0 %1802
        %v1804 = vsel %vm1731, %v1627, 0.0
        %1805 = vadd.xlane.f32.xlu0 %v1804
        %v1806 = vpop.xlane.xlu0 %1805
        %v1807 = vsel %vm1731, %v1628, 0.0
        %1808 = vadd.xlane.f32.xlu0 %v1807
        %v1809 = vpop.xlane.xlu0 %1808
        %v1810 = vsel %vm1731, %v1629, 0.0
        %1811 = vadd.xlane.f32.xlu0 %v1810
        %v1812 = vpop.xlane.xlu0 %1811
        %v1813 = vsel %vm1731, %v1630, 0.0
        %1814 = vadd.xlane.f32.xlu0 %v1813
        %v1815 = vpop.xlane.xlu0 %1814
        %v1816 = vsel %vm1731, %v1631, 0.0
        %1817 = vadd.xlane.f32.xlu0 %v1816
        %v1818 = vpop.xlane.xlu0 %1817
        %v1819 = vsel %vm1731, %v1632, 0.0
        %1820 = vadd.xlane.f32.xlu0 %v1819
        %v1821 = vpop.xlane.xlu0 %1820
        %v1822 = vsel %vm1731, %v1633, 0.0
        %1823 = vadd.xlane.f32.xlu0 %v1822
        %v1824 = vpop.xlane.xlu0 %1823
        %v1825 = vsel %vm1731, %v1634, 0.0
        %1826 = vadd.xlane.f32.xlu0 %v1825
        %v1827 = vpop.xlane.xlu0 %1826
        %v1828 = vsel %vm1731, %v1635, 0.0
        %1829 = vadd.xlane.f32.xlu0 %v1828
        %v1830 = vpop.xlane.xlu0 %1829
        %v1831 = vsel %vm1731, %v1636, 0.0
        %1832 = vadd.xlane.f32.xlu0 %v1831
        %v1833 = vpop.xlane.xlu0 %1832
        %v1834 = vsel %vm1731, %v1637, 0.0
        %1835 = vadd.xlane.f32.xlu0 %v1834
        %v1836 = vpop.xlane.xlu0 %1835
        %v1837 = vsel %vm1731, %v1638, 0.0
        %1838 = vadd.xlane.f32.xlu0 %v1837
        %v1839 = vpop.xlane.xlu0 %1838
        %v1840 = vsel %vm1731, %v1639, 0.0
        %1841 = vadd.xlane.f32.xlu0 %v1840
        %v1842 = vpop.xlane.xlu0 %1841
        %v1843 = vsel %vm1731, %v1640, 0.0
        %1844 = vadd.xlane.f32.xlu0 %v1843
        %v1845 = vpop.xlane.xlu0 %1844
        %v1846 = vsel %vm1731, %v1641, 0.0
        %1847 = vadd.xlane.f32.xlu0 %v1846
        %v1848 = vpop.xlane.xlu0 %1847
        %v1849 = vsel %vm1731, %v1642, 0.0
        %1850 = vadd.xlane.f32.xlu0 %v1849
        %v1851 = vpop.xlane.xlu0 %1850
        %v1852 = vsel %vm1731, %v1643, 0.0
        %1853 = vadd.xlane.f32.xlu0 %v1852
        %v1854 = vpop.xlane.xlu0 %1853
        %v1855 = vsel %vm1731, %v1644, 0.0
        %1856 = vadd.xlane.f32.xlu0 %v1855
        %v1857 = vpop.xlane.xlu0 %1856
        %v1858 = vsel %vm1731, %v1645, 0.0
        %1859 = vadd.xlane.f32.xlu0 %v1858
        %v1860 = vpop.xlane.xlu0 %1859
        %v1861 = vsel %vm1731, %v1646, 0.0
        %1862 = vadd.xlane.f32.xlu0 %v1861
        %v1863 = vpop.xlane.xlu0 %1862
        %v1864 = vsel %vm1731, %v1647, 0.0
        %1865 = vadd.xlane.f32.xlu0 %v1864
        %v1866 = vpop.xlane.xlu0 %1865
        %v1867 = vsel %vm1731, %v1648, 0.0
        %1868 = vadd.xlane.f32.xlu0 %v1867
        %v1869 = vpop.xlane.xlu0 %1868
        %v1870 = vsel %vm1731, %v1649, 0.0
        %1871 = vadd.xlane.f32.xlu0 %v1870
        %v1872 = vpop.xlane.xlu0 %1871
        %v1873 = vsel %vm1731, %v1650, 0.0
        %1874 = vadd.xlane.f32.xlu0 %v1873
        %v1875 = vpop.xlane.xlu0 %1874
        %v1876 = vsel %vm1731, %v1651, 0.0
        %1877 = vadd.xlane.f32.xlu0 %v1876
        %v1878 = vpop.xlane.xlu0 %1877
        %v1879 = vsel %vm1731, %v1652, 0.0
        %1880 = vadd.xlane.f32.xlu0 %v1879
        %v1881 = vpop.xlane.xlu0 %1880
        %v1882 = vsel %vm1731, %v1653, 0.0
        %1883 = vadd.xlane.f32.xlu0 %v1882
        %v1884 = vpop.xlane.xlu0 %1883
        %v1885 = vsel %vm1731, %v1654, 0.0
        %1886 = vadd.xlane.f32.xlu0 %v1885
        %v1887 = vpop.xlane.xlu0 %1886
        %v1888 = vsel %vm1731, %v1655, 0.0
        %1889 = vadd.xlane.f32.xlu0 %v1888
        %v1890 = vpop.xlane.xlu0 %1889
        %v1891 = vsel %vm1731, %v1656, 0.0
        %1892 = vadd.xlane.f32.xlu0 %v1891
        %v1893 = vpop.xlane.xlu0 %1892
        %v1894 = vsel %vm1731, %v1657, 0.0
        %1895 = vadd.xlane.f32.xlu0 %v1894
        %v1896 = vpop.xlane.xlu0 %1895
        %v1897 = vsel %vm1731, %v1658, 0.0
        %1898 = vadd.xlane.f32.xlu0 %v1897
        %v1899 = vpop.xlane.xlu0 %1898
        %v1900 = vsel %vm1731, %v1659, 0.0
        %1901 = vadd.xlane.f32.xlu0 %v1900
        %v1902 = vpop.xlane.xlu0 %1901
        %v1903 = vsel %vm1731, %v1660, 0.0
        %1904 = vadd.xlane.f32.xlu0 %v1903
        %v1905 = vpop.xlane.xlu0 %1904
        %v1906 = vsel %vm1731, %v1661, 0.0
        %1907 = vadd.xlane.f32.xlu0 %v1906
        %v1908 = vpop.xlane.xlu0 %1907
        %v1909 = vsel %vm1731, %v1662, 0.0
        %1910 = vadd.xlane.f32.xlu0 %v1909
        %v1911 = vpop.xlane.xlu0 %1910
        %v1912 = vsel %vm1731, %v1663, 0.0
        %1913 = vadd.xlane.f32.xlu0 %v1912
        %v1914 = vpop.xlane.xlu0 %1913
        %v1915 = vsel %vm1731, %v1664, 0.0
        %1916 = vadd.xlane.f32.xlu0 %v1915
        %v1917 = vpop.xlane.xlu0 %1916
        %v1918 = vsel %vm1731, %v1665, 0.0
        %1919 = vadd.xlane.f32.xlu0 %v1918
        %v1920 = vpop.xlane.xlu0 %1919
        %v1921 = vsel %vm1731, %v1666, 0.0
        %1922 = vadd.xlane.f32.xlu0 %v1921
        %v1923 = vpop.xlane.xlu0 %1922
        %v1924 = vsel %vm1731, %v1667, 0.0
        %1925 = vadd.xlane.f32.xlu0 %v1924
        %v1926 = vpop.xlane.xlu0 %1925
        %v1927 = vsel %vm1731, %v1668, 0.0
        %1928 = vadd.xlane.f32.xlu0 %v1927
        %v1929 = vpop.xlane.xlu0 %1928
        %v1930 = vsel %vm1731, %v1669, 0.0
        %1931 = vadd.xlane.f32.xlu0 %v1930
        %v1932 = vpop.xlane.xlu0 %1931
        %v1933 = vsel %vm1731, %v1670, 0.0
        %1934 = vadd.xlane.f32.xlu0 %v1933
        %v1935 = vpop.xlane.xlu0 %1934
        %v1936 = vsel %vm1731, %v1671, 0.0
        %1937 = vadd.xlane.f32.xlu0 %v1936
        %v1938 = vpop.xlane.xlu0 %1937
        %v1939 = vsel %vm1731, %v1672, 0.0
        %1940 = vadd.xlane.f32.xlu0 %v1939
        %v1941 = vpop.xlane.xlu0 %1940
        %v1942 = vsel %vm1731, %v1673, 0.0
        %1943 = vadd.xlane.f32.xlu0 %v1942
        %v1944 = vpop.xlane.xlu0 %1943
        %v1945 = vsel %vm1731, %v1674, 0.0
        %1946 = vadd.xlane.f32.xlu0 %v1945
        %v1947 = vpop.xlane.xlu0 %1946
        %v1948 = vsel %vm1731, %v1675, 0.0
        %1949 = vadd.xlane.f32.xlu0 %v1948
        %v1950 = vpop.xlane.xlu0 %1949
        %v1951 = vsel %vm1731, %v1676, 0.0
        %1952 = vadd.xlane.f32.xlu0 %v1951
        %v1953 = vpop.xlane.xlu0 %1952
        %v1954 = vsel %vm1731, %v1677, 0.0
        %1955 = vadd.xlane.f32.xlu0 %v1954
        %v1956 = vpop.xlane.xlu0 %1955
        %v1957 = vsel %vm1731, %v1678, 0.0
        %1958 = vadd.xlane.f32.xlu0 %v1957
        %v1959 = vpop.xlane.xlu0 %1958
        %v1960 = vsel %vm1731, %v1679, 0.0
        %1961 = vadd.xlane.f32.xlu0 %v1960
        %v1962 = vpop.xlane.xlu0 %1961
        %v1963 = vsel %vm1731, %v1680, 0.0
        %1964 = vadd.xlane.f32.xlu0 %v1963
        %v1965 = vpop.xlane.xlu0 %1964
        %v1966 = vsel %vm1731, %v1681, 0.0
        %1967 = vadd.xlane.f32.xlu0 %v1966
        %v1968 = vpop.xlane.xlu0 %1967
        %v1969 = vsel %vm1731, %v1682, 0.0
        %1970 = vadd.xlane.f32.xlu0 %v1969
        %v1971 = vpop.xlane.xlu0 %1970
        %v1972 = vsel %vm1731, %v1683, 0.0
        %1973 = vadd.xlane.f32.xlu0 %v1972
        %v1974 = vpop.xlane.xlu0 %1973
        %v1975 = vsel %vm1731, %v1684, 0.0
        %1976 = vadd.xlane.f32.xlu0 %v1975
        %v1977 = vpop.xlane.xlu0 %1976
        %v1978 = vsel %vm1731, %v1685, 0.0
        %1979 = vadd.xlane.f32.xlu0 %v1978
        %v1980 = vpop.xlane.xlu0 %1979
        %v1981 = vsel %vm1731, %v1686, 0.0
        %1982 = vadd.xlane.f32.xlu0 %v1981
        %v1983 = vpop.xlane.xlu0 %1982
        %v1984 = vsel %vm1731, %v1687, 0.0
        %1985 = vadd.xlane.f32.xlu0 %v1984
        %v1986 = vpop.xlane.xlu0 %1985
        %v1987 = vsel %vm1731, %v1688, 0.0
        %1988 = vadd.xlane.f32.xlu0 %v1987
        %v1989 = vpop.xlane.xlu0 %1988
        %v1990 = vsel %vm1731, %v1689, 0.0
        %1991 = vadd.xlane.f32.xlu0 %v1990
        %v1992 = vpop.xlane.xlu0 %1991
        %v1993 = vsel %vm1731, %v1690, 0.0
        %1994 = vadd.xlane.f32.xlu0 %v1993
        %v1995 = vpop.xlane.xlu0 %1994
        %v1996 = vsel %vm1731, %v1691, 0.0
        %1997 = vadd.xlane.f32.xlu0 %v1996
        %v1998 = vpop.xlane.xlu0 %1997
        %v1999 = vsel %vm1731, %v1692, 0.0
        %2000 = vadd.xlane.f32.xlu0 %v1999
        %v2001 = vpop.xlane.xlu0 %2000
        %v2002 = vsel %vm1731, %v1693, 0.0
        %2003 = vadd.xlane.f32.xlu0 %v2002
        %v2004 = vpop.xlane.xlu0 %2003
        %v2005 = vsel %vm1731, %v1694, 0.0
        %2006 = vadd.xlane.f32.xlu0 %v2005
        %v2007 = vpop.xlane.xlu0 %2006
        %v2008 = vsel %vm1731, %v1695, 0.0
        %2009 = vadd.xlane.f32.xlu0 %v2008
        %v2010 = vpop.xlane.xlu0 %2009
        %v2011 = vsel %vm1731, %v1696, 0.0
        %2012 = vadd.xlane.f32.xlu0 %v2011
        %v2013 = vpop.xlane.xlu0 %2012
        %v2014 = vsel %vm1731, %v1697, 0.0
        %2015 = vadd.xlane.f32.xlu0 %v2014
        %v2016 = vpop.xlane.xlu0 %2015
        %v2017 = vsel %vm1731, %v1698, 0.0
        %2018 = vadd.xlane.f32.xlu0 %v2017
        %v2019 = vpop.xlane.xlu0 %2018
        %v2020 = vsel %vm1731, %v1699, 0.0
        %2021 = vadd.xlane.f32.xlu0 %v2020
        %v2022 = vpop.xlane.xlu0 %2021
        %v2023 = vsel %vm1731, %v1700, 0.0
        %2024 = vadd.xlane.f32.xlu0 %v2023
        %v2025 = vpop.xlane.xlu0 %2024
        %v2026 = vsel %vm1731, %v1701, 0.0
        %2027 = vadd.xlane.f32.xlu0 %v2026
        %v2028 = vpop.xlane.xlu0 %2027
        %v2029 = vsel %vm1731, %v1702, 0.0
        %2030 = vadd.xlane.f32.xlu0 %v2029
        %v2031 = vpop.xlane.xlu0 %2030
        %v2032 = vsel %vm1731, %v1703, 0.0
        %2033 = vadd.xlane.f32.xlu0 %v2032
        %v2034 = vpop.xlane.xlu0 %2033
        %v2035 = vsel %vm1731, %v1704, 0.0
        %2036 = vadd.xlane.f32.xlu0 %v2035
        %v2037 = vpop.xlane.xlu0 %2036
        %v2038 = vsel %vm1731, %v1705, 0.0
        %2039 = vadd.xlane.f32.xlu0 %v2038
        %v2040 = vpop.xlane.xlu0 %2039
        %v2041 = vsel %vm1731, %v1706, 0.0
        %2042 = vadd.xlane.f32.xlu0 %v2041
        %v2043 = vpop.xlane.xlu0 %2042
        %v2044 = vsel %vm1731, %v1707, 0.0
        %2045 = vadd.xlane.f32.xlu0 %v2044
        %v2046 = vpop.xlane.xlu0 %2045
        %v2047 = vsel %vm1731, %v1708, 0.0
        %2048 = vadd.xlane.f32.xlu0 %v2047
        %v2049 = vpop.xlane.xlu0 %2048
        %v2050 = vsel %vm1731, %v1709, 0.0
        %2051 = vadd.xlane.f32.xlu0 %v2050
        %v2052 = vpop.xlane.xlu0 %2051
        %v2053 = vsel %vm1731, %v1710, 0.0
        %2054 = vadd.xlane.f32.xlu0 %v2053
        %v2055 = vpop.xlane.xlu0 %2054
        %v2056 = vsel %vm1731, %v1711, 0.0
        %2057 = vadd.xlane.f32.xlu0 %v2056
        %v2058 = vpop.xlane.xlu0 %2057
        %v2059 = vsel %vm1731, %v1712, 0.0
        %2060 = vadd.xlane.f32.xlu0 %v2059
        %v2061 = vpop.xlane.xlu0 %2060
        %v2062 = vsel %vm1731, %v1713, 0.0
        %2063 = vadd.xlane.f32.xlu0 %v2062
        %v2064 = vpop.xlane.xlu0 %2063
        %v2065 = vsel %vm1731, %v1714, 0.0
        %2066 = vadd.xlane.f32.xlu0 %v2065
        %v2067 = vpop.xlane.xlu0 %2066
        %v2068 = vsel %vm1731, %v1715, 0.0
        %2069 = vadd.xlane.f32.xlu0 %v2068
        %v2070 = vpop.xlane.xlu0 %2069
        %v2071 = vsel %vm1731, %v1716, 0.0
        %2072 = vadd.xlane.f32.xlu0 %v2071
        %v2073 = vpop.xlane.xlu0 %2072
        %v2074 = vsel %vm1731, %v1717, 0.0
        %2075 = vadd.xlane.f32.xlu0 %v2074
        %v2076 = vpop.xlane.xlu0 %2075
        %v2077 = vsel %vm1731, %v1718, 0.0
        %2078 = vadd.xlane.f32.xlu0 %v2077
        %v2079 = vpop.xlane.xlu0 %2078
        %v2080 = vsel %vm1731, %v1719, 0.0
        %2081 = vadd.xlane.f32.xlu0 %v2080
        %v2082 = vpop.xlane.xlu0 %2081
        %v2083 = vsel %vm1731, %v1720, 0.0
        %2084 = vadd.xlane.f32.xlu0 %v2083
        %v2085 = vpop.xlane.xlu0 %2084
        %v2086 = vsel %vm1731, %v1721, 0.0
        %2087 = vadd.xlane.f32.xlu0 %v2086
        %v2088 = vpop.xlane.xlu0 %2087
        %v2089 = vsel %vm1731, %v1722, 0.0
        %2090 = vadd.xlane.f32.xlu0 %v2089
        %v2091 = vpop.xlane.xlu0 %2090
        %v2092 = vsel %vm1731, %v1723, 0.0
        %2093 = vadd.xlane.f32.xlu0 %v2092
        %v2094 = vpop.xlane.xlu0 %2093
        %v2095 = vsel %vm1731, %v1724, 0.0
        %2096 = vadd.xlane.f32.xlu0 %v2095
        %v2097 = vpop.xlane.xlu0 %2096
        %v2098 = vsel %vm1731, %v1725, 0.0
        %2099 = vadd.xlane.f32.xlu0 %v2098
        %v2100 = vpop.xlane.xlu0 %2099
        %v2101 = vsel %vm1731, %v1726, 0.0
        %2102 = vadd.xlane.f32.xlu0 %v2101
        %v2103 = vpop.xlane.xlu0 %2102
        %v2104 = vsel %vm1731, %v1727, 0.0
        %2105 = vadd.xlane.f32.xlu0 %v2104
        %v2106 = vpop.xlane.xlu0 %2105
        %v2107 = vsel %vm1731, %v1728, 0.0
        %2108 = vadd.xlane.f32.xlu0 %v2107
        %v2109 = vpop.xlane.xlu0 %2108
        %v2110 = vsel %vm1731, %v1729, 0.0
        %2111 = vadd.xlane.f32.xlu0 %v2110
        %v2112 = vpop.xlane.xlu0 %2111
        %v2113 = vsel %vm1731, %v1730, 0.0
        %2114 = vadd.xlane.f32.xlu0 %v2113
        %v2115 = vpop.xlane.xlu0 %2114
        %v2116 = vld [vmem:[%s241] sm:$0xff]
        %vm2117 = vcmp.ne.s32.totalorder %v2116, 0
        %v2246 = vlaneseq
        %v2247 = vand.u32 %v2246, 127
        %v2248 = vlaneseq
        %v2249 = vshrl.u32 %v2248, 7
        %v2250 = vsub.s32 %v2247, %v2249
        %v2251 = vrot.slane %v1734, %v2250
        %v2252 = vadd.s32 %v2247, 4294967288
        %v2253 = vlaneseq
        %v2254 = vshrl.u32 %v2253, 7
        %v2255 = vsub.s32 %v2252, %v2254
        %v2256 = vrot.slane %v1737, %v2255
        %vm2257 = vcmask 130112
        %v2258 = vsel %vm2257, %v2256, %v2251
        %v2259 = vadd.s32 %v2247, 4294967280
        %v2260 = vlaneseq
        %v2261 = vshrl.u32 %v2260, 7
        %v2262 = vsub.s32 %v2259, %v2261
        %v2263 = vrot.slane %v1740, %v2262
        %vm2264 = vcmask 195712
        %v2265 = vsel %vm2264, %v2263, %v2258
        %v2266 = vadd.s32 %v2247, 4294967272
        %v2267 = vlaneseq
        %v2268 = vshrl.u32 %v2267, 7
        %v2269 = vsub.s32 %v2266, %v2268
        %v2270 = vrot.slane %v1743, %v2269
        %vm2271 = vcmask 261312
        %v2272 = vsel %vm2271, %v2270, %v2265
        %v2273 = vadd.s32 %v2247, 4294967264
        %v2274 = vlaneseq
        %v2275 = vshrl.u32 %v2274, 7
        %v2276 = vsub.s32 %v2273, %v2275
        %v2277 = vrot.slane %v1746, %v2276
        %vm2278 = vcmask 326912
        %v2279 = vsel %vm2278, %v2277, %v2272
        %v2280 = vadd.s32 %v2247, 4294967256
        %v2281 = vlaneseq
        %v2282 = vshrl.u32 %v2281, 7
        %v2283 = vsub.s32 %v2280, %v2282
        %v2284 = vrot.slane %v1749, %v2283
        %vm2285 = vcmask 392512
        %v2286 = vsel %vm2285, %v2284, %v2279
        %v2287 = vadd.s32 %v2247, 4294967248
        %v2288 = vlaneseq
        %v2289 = vshrl.u32 %v2288, 7
        %v2290 = vsub.s32 %v2287, %v2289
        %v2291 = vrot.slane %v1752, %v2290
        %vm2292 = vcmask 458112
        %v2293 = vsel %vm2292, %v2291, %v2286
        %v2294 = vadd.s32 %v2247, 4294967240
        %v2295 = vlaneseq
        %v2296 = vshrl.u32 %v2295, 7
        %v2297 = vsub.s32 %v2294, %v2296
        %v2298 = vrot.slane %v1755, %v2297
        %vm2299 = vcmask 523712
        %v2300 = vsel %vm2299, %v2298, %v2293
        %v2301 = vadd.s32 %v2247, 4294967232
        %v2302 = vlaneseq
        %v2303 = vshrl.u32 %v2302, 7
        %v2304 = vsub.s32 %v2301, %v2303
        %v2305 = vrot.slane %v1758, %v2304
        %vm2306 = vcmask 589312
        %v2307 = vsel %vm2306, %v2305, %v2300
        %v2308 = vadd.s32 %v2247, 4294967224
        %v2309 = vlaneseq
        %v2310 = vshrl.u32 %v2309, 7
        %v2311 = vsub.s32 %v2308, %v2310
        %v2312 = vrot.slane %v1761, %v2311
        %vm2313 = vcmask 654912
        %v2314 = vsel %vm2313, %v2312, %v2307
        %v2315 = vadd.s32 %v2247, 4294967216
        %v2316 = vlaneseq
        %v2317 = vshrl.u32 %v2316, 7
        %v2318 = vsub.s32 %v2315, %v2317
        %v2319 = vrot.slane %v1764, %v2318
        %vm2320 = vcmask 720512
        %v2321 = vsel %vm2320, %v2319, %v2314
        %v2322 = vadd.s32 %v2247, 4294967208
        %v2323 = vlaneseq
        %v2324 = vshrl.u32 %v2323, 7
        %v2325 = vsub.s32 %v2322, %v2324
        %v2326 = vrot.slane %v1767, %v2325
        %vm2327 = vcmask 786112
        %v2328 = vsel %vm2327, %v2326, %v2321
        %v2329 = vadd.s32 %v2247, 4294967200
        %v2330 = vlaneseq
        %v2331 = vshrl.u32 %v2330, 7
        %v2332 = vsub.s32 %v2329, %v2331
        %v2333 = vrot.slane %v1770, %v2332
        %vm2334 = vcmask 851712
        %v2335 = vsel %vm2334, %v2333, %v2328
        %v2336 = vadd.s32 %v2247, 4294967192
        %v2337 = vlaneseq
        %v2338 = vshrl.u32 %v2337, 7
        %v2339 = vsub.s32 %v2336, %v2338
        %v2340 = vrot.slane %v1773, %v2339
        %vm2341 = vcmask 917312
        %v2342 = vsel %vm2341, %v2340, %v2335
        %v2343 = vadd.s32 %v2247, 4294967184
        %v2344 = vlaneseq
        %v2345 = vshrl.u32 %v2344, 7
        %v2346 = vsub.s32 %v2343, %v2345
        %v2347 = vrot.slane %v1776, %v2346
        %vm2348 = vcmask 982912
        %v2349 = vsel %vm2348, %v2347, %v2342
        %v2350 = vadd.s32 %v2247, 4294967176
        %v2351 = vlaneseq
        %v2352 = vshrl.u32 %v2351, 7
        %v2353 = vsub.s32 %v2350, %v2352
        %v2354 = vrot.slane %v1779, %v2353
        %vm2355 = vcmask 1048512
        %v2356 = vsel %vm2355, %v2354, %v2349
        %v2357 = vlaneseq
        %v2358 = vshrl.u32 %v2357, 7
        %v2359 = vsub.s32 %v2247, %v2358
        %v2360 = vrot.slane %v1782, %v2359
        %v2361 = vlaneseq
        %v2362 = vshrl.u32 %v2361, 7
        %v2363 = vsub.s32 %v2252, %v2362
        %v2364 = vrot.slane %v1785, %v2363
        %v2365 = vsel %vm2257, %v2364, %v2360
        %v2366 = vlaneseq
        %v2367 = vshrl.u32 %v2366, 7
        %v2368 = vsub.s32 %v2259, %v2367
        %v2369 = vrot.slane %v1788, %v2368
        %v2370 = vsel %vm2264, %v2369, %v2365
        %v2371 = vlaneseq
        %v2372 = vshrl.u32 %v2371, 7
        %v2373 = vsub.s32 %v2266, %v2372
        %v2374 = vrot.slane %v1791, %v2373
        %v2375 = vsel %vm2271, %v2374, %v2370
        %v2376 = vlaneseq
        %v2377 = vshrl.u32 %v2376, 7
        %v2378 = vsub.s32 %v2273, %v2377
        %v2379 = vrot.slane %v1794, %v2378
        %v2380 = vsel %vm2278, %v2379, %v2375
        %v2381 = vlaneseq
        %v2382 = vshrl.u32 %v2381, 7
        %v2383 = vsub.s32 %v2280, %v2382
        %v2384 = vrot.slane %v1797, %v2383
        %v2385 = vsel %vm2285, %v2384, %v2380
        %v2386 = vlaneseq
        %v2387 = vshrl.u32 %v2386, 7
        %v2388 = vsub.s32 %v2287, %v2387
        %v2389 = vrot.slane %v1800, %v2388
        %v2390 = vsel %vm2292, %v2389, %v2385
        %v2391 = vlaneseq
        %v2392 = vshrl.u32 %v2391, 7
        %v2393 = vsub.s32 %v2294, %v2392
        %v2394 = vrot.slane %v1803, %v2393
        %v2395 = vsel %vm2299, %v2394, %v2390
        %v2396 = vlaneseq
        %v2397 = vshrl.u32 %v2396, 7
        %v2398 = vsub.s32 %v2301, %v2397
        %v2399 = vrot.slane %v1806, %v2398
        %v2400 = vsel %vm2306, %v2399, %v2395
        %v2401 = vlaneseq
        %v2402 = vshrl.u32 %v2401, 7
        %v2403 = vsub.s32 %v2308, %v2402
        %v2404 = vrot.slane %v1809, %v2403
        %v2405 = vsel %vm2313, %v2404, %v2400
        %v2406 = vlaneseq
        %v2407 = vshrl.u32 %v2406, 7
        %v2408 = vsub.s32 %v2315, %v2407
        %v2409 = vrot.slane %v1812, %v2408
        %v2410 = vsel %vm2320, %v2409, %v2405
        %v2411 = vlaneseq
        %v2412 = vshrl.u32 %v2411, 7
        %v2413 = vsub.s32 %v2322, %v2412
        %v2414 = vrot.slane %v1815, %v2413
        %v2415 = vsel %vm2327, %v2414, %v2410
        %v2416 = vlaneseq
        %v2417 = vshrl.u32 %v2416, 7
        %v2418 = vsub.s32 %v2329, %v2417
        %v2419 = vrot.slane %v1818, %v2418
        %v2420 = vsel %vm2334, %v2419, %v2415
        %v2421 = vlaneseq
        %v2422 = vshrl.u32 %v2421, 7
        %v2423 = vsub.s32 %v2336, %v2422
        %v2424 = vrot.slane %v1821, %v2423
        %v2425 = vsel %vm2341, %v2424, %v2420
        %v2426 = vlaneseq
        %v2427 = vshrl.u32 %v2426, 7
        %v2428 = vsub.s32 %v2343, %v2427
        %v2429 = vrot.slane %v1824, %v2428
        %v2430 = vsel %vm2348, %v2429, %v2425
        %v2431 = vlaneseq
        %v2432 = vshrl.u32 %v2431, 7
        %v2433 = vsub.s32 %v2350, %v2432
        %v2434 = vrot.slane %v1827, %v2433
        %v2435 = vsel %vm2355, %v2434, %v2430
        %v2436 = vlaneseq
        %v2437 = vshrl.u32 %v2436, 7
        %v2438 = vsub.s32 %v2247, %v2437
        %v2439 = vrot.slane %v1830, %v2438
        %v2440 = vlaneseq
        %v2441 = vshrl.u32 %v2440, 7
        %v2442 = vsub.s32 %v2252, %v2441
        %v2443 = vrot.slane %v1833, %v2442
        %v2444 = vsel %vm2257, %v2443, %v2439
        %v2445 = vlaneseq
        %v2446 = vshrl.u32 %v2445, 7
        %v2447 = vsub.s32 %v2259, %v2446
        %v2448 = vrot.slane %v1836, %v2447
        %v2449 = vsel %vm2264, %v2448, %v2444
        %v2450 = vlaneseq
        %v2451 = vshrl.u32 %v2450, 7
        %v2452 = vsub.s32 %v2266, %v2451
        %v2453 = vrot.slane %v1839, %v2452
        %v2454 = vsel %vm2271, %v2453, %v2449
        %v2455 = vlaneseq
        %v2456 = vshrl.u32 %v2455, 7
        %v2457 = vsub.s32 %v2273, %v2456
        %v2458 = vrot.slane %v1842, %v2457
        %v2459 = vsel %vm2278, %v2458, %v2454
        %v2460 = vlaneseq
        %v2461 = vshrl.u32 %v2460, 7
        %v2462 = vsub.s32 %v2280, %v2461
        %v2463 = vrot.slane %v1845, %v2462
        %v2464 = vsel %vm2285, %v2463, %v2459
        %v2465 = vlaneseq
        %v2466 = vshrl.u32 %v2465, 7
        %v2467 = vsub.s32 %v2287, %v2466
        %v2468 = vrot.slane %v1848, %v2467
        %v2469 = vsel %vm2292, %v2468, %v2464
        %v2470 = vlaneseq
        %v2471 = vshrl.u32 %v2470, 7
        %v2472 = vsub.s32 %v2294, %v2471
        %v2473 = vrot.slane %v1851, %v2472
        %v2474 = vsel %vm2299, %v2473, %v2469
        %v2475 = vlaneseq
        %v2476 = vshrl.u32 %v2475, 7
        %v2477 = vsub.s32 %v2301, %v2476
        %v2478 = vrot.slane %v1854, %v2477
        %v2479 = vsel %vm2306, %v2478, %v2474
        %v2480 = vlaneseq
        %v2481 = vshrl.u32 %v2480, 7
        %v2482 = vsub.s32 %v2308, %v2481
        %v2483 = vrot.slane %v1857, %v2482
        %v2484 = vsel %vm2313, %v2483, %v2479
        %v2485 = vlaneseq
        %v2486 = vshrl.u32 %v2485, 7
        %v2487 = vsub.s32 %v2315, %v2486
        %v2488 = vrot.slane %v1860, %v2487
        %v2489 = vsel %vm2320, %v2488, %v2484
        %v2490 = vlaneseq
        %v2491 = vshrl.u32 %v2490, 7
        %v2492 = vsub.s32 %v2322, %v2491
        %v2493 = vrot.slane %v1863, %v2492
        %v2494 = vsel %vm2327, %v2493, %v2489
        %v2495 = vlaneseq
        %v2496 = vshrl.u32 %v2495, 7
        %v2497 = vsub.s32 %v2329, %v2496
        %v2498 = vrot.slane %v1866, %v2497
        %v2499 = vsel %vm2334, %v2498, %v2494
        %v2500 = vlaneseq
        %v2501 = vshrl.u32 %v2500, 7
        %v2502 = vsub.s32 %v2336, %v2501
        %v2503 = vrot.slane %v1869, %v2502
        %v2504 = vsel %vm2341, %v2503, %v2499
        %v2505 = vlaneseq
        %v2506 = vshrl.u32 %v2505, 7
        %v2507 = vsub.s32 %v2343, %v2506
        %v2508 = vrot.slane %v1872, %v2507
        %v2509 = vsel %vm2348, %v2508, %v2504
        %v2510 = vlaneseq
        %v2511 = vshrl.u32 %v2510, 7
        %v2512 = vsub.s32 %v2350, %v2511
        %v2513 = vrot.slane %v1875, %v2512
        %v2514 = vsel %vm2355, %v2513, %v2509
        %v2515 = vlaneseq
        %v2516 = vshrl.u32 %v2515, 7
        %v2517 = vsub.s32 %v2247, %v2516
        %v2518 = vrot.slane %v1878, %v2517
        %v2519 = vlaneseq
        %v2520 = vshrl.u32 %v2519, 7
        %v2521 = vsub.s32 %v2252, %v2520
        %v2522 = vrot.slane %v1881, %v2521
        %v2523 = vsel %vm2257, %v2522, %v2518
        %v2524 = vlaneseq
        %v2525 = vshrl.u32 %v2524, 7
        %v2526 = vsub.s32 %v2259, %v2525
        %v2527 = vrot.slane %v1884, %v2526
        %v2528 = vsel %vm2264, %v2527, %v2523
        %v2529 = vlaneseq
        %v2530 = vshrl.u32 %v2529, 7
        %v2531 = vsub.s32 %v2266, %v2530
        %v2532 = vrot.slane %v1887, %v2531
        %v2533 = vsel %vm2271, %v2532, %v2528
        %v2534 = vlaneseq
        %v2535 = vshrl.u32 %v2534, 7
        %v2536 = vsub.s32 %v2273, %v2535
        %v2537 = vrot.slane %v1890, %v2536
        %v2538 = vsel %vm2278, %v2537, %v2533
        %v2539 = vlaneseq
        %v2540 = vshrl.u32 %v2539, 7
        %v2541 = vsub.s32 %v2280, %v2540
        %v2542 = vrot.slane %v1893, %v2541
        %v2543 = vsel %vm2285, %v2542, %v2538
        %v2544 = vlaneseq
        %v2545 = vshrl.u32 %v2544, 7
        %v2546 = vsub.s32 %v2287, %v2545
        %v2547 = vrot.slane %v1896, %v2546
        %v2548 = vsel %vm2292, %v2547, %v2543
        %v2549 = vlaneseq
        %v2550 = vshrl.u32 %v2549, 7
        %v2551 = vsub.s32 %v2294, %v2550
        %v2552 = vrot.slane %v1899, %v2551
        %v2553 = vsel %vm2299, %v2552, %v2548
        %v2554 = vlaneseq
        %v2555 = vshrl.u32 %v2554, 7
        %v2556 = vsub.s32 %v2301, %v2555
        %v2557 = vrot.slane %v1902, %v2556
        %v2558 = vsel %vm2306, %v2557, %v2553
        %v2559 = vlaneseq
        %v2560 = vshrl.u32 %v2559, 7
        %v2561 = vsub.s32 %v2308, %v2560
        %v2562 = vrot.slane %v1905, %v2561
        %v2563 = vsel %vm2313, %v2562, %v2558
        %v2564 = vlaneseq
        %v2565 = vshrl.u32 %v2564, 7
        %v2566 = vsub.s32 %v2315, %v2565
        %v2567 = vrot.slane %v1908, %v2566
        %v2568 = vsel %vm2320, %v2567, %v2563
        %v2569 = vlaneseq
        %v2570 = vshrl.u32 %v2569, 7
        %v2571 = vsub.s32 %v2322, %v2570
        %v2572 = vrot.slane %v1911, %v2571
        %v2573 = vsel %vm2327, %v2572, %v2568
        %v2574 = vlaneseq
        %v2575 = vshrl.u32 %v2574, 7
        %v2576 = vsub.s32 %v2329, %v2575
        %v2577 = vrot.slane %v1914, %v2576
        %v2578 = vsel %vm2334, %v2577, %v2573
        %v2579 = vlaneseq
        %v2580 = vshrl.u32 %v2579, 7
        %v2581 = vsub.s32 %v2336, %v2580
        %v2582 = vrot.slane %v1917, %v2581
        %v2583 = vsel %vm2341, %v2582, %v2578
        %v2584 = vlaneseq
        %v2585 = vshrl.u32 %v2584, 7
        %v2586 = vsub.s32 %v2343, %v2585
        %v2587 = vrot.slane %v1920, %v2586
        %v2588 = vsel %vm2348, %v2587, %v2583
        %v2589 = vlaneseq
        %v2590 = vshrl.u32 %v2589, 7
        %v2591 = vsub.s32 %v2350, %v2590
        %v2592 = vrot.slane %v1923, %v2591
        %v2593 = vsel %vm2355, %v2592, %v2588
        %v2594 = vlaneseq
        %v2595 = vshrl.u32 %v2594, 7
        %v2596 = vsub.s32 %v2247, %v2595
        %v2597 = vrot.slane %v1926, %v2596
        %v2598 = vlaneseq
        %v2599 = vshrl.u32 %v2598, 7
        %v2600 = vsub.s32 %v2252, %v2599
        %v2601 = vrot.slane %v1929, %v2600
        %v2602 = vsel %vm2257, %v2601, %v2597
        %v2603 = vlaneseq
        %v2604 = vshrl.u32 %v2603, 7
        %v2605 = vsub.s32 %v2259, %v2604
        %v2606 = vrot.slane %v1932, %v2605
        %v2607 = vsel %vm2264, %v2606, %v2602
        %v2608 = vlaneseq
        %v2609 = vshrl.u32 %v2608, 7
        %v2610 = vsub.s32 %v2266, %v2609
        %v2611 = vrot.slane %v1935, %v2610
        %v2612 = vsel %vm2271, %v2611, %v2607
        %v2613 = vlaneseq
        %v2614 = vshrl.u32 %v2613, 7
        %v2615 = vsub.s32 %v2273, %v2614
        %v2616 = vrot.slane %v1938, %v2615
        %v2617 = vsel %vm2278, %v2616, %v2612
        %v2618 = vlaneseq
        %v2619 = vshrl.u32 %v2618, 7
        %v2620 = vsub.s32 %v2280, %v2619
        %v2621 = vrot.slane %v1941, %v2620
        %v2622 = vsel %vm2285, %v2621, %v2617
        %v2623 = vlaneseq
        %v2624 = vshrl.u32 %v2623, 7
        %v2625 = vsub.s32 %v2287, %v2624
        %v2626 = vrot.slane %v1944, %v2625
        %v2627 = vsel %vm2292, %v2626, %v2622
        %v2628 = vlaneseq
        %v2629 = vshrl.u32 %v2628, 7
        %v2630 = vsub.s32 %v2294, %v2629
        %v2631 = vrot.slane %v1947, %v2630
        %v2632 = vsel %vm2299, %v2631, %v2627
        %v2633 = vlaneseq
        %v2634 = vshrl.u32 %v2633, 7
        %v2635 = vsub.s32 %v2301, %v2634
        %v2636 = vrot.slane %v1950, %v2635
        %v2637 = vsel %vm2306, %v2636, %v2632
        %v2638 = vlaneseq
        %v2639 = vshrl.u32 %v2638, 7
        %v2640 = vsub.s32 %v2308, %v2639
        %v2641 = vrot.slane %v1953, %v2640
        %v2642 = vsel %vm2313, %v2641, %v2637
        %v2643 = vlaneseq
        %v2644 = vshrl.u32 %v2643, 7
        %v2645 = vsub.s32 %v2315, %v2644
        %v2646 = vrot.slane %v1956, %v2645
        %v2647 = vsel %vm2320, %v2646, %v2642
        %v2648 = vlaneseq
        %v2649 = vshrl.u32 %v2648, 7
        %v2650 = vsub.s32 %v2322, %v2649
        %v2651 = vrot.slane %v1959, %v2650
        %v2652 = vsel %vm2327, %v2651, %v2647
        %v2653 = vlaneseq
        %v2654 = vshrl.u32 %v2653, 7
        %v2655 = vsub.s32 %v2329, %v2654
        %v2656 = vrot.slane %v1962, %v2655
        %v2657 = vsel %vm2334, %v2656, %v2652
        %v2658 = vlaneseq
        %v2659 = vshrl.u32 %v2658, 7
        %v2660 = vsub.s32 %v2336, %v2659
        %v2661 = vrot.slane %v1965, %v2660
        %v2662 = vsel %vm2341, %v2661, %v2657
        %v2663 = vlaneseq
        %v2664 = vshrl.u32 %v2663, 7
        %v2665 = vsub.s32 %v2343, %v2664
        %v2666 = vrot.slane %v1968, %v2665
        %v2667 = vsel %vm2348, %v2666, %v2662
        %v2668 = vlaneseq
        %v2669 = vshrl.u32 %v2668, 7
        %v2670 = vsub.s32 %v2350, %v2669
        %v2671 = vrot.slane %v1971, %v2670
        %v2672 = vsel %vm2355, %v2671, %v2667
        %v2673 = vlaneseq
        %v2674 = vshrl.u32 %v2673, 7
        %v2675 = vsub.s32 %v2247, %v2674
        %v2676 = vrot.slane %v1974, %v2675
        %v2677 = vlaneseq
        %v2678 = vshrl.u32 %v2677, 7
        %v2679 = vsub.s32 %v2252, %v2678
        %v2680 = vrot.slane %v1977, %v2679
        %v2681 = vsel %vm2257, %v2680, %v2676
        %v2682 = vlaneseq
        %v2683 = vshrl.u32 %v2682, 7
        %v2684 = vsub.s32 %v2259, %v2683
        %v2685 = vrot.slane %v1980, %v2684
        %v2686 = vsel %vm2264, %v2685, %v2681
        %v2687 = vlaneseq
        %v2688 = vshrl.u32 %v2687, 7
        %v2689 = vsub.s32 %v2266, %v2688
        %v2690 = vrot.slane %v1983, %v2689
        %v2691 = vsel %vm2271, %v2690, %v2686
        %v2692 = vlaneseq
        %v2693 = vshrl.u32 %v2692, 7
        %v2694 = vsub.s32 %v2273, %v2693
        %v2695 = vrot.slane %v1986, %v2694
        %v2696 = vsel %vm2278, %v2695, %v2691
        %v2697 = vlaneseq
        %v2698 = vshrl.u32 %v2697, 7
        %v2699 = vsub.s32 %v2280, %v2698
        %v2700 = vrot.slane %v1989, %v2699
        %v2701 = vsel %vm2285, %v2700, %v2696
        %v2702 = vlaneseq
        %v2703 = vshrl.u32 %v2702, 7
        %v2704 = vsub.s32 %v2287, %v2703
        %v2705 = vrot.slane %v1992, %v2704
        %v2706 = vsel %vm2292, %v2705, %v2701
        %v2707 = vlaneseq
        %v2708 = vshrl.u32 %v2707, 7
        %v2709 = vsub.s32 %v2294, %v2708
        %v2710 = vrot.slane %v1995, %v2709
        %v2711 = vsel %vm2299, %v2710, %v2706
        %v2712 = vlaneseq
        %v2713 = vshrl.u32 %v2712, 7
        %v2714 = vsub.s32 %v2301, %v2713
        %v2715 = vrot.slane %v1998, %v2714
        %v2716 = vsel %vm2306, %v2715, %v2711
        %v2717 = vlaneseq
        %v2718 = vshrl.u32 %v2717, 7
        %v2719 = vsub.s32 %v2308, %v2718
        %v2720 = vrot.slane %v2001, %v2719
        %v2721 = vsel %vm2313, %v2720, %v2716
        %v2722 = vlaneseq
        %v2723 = vshrl.u32 %v2722, 7
        %v2724 = vsub.s32 %v2315, %v2723
        %v2725 = vrot.slane %v2004, %v2724
        %v2726 = vsel %vm2320, %v2725, %v2721
        %v2727 = vlaneseq
        %v2728 = vshrl.u32 %v2727, 7
        %v2729 = vsub.s32 %v2322, %v2728
        %v2730 = vrot.slane %v2007, %v2729
        %v2731 = vsel %vm2327, %v2730, %v2726
        %v2732 = vlaneseq
        %v2733 = vshrl.u32 %v2732, 7
        %v2734 = vsub.s32 %v2329, %v2733
        %v2735 = vrot.slane %v2010, %v2734
        %v2736 = vsel %vm2334, %v2735, %v2731
        %v2737 = vlaneseq
        %v2738 = vshrl.u32 %v2737, 7
        %v2739 = vsub.s32 %v2336, %v2738
        %v2740 = vrot.slane %v2013, %v2739
        %v2741 = vsel %vm2341, %v2740, %v2736
        %v2742 = vlaneseq
        %v2743 = vshrl.u32 %v2742, 7
        %v2744 = vsub.s32 %v2343, %v2743
        %v2745 = vrot.slane %v2016, %v2744
        %v2746 = vsel %vm2348, %v2745, %v2741
        %v2747 = vlaneseq
        %v2748 = vshrl.u32 %v2747, 7
        %v2749 = vsub.s32 %v2350, %v2748
        %v2750 = vrot.slane %v2019, %v2749
        %v2751 = vsel %vm2355, %v2750, %v2746
        %v2752 = vlaneseq
        %v2753 = vshrl.u32 %v2752, 7
        %v2754 = vsub.s32 %v2247, %v2753
        %v2755 = vrot.slane %v2022, %v2754
        %v2756 = vlaneseq
        %v2757 = vshrl.u32 %v2756, 7
        %v2758 = vsub.s32 %v2252, %v2757
        %v2759 = vrot.slane %v2025, %v2758
        %v2760 = vsel %vm2257, %v2759, %v2755
        %v2761 = vlaneseq
        %v2762 = vshrl.u32 %v2761, 7
        %v2763 = vsub.s32 %v2259, %v2762
        %v2764 = vrot.slane %v2028, %v2763
        %v2765 = vsel %vm2264, %v2764, %v2760
        %v2766 = vlaneseq
        %v2767 = vshrl.u32 %v2766, 7
        %v2768 = vsub.s32 %v2266, %v2767
        %v2769 = vrot.slane %v2031, %v2768
        %v2770 = vsel %vm2271, %v2769, %v2765
        %v2771 = vlaneseq
        %v2772 = vshrl.u32 %v2771, 7
        %v2773 = vsub.s32 %v2273, %v2772
        %v2774 = vrot.slane %v2034, %v2773
        %v2775 = vsel %vm2278, %v2774, %v2770
        %v2776 = vlaneseq
        %v2777 = vshrl.u32 %v2776, 7
        %v2778 = vsub.s32 %v2280, %v2777
        %v2779 = vrot.slane %v2037, %v2778
        %v2780 = vsel %vm2285, %v2779, %v2775
        %v2781 = vlaneseq
        %v2782 = vshrl.u32 %v2781, 7
        %v2783 = vsub.s32 %v2287, %v2782
        %v2784 = vrot.slane %v2040, %v2783
        %v2785 = vsel %vm2292, %v2784, %v2780
        %v2786 = vlaneseq
        %v2787 = vshrl.u32 %v2786, 7
        %v2788 = vsub.s32 %v2294, %v2787
        %v2789 = vrot.slane %v2043, %v2788
        %v2790 = vsel %vm2299, %v2789, %v2785
        %v2791 = vlaneseq
        %v2792 = vshrl.u32 %v2791, 7
        %v2793 = vsub.s32 %v2301, %v2792
        %v2794 = vrot.slane %v2046, %v2793
        %v2795 = vsel %vm2306, %v2794, %v2790
        %v2796 = vlaneseq
        %v2797 = vshrl.u32 %v2796, 7
        %v2798 = vsub.s32 %v2308, %v2797
        %v2799 = vrot.slane %v2049, %v2798
        %v2800 = vsel %vm2313, %v2799, %v2795
        %v2801 = vlaneseq
        %v2802 = vshrl.u32 %v2801, 7
        %v2803 = vsub.s32 %v2315, %v2802
        %v2804 = vrot.slane %v2052, %v2803
        %v2805 = vsel %vm2320, %v2804, %v2800
        %v2806 = vlaneseq
        %v2807 = vshrl.u32 %v2806, 7
        %v2808 = vsub.s32 %v2322, %v2807
        %v2809 = vrot.slane %v2055, %v2808
        %v2810 = vsel %vm2327, %v2809, %v2805
        %v2811 = vlaneseq
        %v2812 = vshrl.u32 %v2811, 7
        %v2813 = vsub.s32 %v2329, %v2812
        %v2814 = vrot.slane %v2058, %v2813
        %v2815 = vsel %vm2334, %v2814, %v2810
        %v2816 = vlaneseq
        %v2817 = vshrl.u32 %v2816, 7
        %v2818 = vsub.s32 %v2336, %v2817
        %v2819 = vrot.slane %v2061, %v2818
        %v2820 = vsel %vm2341, %v2819, %v2815
        %v2821 = vlaneseq
        %v2822 = vshrl.u32 %v2821, 7
        %v2823 = vsub.s32 %v2343, %v2822
        %v2824 = vrot.slane %v2064, %v2823
        %v2825 = vsel %vm2348, %v2824, %v2820
        %v2826 = vlaneseq
        %v2827 = vshrl.u32 %v2826, 7
        %v2828 = vsub.s32 %v2350, %v2827
        %v2829 = vrot.slane %v2067, %v2828
        %v2830 = vsel %vm2355, %v2829, %v2825
        %v2831 = vlaneseq
        %v2832 = vshrl.u32 %v2831, 7
        %v2833 = vsub.s32 %v2247, %v2832
        %v2834 = vrot.slane %v2070, %v2833
        %v2835 = vlaneseq
        %v2836 = vshrl.u32 %v2835, 7
        %v2837 = vsub.s32 %v2252, %v2836
        %v2838 = vrot.slane %v2073, %v2837
        %v2839 = vsel %vm2257, %v2838, %v2834
        %v2840 = vlaneseq
        %v2841 = vshrl.u32 %v2840, 7
        %v2842 = vsub.s32 %v2259, %v2841
        %v2843 = vrot.slane %v2076, %v2842
        %v2844 = vsel %vm2264, %v2843, %v2839
        %v2845 = vlaneseq
        %v2846 = vshrl.u32 %v2845, 7
        %v2847 = vsub.s32 %v2266, %v2846
        %v2848 = vrot.slane %v2079, %v2847
        %v2849 = vsel %vm2271, %v2848, %v2844
        %v2850 = vlaneseq
        %v2851 = vshrl.u32 %v2850, 7
        %v2852 = vsub.s32 %v2273, %v2851
        %v2853 = vrot.slane %v2082, %v2852
        %v2854 = vsel %vm2278, %v2853, %v2849
        %v2855 = vlaneseq
        %v2856 = vshrl.u32 %v2855, 7
        %v2857 = vsub.s32 %v2280, %v2856
        %v2858 = vrot.slane %v2085, %v2857
        %v2859 = vsel %vm2285, %v2858, %v2854
        %v2860 = vlaneseq
        %v2861 = vshrl.u32 %v2860, 7
        %v2862 = vsub.s32 %v2287, %v2861
        %v2863 = vrot.slane %v2088, %v2862
        %v2864 = vsel %vm2292, %v2863, %v2859
        %v2865 = vlaneseq
        %v2866 = vshrl.u32 %v2865, 7
        %v2867 = vsub.s32 %v2294, %v2866
        %v2868 = vrot.slane %v2091, %v2867
        %v2869 = vsel %vm2299, %v2868, %v2864
        %v2870 = vlaneseq
        %v2871 = vshrl.u32 %v2870, 7
        %v2872 = vsub.s32 %v2301, %v2871
        %v2873 = vrot.slane %v2094, %v2872
        %v2874 = vsel %vm2306, %v2873, %v2869
        %v2875 = vlaneseq
        %v2876 = vshrl.u32 %v2875, 7
        %v2877 = vsub.s32 %v2308, %v2876
        %v2878 = vrot.slane %v2097, %v2877
        %v2879 = vsel %vm2313, %v2878, %v2874
        %v2880 = vlaneseq
        %v2881 = vshrl.u32 %v2880, 7
        %v2882 = vsub.s32 %v2315, %v2881
        %v2883 = vrot.slane %v2100, %v2882
        %v2884 = vsel %vm2320, %v2883, %v2879
        %v2885 = vlaneseq
        %v2886 = vshrl.u32 %v2885, 7
        %v2887 = vsub.s32 %v2322, %v2886
        %v2888 = vrot.slane %v2103, %v2887
        %v2889 = vsel %vm2327, %v2888, %v2884
        %v2890 = vlaneseq
        %v2891 = vshrl.u32 %v2890, 7
        %v2892 = vsub.s32 %v2329, %v2891
        %v2893 = vrot.slane %v2106, %v2892
        %v2894 = vsel %vm2334, %v2893, %v2889
        %v2895 = vlaneseq
        %v2896 = vshrl.u32 %v2895, 7
        %v2897 = vsub.s32 %v2336, %v2896
        %v2898 = vrot.slane %v2109, %v2897
        %v2899 = vsel %vm2341, %v2898, %v2894
        %v2900 = vlaneseq
        %v2901 = vshrl.u32 %v2900, 7
        %v2902 = vsub.s32 %v2343, %v2901
        %v2903 = vrot.slane %v2112, %v2902
        %v2904 = vsel %vm2348, %v2903, %v2899
        %v2905 = vlaneseq
        %v2906 = vshrl.u32 %v2905, 7
        %v2907 = vsub.s32 %v2350, %v2906
        %v2908 = vrot.slane %v2115, %v2907
        %v2909 = vsel %vm2355, %v2908, %v2904
        %vm2910 = vcmask 1041409
        %v2911 = vsel %vm2910, %v2435, %v2356
        %vm2912 = vcmask 1042434
        %v2913 = vsel %vm2912, %v2514, %v2911
        %vm2914 = vcmask 1043459
        %v2915 = vsel %vm2914, %v2593, %v2913
        %vm2916 = vcmask 1044484
        %v2917 = vsel %vm2916, %v2672, %v2915
        %vm2918 = vcmask 1045509
        %v2919 = vsel %vm2918, %v2751, %v2917
        %vm2920 = vcmask 1046534
        %v2921 = vsel %vm2920, %v2830, %v2919
        %vm2922 = vcmask 1047559
        %v2923 = vsel %vm2922, %v2909, %v2921
        %v2925 = vsel %vm2117, -inf, %v2923
        %2926 = vmax.xlane.f32.xlu0 %v2925
        %v2927 = vpop.xlane.xlu0 %2926
        %v2928 = vsub.f32 %v2925, %v2927
        %v2929 = vmul.f32 %v2928, 1.442695
        %v2930 = vpow.pop %v2929
        %2931 = vadd.xlane.f32.xlu0 %v2930
        %v2932 = vpop.xlane.xlu0 %2931
        %v2933 = vrcp.pop %v2932
        %v2934 = vmul.f32 %v2932, %v2933
        %v2935 = vsub.f32 2.0, %v2934
        %v2936 = vmul.f32 %v2933, %v2935
        %v2937 = vmul.f32 %v2930, %v2936
        %2938 = vst [vmem:[%s231] sm:$0xff] %v2937
        %s2939 = sand.u32 %s142, 1
        %s2940 = scalar_lea.sflag [#allocation3], %s2939
        %s2941 = sand.u32 %s142, 1
        %s2942 = smul.addr %s2941, 8
        %s2943 = scalar_lea.vmem [#allocation2], %s2942
        // Predicated region
        $region41: #{tpu_custom_call.1} parent=39 // pred_check
          %p2944 = pneg %p152
        $region42: #{tpu_custom_call.1} parent=39 // pred_check_branch
          %2946 = sbr.rel (%p2944) target = $region44
        $region43: #{tpu_custom_call.1} parent=39 // pred_region
          %s2948 = ssub.s32 128, 128
          %2949 = vsyncadd %s2940, %s2948
          %s2950 = smul.addr %s19, 128
          %s2951 = scalar_lea.hbm %s5, %s2950
          %s2953 = sshll.u32 %s2943, 4
          %s2954 = int_to_ptr.vmem [resolvable:$true] %s2953
          %2956 = dma.vmem_to_hbm [thread:$0]  %s2954, 128, %s2951, %s2940
        $region44: #{tpu_custom_call.1} parent=39 // pred_fallthru
          _
      $region40: #{tpu_custom_call.1} parent=5 // pred_fallthru
        _
      %p2957 = scmp.le.s32.totalorder 2, %s14
      // Predicated region
      $region45: #{tpu_custom_call.1} parent=5 // pred_check
        %p2958 = pneg %p2957
      $region46: #{tpu_custom_call.1} parent=5 // pred_check_branch
        %2960 = sbr.rel (%p2958) target = $region48
      $region47: #{tpu_custom_call.1} parent=5 // pred_region
        %s2961 = ssub.s32 %s14, 2
        // Predicated region
        $region49: #{tpu_custom_call.1} parent=47 // pred_check
          %p2962 = pneg %p158
        $region50: #{tpu_custom_call.1} parent=47 // pred_check_branch
          %2964 = sbr.rel (%p2962) target = $region52
        $region51: #{tpu_custom_call.1} parent=47 // pred_region
          %s2965 = sand.u32 %s143, 1
          %s2966 = scalar_lea.sflag [#allocation3], %s2965
          %s2967 = sand.u32 %s143, 1
          %s2968 = smul.addr %s2967, 8
          %s2969 = scalar_lea.vmem [#allocation2], %s2968
          %2970 = dma.done %s2966, 128
        $region52: #{tpu_custom_call.1} parent=47 // pred_fallthru
          _
      $region48: #{tpu_custom_call.1} parent=5 // pred_fallthru
        _
    $region6: #{tpu_custom_call.1} parent=1 // loop_footer
      %s18 = sadd.s32 1, %s14
    $region7: #{tpu_custom_call.1} parent=1 // loop_footer_branch
      %13 = sbr.rel target = $region3
    $region8: #{tpu_custom_call.1} parent=1 // loop_exit
      _
    %2971 = vsyncpa [#allocation3], 1
    %s2972 = scalar_lea.sflag [#allocation3], 1
    %2973 = vsyncpa %s2972, 1

// kernel: tpu_custom_call.1
$region0: #{tpu_custom_call.1}
  #allocation0 [shape = 'u32[]', space=smem, size = 0x4, offset = 0x4, fixed_abs, tag = 'smem constant byte address 0x4 - core index']
  #allocation1 [shape = 'u32[144,128]{1,0:T(1,128)}', space=vmem, size = 0x12000, scoped, tag = 'internal scratch']
  %s0 = inlined_call_operand.vmem [shape: bf16[4096,64], index: 0, kind: input, shape index: {}]
  %s1 = inlined_call_operand.vmem [shape: s32[32,128], index: 1, kind: input, shape index: {}]
  %s2 = inlined_call_operand.vmem [shape: bf16[64,32], index: 2, kind: input, shape index: {}]
  %s3 = inlined_call_operand.vmem [shape: f32[1,32], index: 3, kind: input, shape index: {}]
  %s4 = inlined_call_operand.vmem [shape: f32[1,32], index: 4, kind: input, shape index: {}]
  %s5 = inlined_call_operand.hbm [shape: f32[32,128], index: 5, kind: output, shape index: {}]
  %s6 = sld [smem:[#allocation0]]
  $region53: #{tpu_custom_call.1} parent=0
    _
  %s8 = ssub.s32 1, %s6
  %s9 = scalar_select 0, %s8, %s6
  $region1: #{tpu_custom_call.1} parent=0
    #allocation2 [shape = 'u8[8192]{0}', space=vmem, size = 0x2000, scoped, tag = 'output window, operand 0']
    #allocation3 [shape = 's32[2]{0}', space=sflag, size = 0x8, scoped, tag = 'scoped memory for tpu_custom_call.1']
    %10 = vsyncpa [#allocation3], 0
    %s11 = scalar_lea.sflag [#allocation3], 1
    %12 = vsyncpa %s11, 0
    loop: start=0, step=1, limit=6
    $region2: #{tpu_custom_call.1} parent=1 // loop_pre_header
      _
    $region3: #{tpu_custom_call.1} parent=1 // loop_header
      %s14 = sphi 0, %s18
      %p15 = scmp.ge.s32.totalorder %s14, 6
      %s24 = sphi 0, %s26
      %s27 = sphi 0, %s24
      %s28 = sphi 0, %s27
      %s44 = sphi 0, %s28
      %s50 = sphi 0, %s52
      %s53 = sphi 0, %s50
      %s54 = sphi 0, %s53
      %s70 = sphi 0, %s54
      %s74 = sphi 0, %s74
      %s76 = sphi 0, %s74
      %s77 = sphi 0, %s76
      %s91 = sphi 0, %s77
      %s95 = sphi 0, %s95
      %s97 = sphi 0, %s95
      %s98 = sphi 0, %s97
      %s112 = sphi 0, %s98
      %s116 = sphi 0, %s116
      %s118 = sphi 0, %s116
      %s119 = sphi 0, %s118
      %s133 = sphi 0, %s119
      %s139 = sphi 0, %s141
      %s142 = sphi 0, %s139
      %s143 = sphi 0, %s142
      %s159 = sphi 0, %s143
    $region4: #{tpu_custom_call.1} parent=1 // loop_header_branch
      %17 = sbr.rel (%p15) target = $region8
    $region5: #{tpu_custom_call.1} parent=1 // loop_body
      %s19 = ssub.s32 %s14, 1
      %s20 = ssub.s32 %s14, 2
      %s21 = sadd.s32 %s14, 1
      %s22 = ssub.s32 %s14, %s21
      %p23 = scmp.eq.s32.totalorder %s22, 0
      %s25 = sadd.s32 %s24, 1
      %s26 = scalar_select %p23, %s24, %s25
      %p29 = pneg %p23
      %p30 = scmp.eq.s32.totalorder %s14, 3
      %p31 = por %p29, %p30
      %p32 = scmp.ne.s32.totalorder %s24, %s27
      %p33 = scmp.eq.s32.totalorder %s14, 0
      %p34 = por %p32, %p33
      %p35 = scmp.ne.s32.totalorder %s24, %s27
      %p36 = scmp.eq.s32.totalorder %s19, 3
      %p37 = por %p35, %p36
      %p38 = scmp.ne.s32.totalorder %s27, %s28
      %p39 = scmp.eq.s32.totalorder %s19, 0
      %p40 = por %p38, %p39
      %p41 = scmp.ne.s32.totalorder %s27, %s28
      %p42 = scmp.eq.s32.totalorder %s20, 3
      %p43 = por %p41, %p42
      %p45 = scmp.ne.s32.totalorder %s28, %s44
      %p46 = scmp.eq.s32.totalorder %s20, 0
      %p47 = por %p45, %p46
      %s48 = ssub.s32 %s14, %s21
      %p49 = scmp.eq.s32.totalorder %s48, 0
      %s51 = sadd.s32 %s50, 1
      %s52 = scalar_select %p49, %s50, %s51
      %p55 = pneg %p49
      %p56 = scmp.eq.s32.totalorder %s14, 3
      %p57 = por %p55, %p56
      %p58 = scmp.ne.s32.totalorder %s50, %s53
      %p59 = scmp.eq.s32.totalorder %s14, 0
      %p60 = por %p58, %p59
      %p61 = scmp.ne.s32.totalorder %s50, %s53
      %p62 = scmp.eq.s32.totalorder %s19, 3
      %p63 = por %p61, %p62
      %p64 = scmp.ne.s32.totalorder %s53, %s54
      %p65 = scmp.eq.s32.totalorder %s19, 0
      %p66 = por %p64, %p65
      %p67 = scmp.ne.s32.totalorder %s53, %s54
      %p68 = scmp.eq.s32.totalorder %s20, 3
      %p69 = por %p67, %p68
      %p71 = scmp.ne.s32.totalorder %s54, %s70
      %p72 = scmp.eq.s32.totalorder %s20, 0
      %p73 = por %p71, %p72
      %s75 = sadd.s32 %s74, 1
      %p78 = scmp.eq.s32.totalorder %s14, 3
      %p79 = scmp.ne.s32.totalorder %s74, %s76
      %p80 = scmp.eq.s32.totalorder %s14, 0
      %p81 = por %p79, %p80
      %p82 = scmp.ne.s32.totalorder %s74, %s76
      %p83 = scmp.eq.s32.totalorder %s19, 3
      %p84 = por %p82, %p83
      %p85 = scmp.ne.s32.totalorder %s76, %s77
      %p86 = scmp.eq.s32.totalorder %s19, 0
      %p87 = por %p85, %p86
      %p88 = scmp.ne.s32.totalorder %s76, %s77
      %p89 = scmp.eq.s32.totalorder %s20, 3
      %p90 = por %p88, %p89
      %p92 = scmp.ne.s32.totalorder %s77, %s91
      %p93 = scmp.eq.s32.totalorder %s20, 0
      %p94 = por %p92, %p93
      %s96 = sadd.s32 %s95, 1
      %p99 = scmp.eq.s32.totalorder %s14, 3
      %p100 = scmp.ne.s32.totalorder %s95, %s97
      %p101 = scmp.eq.s32.totalorder %s14, 0
      %p102 = por %p100, %p101
      %p103 = scmp.ne.s32.totalorder %s95, %s97
      %p104 = scmp.eq.s32.totalorder %s19, 3
      %p105 = por %p103, %p104
      %p106 = scmp.ne.s32.totalorder %s97, %s98
      %p107 = scmp.eq.s32.totalorder %s19, 0
      %p108 = por %p106, %p107
      %p109 = scmp.ne.s32.totalorder %s97, %s98
      %p110 = scmp.eq.s32.totalorder %s20, 3
      %p111 = por %p109, %p110
      %p113 = scmp.ne.s32.totalorder %s98, %s112
      %p114 = scmp.eq.s32.totalorder %s20, 0
      %p115 = por %p113, %p114
      %s117 = sadd.s32 %s116, 1
      %p120 = scmp.eq.s32.totalorder %s14, 3
      %p121 = scmp.ne.s32.totalorder %s116, %s118
      %p122 = scmp.eq.s32.totalorder %s14, 0
      %p123 = por %p121, %p122
      %p124 = scmp.ne.s32.totalorder %s116, %s118
      %p125 = scmp.eq.s32.totalorder %s19, 3
      %p126 = por %p124, %p125
      %p127 = scmp.ne.s32.totalorder %s118, %s119
      %p128 = scmp.eq.s32.totalorder %s19, 0
      %p129 = por %p127, %p128
      %p130 = scmp.ne.s32.totalorder %s118, %s119
      %p131 = scmp.eq.s32.totalorder %s20, 3
      %p132 = por %p130, %p131
      %p134 = scmp.ne.s32.totalorder %s119, %s133
      %p135 = scmp.eq.s32.totalorder %s20, 0
      %p136 = por %p134, %p135
      %s137 = ssub.s32 %s14, %s21
      %p138 = scmp.eq.s32.totalorder %s137, 0
      %s140 = sadd.s32 %s139, 1
      %s141 = scalar_select %p138, %s139, %s140
      %p144 = pneg %p138
      %p145 = scmp.eq.s32.totalorder %s14, 3
      %p146 = por %p144, %p145
      %p147 = scmp.ne.s32.totalorder %s139, %s142
      %p148 = scmp.eq.s32.totalorder %s14, 0
      %p149 = por %p147, %p148
      %p150 = scmp.ne.s32.totalorder %s139, %s142
      %p151 = scmp.eq.s32.totalorder %s19, 3
      %p152 = por %p150, %p151
      %p153 = scmp.ne.s32.totalorder %s142, %s143
      %p154 = scmp.eq.s32.totalorder %s19, 0
      %p155 = por %p153, %p154
      %p156 = scmp.ne.s32.totalorder %s142, %s143
      %p157 = scmp.eq.s32.totalorder %s20, 3
      %p158 = por %p156, %p157
      %p160 = scmp.ne.s32.totalorder %s143, %s159
      %p161 = scmp.eq.s32.totalorder %s20, 0
      %p162 = por %p160, %p161
      %p163 = scmp.le.s32.totalorder 1, %s14
      %p164 = scmp.lt.s32.totalorder %s14, 5
      %p165 = pnand %p163, %p164
      %p166 = pneg %p165
      // Predicated region
      $region9: #{tpu_custom_call.1} parent=5 // pred_check
        _
      $region10: #{tpu_custom_call.1} parent=5 // pred_check_branch
        %168 = sbr.rel (%p165) target = $region12
      $region11: #{tpu_custom_call.1} parent=5 // pred_region
        %s169 = ssub.s32 %s14, 1
        // Predicated region
        $region13: #{tpu_custom_call.1} parent=11 // pred_check
          %p170 = pneg %p87
        $region14: #{tpu_custom_call.1} parent=11 // pred_check_branch
          %172 = sbr.rel (%p170) target = $region16
        $region15: #{tpu_custom_call.1} parent=11 // pred_region
          _
        $region16: #{tpu_custom_call.1} parent=11 // pred_fallthru
          _
        // Predicated region
        $region17: #{tpu_custom_call.1} parent=11 // pred_check
          %p173 = pneg %p108
        $region18: #{tpu_custom_call.1} parent=11 // pred_check_branch
          %175 = sbr.rel (%p173) target = $region20
        $region19: #{tpu_custom_call.1} parent=11 // pred_region
          _
        $region20: #{tpu_custom_call.1} parent=11 // pred_fallthru
          _
        // Predicated region
        $region21: #{tpu_custom_call.1} parent=11 // pred_check
          %p176 = pneg %p129
        $region22: #{tpu_custom_call.1} parent=11 // pred_check_branch
          %178 = sbr.rel (%p176) target = $region24
        $region23: #{tpu_custom_call.1} parent=11 // pred_region
          _
        $region24: #{tpu_custom_call.1} parent=11 // pred_fallthru
          _
      $region12: #{tpu_custom_call.1} parent=5 // pred_fallthru
        _
      %p179 = scmp.lt.s32.totalorder %s14, 4
      // Predicated region
      $region25: #{tpu_custom_call.1} parent=5 // pred_check
        %p180 = pneg %p179
      $region26: #{tpu_custom_call.1} parent=5 // pred_check_branch
        %182 = sbr.rel (%p180) target = $region28
      $region27: #{tpu_custom_call.1} parent=5 // pred_region
        // Predicated region
        $region29: #{tpu_custom_call.1} parent=27 // pred_check
          %p183 = pneg %p34
        $region30: #{tpu_custom_call.1} parent=27 // pred_check_branch
          %185 = sbr.rel (%p183) target = $region32
        $region31: #{tpu_custom_call.1} parent=27 // pred_region
          %s186 = smul.u32 128, %s14
          %p187 = scmp.lt.s32.totalorder %s186, 511
          %s188 = scalar_select %p187, %s186, 511
          %s189 = smul.addr %s188, 4
          %s190 = scalar_lea.vmem %s0, %s189
          %s191 = smul.u32 128, %s14
        $region32: #{tpu_custom_call.1} parent=27 // pred_fallthru
          _
        // Predicated region
        $region33: #{tpu_custom_call.1} parent=27 // pred_check
          %p192 = pneg %p60
        $region34: #{tpu_custom_call.1} parent=27 // pred_check_branch
          %194 = sbr.rel (%p192) target = $region36
        $region35: #{tpu_custom_call.1} parent=27 // pred_region
          %p195 = scmp.lt.s32.totalorder %s14, 3
          %s196 = scalar_select %p195, %s14, 3
          %s197 = smul.addr %s196, 8
          %s198 = scalar_lea.vmem %s1, %s197
        $region36: #{tpu_custom_call.1} parent=27 // pred_fallthru
          _
      $region28: #{tpu_custom_call.1} parent=5 // pred_fallthru
        _
      %p199 = scmp.le.s32.totalorder 1, %s14
      %p200 = scmp.lt.s32.totalorder %s14, 5
      %p201 = pnand %p199, %p200
      %p202 = pneg %p201
      // Predicated region
      $region37: #{tpu_custom_call.1} parent=5 // pred_check
        _
      $region38: #{tpu_custom_call.1} parent=5 // pred_check_branch
        %204 = sbr.rel (%p201) target = $region40
      $region39: #{tpu_custom_call.1} parent=5 // pred_region
        %s205 = ssub.s32 %s14, 1
        %s206 = smul.u32 128, %s19
        %p207 = scmp.lt.s32.totalorder %s206, 511
        %s208 = scalar_select %p207, %s206, 511
        %s209 = smul.addr %s208, 4
        %s210 = scalar_lea.vmem %s0, %s209
        %p211 = pneg %p40
        %p212 = pneg %p37
        %p213 = scmp.lt.s32.totalorder %s19, 3
        %s214 = scalar_select %p213, %s19, 3
        %s215 = smul.addr %s214, 8
        %s216 = scalar_lea.vmem %s1, %s215
        %p217 = pneg %p66
        %p218 = pneg %p63
        %p219 = pneg %p87
        %p220 = pneg %p84
        %p221 = pneg %p108
        %p222 = pneg %p105
        %p223 = pneg %p129
        %p224 = pneg %p126
        %p225 = pneg %p155
        %p226 = pneg %p152
        %s227 = sand.u32 %s142, 1
        %s228 = scalar_lea.sflag [#allocation3], %s227
        %s229 = sand.u32 %s142, 1
        %s230 = smul.addr %s229, 8
        %s231 = scalar_lea.vmem [#allocation2], %s230
        %s232 = smul.u32 128, %s19
        %p233 = scmp.lt.s32.totalorder %s232, 511
        %s234 = scalar_select %p233, %s232, 511
        %s235 = smul.addr %s234, 4
        %s236 = scalar_lea.vmem %s0, %s235
        %s237 = smul.u32 128, %s19
        %p238 = scmp.lt.s32.totalorder %s19, 3
        %s239 = scalar_select %p238, %s19, 3
        %s240 = smul.addr %s239, 8
        %s241 = scalar_lea.vmem %s1, %s240
        %v243 = vld [vmem:[%s236] sm:$0xf]
        %v244 = vld [vmem:[%s236 + $0x4] sm:$0xf]
        %v245 = vld [vmem:[%s236 + $0x8] sm:$0xf]
        %v246 = vld [vmem:[%s236 + $0xc] sm:$0xf]
        %v247 = vld [vmem:[%s236 + $0x10] sm:$0xf]
        %v248 = vld [vmem:[%s236 + $0x14] sm:$0xf]
        %v249 = vld [vmem:[%s236 + $0x18] sm:$0xf]
        %v250 = vld [vmem:[%s236 + $0x1c] sm:$0xf]
        %v251 = vld [vmem:[%s236 + $0x20] sm:$0xf]
        %v252 = vld [vmem:[%s236 + $0x24] sm:$0xf]
        %v253 = vld [vmem:[%s236 + $0x28] sm:$0xf]
        %v254 = vld [vmem:[%s236 + $0x2c] sm:$0xf]
        %v255 = vld [vmem:[%s236 + $0x30] sm:$0xf]
        %v256 = vld [vmem:[%s236 + $0x34] sm:$0xf]
        %v257 = vld [vmem:[%s236 + $0x38] sm:$0xf]
        %v258 = vld [vmem:[%s236 + $0x3c] sm:$0xf]
        %v259 = vld [vmem:[%s236 + $0x40] sm:$0xf]
        %v260 = vld [vmem:[%s236 + $0x44] sm:$0xf]
        %v261 = vld [vmem:[%s236 + $0x48] sm:$0xf]
        %v262 = vld [vmem:[%s236 + $0x4c] sm:$0xf]
        %v263 = vld [vmem:[%s236 + $0x50] sm:$0xf]
        %v264 = vld [vmem:[%s236 + $0x54] sm:$0xf]
        %v265 = vld [vmem:[%s236 + $0x58] sm:$0xf]
        %v266 = vld [vmem:[%s236 + $0x5c] sm:$0xf]
        %v267 = vld [vmem:[%s236 + $0x60] sm:$0xf]
        %v268 = vld [vmem:[%s236 + $0x64] sm:$0xf]
        %v269 = vld [vmem:[%s236 + $0x68] sm:$0xf]
        %v270 = vld [vmem:[%s236 + $0x6c] sm:$0xf]
        %v271 = vld [vmem:[%s236 + $0x70] sm:$0xf]
        %v272 = vld [vmem:[%s236 + $0x74] sm:$0xf]
        %v273 = vld [vmem:[%s236 + $0x78] sm:$0xf]
        %v274 = vld [vmem:[%s236 + $0x7c] sm:$0xf]
        %v275 = vld [vmem:[%s236 + $0x80] sm:$0xf]
        %v276 = vld [vmem:[%s236 + $0x84] sm:$0xf]
        %v277 = vld [vmem:[%s236 + $0x88] sm:$0xf]
        %v278 = vld [vmem:[%s236 + $0x8c] sm:$0xf]
        %v279 = vld [vmem:[%s236 + $0x90] sm:$0xf]
        %v280 = vld [vmem:[%s236 + $0x94] sm:$0xf]
        %v281 = vld [vmem:[%s236 + $0x98] sm:$0xf]
        %v282 = vld [vmem:[%s236 + $0x9c] sm:$0xf]
        %v283 = vld [vmem:[%s236 + $0xa0] sm:$0xf]
        %v284 = vld [vmem:[%s236 + $0xa4] sm:$0xf]
        %v285 = vld [vmem:[%s236 + $0xa8] sm:$0xf]
        %v286 = vld [vmem:[%s236 + $0xac] sm:$0xf]
        %v287 = vld [vmem:[%s236 + $0xb0] sm:$0xf]
        %v288 = vld [vmem:[%s236 + $0xb4] sm:$0xf]
        %v289 = vld [vmem:[%s236 + $0xb8] sm:$0xf]
        %v290 = vld [vmem:[%s236 + $0xbc] sm:$0xf]
        %v291 = vld [vmem:[%s236 + $0xc0] sm:$0xf]
        %v292 = vld [vmem:[%s236 + $0xc4] sm:$0xf]
        %v293 = vld [vmem:[%s236 + $0xc8] sm:$0xf]
        %v294 = vld [vmem:[%s236 + $0xcc] sm:$0xf]
        %v295 = vld [vmem:[%s236 + $0xd0] sm:$0xf]
        %v296 = vld [vmem:[%s236 + $0xd4] sm:$0xf]
        %v297 = vld [vmem:[%s236 + $0xd8] sm:$0xf]
        %v298 = vld [vmem:[%s236 + $0xdc] sm:$0xf]
        %v299 = vld [vmem:[%s236 + $0xe0] sm:$0xf]
        %v300 = vld [vmem:[%s236 + $0xe4] sm:$0xf]
        %v301 = vld [vmem:[%s236 + $0xe8] sm:$0xf]
        %v302 = vld [vmem:[%s236 + $0xec] sm:$0xf]
        %v303 = vld [vmem:[%s236 + $0xf0] sm:$0xf]
        %v304 = vld [vmem:[%s236 + $0xf4] sm:$0xf]
        %v305 = vld [vmem:[%s236 + $0xf8] sm:$0xf]
        %v306 = vld [vmem:[%s236 + $0xfc] sm:$0xf]
        %v307 = vld [vmem:[%s236 + $0x100] sm:$0xf]
        %v308 = vld [vmem:[%s236 + $0x104] sm:$0xf]
        %v309 = vld [vmem:[%s236 + $0x108] sm:$0xf]
        %v310 = vld [vmem:[%s236 + $0x10c] sm:$0xf]
        %v311 = vld [vmem:[%s236 + $0x110] sm:$0xf]
        %v312 = vld [vmem:[%s236 + $0x114] sm:$0xf]
        %v313 = vld [vmem:[%s236 + $0x118] sm:$0xf]
        %v314 = vld [vmem:[%s236 + $0x11c] sm:$0xf]
        %v315 = vld [vmem:[%s236 + $0x120] sm:$0xf]
        %v316 = vld [vmem:[%s236 + $0x124] sm:$0xf]
        %v317 = vld [vmem:[%s236 + $0x128] sm:$0xf]
        %v318 = vld [vmem:[%s236 + $0x12c] sm:$0xf]
        %v319 = vld [vmem:[%s236 + $0x130] sm:$0xf]
        %v320 = vld [vmem:[%s236 + $0x134] sm:$0xf]
        %v321 = vld [vmem:[%s236 + $0x138] sm:$0xf]
        %v322 = vld [vmem:[%s236 + $0x13c] sm:$0xf]
        %v323 = vld [vmem:[%s236 + $0x140] sm:$0xf]
        %v324 = vld [vmem:[%s236 + $0x144] sm:$0xf]
        %v325 = vld [vmem:[%s236 + $0x148] sm:$0xf]
        %v326 = vld [vmem:[%s236 + $0x14c] sm:$0xf]
        %v327 = vld [vmem:[%s236 + $0x150] sm:$0xf]
        %v328 = vld [vmem:[%s236 + $0x154] sm:$0xf]
        %v329 = vld [vmem:[%s236 + $0x158] sm:$0xf]
        %v330 = vld [vmem:[%s236 + $0x15c] sm:$0xf]
        %v331 = vld [vmem:[%s236 + $0x160] sm:$0xf]
        %v332 = vld [vmem:[%s236 + $0x164] sm:$0xf]
        %v333 = vld [vmem:[%s236 + $0x168] sm:$0xf]
        %v334 = vld [vmem:[%s236 + $0x16c] sm:$0xf]
        %v335 = vld [vmem:[%s236 + $0x170] sm:$0xf]
        %v336 = vld [vmem:[%s236 + $0x174] sm:$0xf]
        %v337 = vld [vmem:[%s236 + $0x178] sm:$0xf]
        %v338 = vld [vmem:[%s236 + $0x17c] sm:$0xf]
        %v339 = vld [vmem:[%s236 + $0x180] sm:$0xf]
        %v340 = vld [vmem:[%s236 + $0x184] sm:$0xf]
        %v341 = vld [vmem:[%s236 + $0x188] sm:$0xf]
        %v342 = vld [vmem:[%s236 + $0x18c] sm:$0xf]
        %v343 = vld [vmem:[%s236 + $0x190] sm:$0xf]
        %v344 = vld [vmem:[%s236 + $0x194] sm:$0xf]
        %v345 = vld [vmem:[%s236 + $0x198] sm:$0xf]
        %v346 = vld [vmem:[%s236 + $0x19c] sm:$0xf]
        %v347 = vld [vmem:[%s236 + $0x1a0] sm:$0xf]
        %v348 = vld [vmem:[%s236 + $0x1a4] sm:$0xf]
        %v349 = vld [vmem:[%s236 + $0x1a8] sm:$0xf]
        %v350 = vld [vmem:[%s236 + $0x1ac] sm:$0xf]
        %v351 = vld [vmem:[%s236 + $0x1b0] sm:$0xf]
        %v352 = vld [vmem:[%s236 + $0x1b4] sm:$0xf]
        %v353 = vld [vmem:[%s236 + $0x1b8] sm:$0xf]
        %v354 = vld [vmem:[%s236 + $0x1bc] sm:$0xf]
        %v355 = vld [vmem:[%s236 + $0x1c0] sm:$0xf]
        %v356 = vld [vmem:[%s236 + $0x1c4] sm:$0xf]
        %v357 = vld [vmem:[%s236 + $0x1c8] sm:$0xf]
        %v358 = vld [vmem:[%s236 + $0x1cc] sm:$0xf]
        %v359 = vld [vmem:[%s236 + $0x1d0] sm:$0xf]
        %v360 = vld [vmem:[%s236 + $0x1d4] sm:$0xf]
        %v361 = vld [vmem:[%s236 + $0x1d8] sm:$0xf]
        %v362 = vld [vmem:[%s236 + $0x1dc] sm:$0xf]
        %v363 = vld [vmem:[%s236 + $0x1e0] sm:$0xf]
        %v364 = vld [vmem:[%s236 + $0x1e4] sm:$0xf]
        %v365 = vld [vmem:[%s236 + $0x1e8] sm:$0xf]
        %v366 = vld [vmem:[%s236 + $0x1ec] sm:$0xf]
        %v367 = vld [vmem:[%s236 + $0x1f0] sm:$0xf]
        %v368 = vld [vmem:[%s236 + $0x1f4] sm:$0xf]
        %v369 = vld [vmem:[%s236 + $0x1f8] sm:$0xf]
        %v370 = vld [vmem:[%s236 + $0x1fc] sm:$0xf]
        %v371 = vld [vmem:[%s2] sm:$0xf]
        %v372 = vld [vmem:[%s2 + $0x4] sm:$0xf]
        %v373 = vld [vmem:[%s2 + $0x8] sm:$0xf]
        %v374 = vld [vmem:[%s2 + $0xc] sm:$0xf]
        %v375 = vld [vmem:[%s2 + $0x10] sm:$0xf]
        %v376 = vld [vmem:[%s2 + $0x14] sm:$0xf]
        %v377 = vld [vmem:[%s2 + $0x18] sm:$0xf]
        %v378 = vld [vmem:[%s2 + $0x1c] sm:$0xf]
        %v379 = vld [vmem:[%s3] sm:$0x1]
        %v381 = vlaneseq
        %v382 = vshrl.u32 %v381, 7
        %v383 = vsub.s32 0, %v382
        %v384 = vrot.slane %v379, %v383
        %v514 = vunpack.c.l.b16 %v243
        %v515 = vunpack.c.l.b16 %v244
        %v516 = vunpack.c.l.b16 %v245
        %v517 = vunpack.c.l.b16 %v246
        %v518 = vunpack.c.l.b16 %v247
        %v519 = vunpack.c.l.b16 %v248
        %v520 = vunpack.c.l.b16 %v249
        %v521 = vunpack.c.l.b16 %v250
        %v522 = vunpack.c.l.b16 %v251
        %v523 = vunpack.c.l.b16 %v252
        %v524 = vunpack.c.l.b16 %v253
        %v525 = vunpack.c.l.b16 %v254
        %v526 = vunpack.c.l.b16 %v255
        %v527 = vunpack.c.l.b16 %v256
        %v528 = vunpack.c.l.b16 %v257
        %v529 = vunpack.c.l.b16 %v258
        %v530 = vunpack.c.l.b16 %v259
        %v531 = vunpack.c.l.b16 %v260
        %v532 = vunpack.c.l.b16 %v261
        %v533 = vunpack.c.l.b16 %v262
        %v534 = vunpack.c.l.b16 %v263
        %v535 = vunpack.c.l.b16 %v264
        %v536 = vunpack.c.l.b16 %v265
        %v537 = vunpack.c.l.b16 %v266
        %v538 = vunpack.c.l.b16 %v267
        %v539 = vunpack.c.l.b16 %v268
        %v540 = vunpack.c.l.b16 %v269
        %v541 = vunpack.c.l.b16 %v270
        %v542 = vunpack.c.l.b16 %v271
        %v543 = vunpack.c.l.b16 %v272
        %v544 = vunpack.c.l.b16 %v273
        %v545 = vunpack.c.l.b16 %v274
        %v546 = vunpack.c.l.b16 %v275
        %v547 = vunpack.c.l.b16 %v276
        %v548 = vunpack.c.l.b16 %v277
        %v549 = vunpack.c.l.b16 %v278
        %v550 = vunpack.c.l.b16 %v279
        %v551 = vunpack.c.l.b16 %v280
        %v552 = vunpack.c.l.b16 %v281
        %v553 = vunpack.c.l.b16 %v282
        %v554 = vunpack.c.l.b16 %v283
        %v555 = vunpack.c.l.b16 %v284
        %v556 = vunpack.c.l.b16 %v285
        %v557 = vunpack.c.l.b16 %v286
        %v558 = vunpack.c.l.b16 %v287
        %v559 = vunpack.c.l.b16 %v288
        %v560 = vunpack.c.l.b16 %v289
        %v561 = vunpack.c.l.b16 %v290
        %v562 = vunpack.c.l.b16 %v291
        %v563 = vunpack.c.l.b16 %v292
        %v564 = vunpack.c.l.b16 %v293
        %v565 = vunpack.c.l.b16 %v294
        %v566 = vunpack.c.l.b16 %v295
        %v567 = vunpack.c.l.b16 %v296
        %v568 = vunpack.c.l.b16 %v297
        %v569 = vunpack.c.l.b16 %v298
        %v570 = vunpack.c.l.b16 %v299
        %v571 = vunpack.c.l.b16 %v300
        %v572 = vunpack.c.l.b16 %v301
        %v573 = vunpack.c.l.b16 %v302
        %v574 = vunpack.c.l.b16 %v303
        %v575 = vunpack.c.l.b16 %v304
        %v576 = vunpack.c.l.b16 %v305
        %v577 = vunpack.c.l.b16 %v306
        %v578 = vunpack.c.l.b16 %v307
        %v579 = vunpack.c.l.b16 %v308
        %v580 = vunpack.c.l.b16 %v309
        %v581 = vunpack.c.l.b16 %v310
        %v582 = vunpack.c.l.b16 %v311
        %v583 = vunpack.c.l.b16 %v312
        %v584 = vunpack.c.l.b16 %v313
        %v585 = vunpack.c.l.b16 %v314
        %v586 = vunpack.c.l.b16 %v315
        %v587 = vunpack.c.l.b16 %v316
        %v588 = vunpack.c.l.b16 %v317
        %v589 = vunpack.c.l.b16 %v318
        %v590 = vunpack.c.l.b16 %v319
        %v591 = vunpack.c.l.b16 %v320
        %v592 = vunpack.c.l.b16 %v321
        %v593 = vunpack.c.l.b16 %v322
        %v594 = vunpack.c.l.b16 %v323
        %v595 = vunpack.c.l.b16 %v324
        %v596 = vunpack.c.l.b16 %v325
        %v597 = vunpack.c.l.b16 %v326
        %v598 = vunpack.c.l.b16 %v327
        %v599 = vunpack.c.l.b16 %v328
        %v600 = vunpack.c.l.b16 %v329
        %v601 = vunpack.c.l.b16 %v330
        %v602 = vunpack.c.l.b16 %v331
        %v603 = vunpack.c.l.b16 %v332
        %v604 = vunpack.c.l.b16 %v333
        %v605 = vunpack.c.l.b16 %v334
        %v606 = vunpack.c.l.b16 %v335
        %v607 = vunpack.c.l.b16 %v336
        %v608 = vunpack.c.l.b16 %v337
        %v609 = vunpack.c.l.b16 %v338
        %v610 = vunpack.c.l.b16 %v339
        %v611 = vunpack.c.l.b16 %v340
        %v612 = vunpack.c.l.b16 %v341
        %v613 = vunpack.c.l.b16 %v342
        %v614 = vunpack.c.l.b16 %v343
        %v615 = vunpack.c.l.b16 %v344
        %v616 = vunpack.c.l.b16 %v345
        %v617 = vunpack.c.l.b16 %v346
        %v618 = vunpack.c.l.b16 %v347
        %v619 = vunpack.c.l.b16 %v348
        %v620 = vunpack.c.l.b16 %v349
        %v621 = vunpack.c.l.b16 %v350
        %v622 = vunpack.c.l.b16 %v351
        %v623 = vunpack.c.l.b16 %v352
        %v624 = vunpack.c.l.b16 %v353
        %v625 = vunpack.c.l.b16 %v354
        %v626 = vunpack.c.l.b16 %v355
        %v627 = vunpack.c.l.b16 %v356
        %v628 = vunpack.c.l.b16 %v357
        %v629 = vunpack.c.l.b16 %v358
        %v630 = vunpack.c.l.b16 %v359
        %v631 = vunpack.c.l.b16 %v360
        %v632 = vunpack.c.l.b16 %v361
        %v633 = vunpack.c.l.b16 %v362
        %v634 = vunpack.c.l.b16 %v363
        %v635 = vunpack.c.l.b16 %v364
        %v636 = vunpack.c.l.b16 %v365
        %v637 = vunpack.c.l.b16 %v366
        %v638 = vunpack.c.l.b16 %v367
        %v639 = vunpack.c.l.b16 %v368
        %v640 = vunpack.c.l.b16 %v369
        %v641 = vunpack.c.l.b16 %v370
        %v642 = vpack.c.b16 %v515, %v514
        %v643 = vpack.c.b16 %v517, %v516
        %v644 = vpack.c.b16 %v519, %v518
        %v645 = vpack.c.b16 %v521, %v520
        %v646 = vpack.c.b16 %v523, %v522
        %v647 = vpack.c.b16 %v525, %v524
        %v648 = vpack.c.b16 %v527, %v526
        %v649 = vpack.c.b16 %v529, %v528
        %v650 = vpack.c.b16 %v531, %v530
        %v651 = vpack.c.b16 %v533, %v532
        %v652 = vpack.c.b16 %v535, %v534
        %v653 = vpack.c.b16 %v537, %v536
        %v654 = vpack.c.b16 %v539, %v538
        %v655 = vpack.c.b16 %v541, %v540
        %v656 = vpack.c.b16 %v543, %v542
        %v657 = vpack.c.b16 %v545, %v544
        %v658 = vpack.c.b16 %v547, %v546
        %v659 = vpack.c.b16 %v549, %v548
        %v660 = vpack.c.b16 %v551, %v550
        %v661 = vpack.c.b16 %v553, %v552
        %v662 = vpack.c.b16 %v555, %v554
        %v663 = vpack.c.b16 %v557, %v556
        %v664 = vpack.c.b16 %v559, %v558
        %v665 = vpack.c.b16 %v561, %v560
        %v666 = vpack.c.b16 %v563, %v562
        %v667 = vpack.c.b16 %v565, %v564
        %v668 = vpack.c.b16 %v567, %v566
        %v669 = vpack.c.b16 %v569, %v568
        %v670 = vpack.c.b16 %v571, %v570
        %v671 = vpack.c.b16 %v573, %v572
        %v672 = vpack.c.b16 %v575, %v574
        %v673 = vpack.c.b16 %v577, %v576
        %v674 = vpack.c.b16 %v579, %v578
        %v675 = vpack.c.b16 %v581, %v580
        %v676 = vpack.c.b16 %v583, %v582
        %v677 = vpack.c.b16 %v585, %v584
        %v678 = vpack.c.b16 %v587, %v586
        %v679 = vpack.c.b16 %v589, %v588
        %v680 = vpack.c.b16 %v591, %v590
        %v681 = vpack.c.b16 %v593, %v592
        %v682 = vpack.c.b16 %v595, %v594
        %v683 = vpack.c.b16 %v597, %v596
        %v684 = vpack.c.b16 %v599, %v598
        %v685 = vpack.c.b16 %v601, %v600
        %v686 = vpack.c.b16 %v603, %v602
        %v687 = vpack.c.b16 %v605, %v604
        %v688 = vpack.c.b16 %v607, %v606
        %v689 = vpack.c.b16 %v609, %v608
        %v690 = vpack.c.b16 %v611, %v610
        %v691 = vpack.c.b16 %v613, %v612
        %v692 = vpack.c.b16 %v615, %v614
        %v693 = vpack.c.b16 %v617, %v616
        %v694 = vpack.c.b16 %v619, %v618
        %v695 = vpack.c.b16 %v621, %v620
        %v696 = vpack.c.b16 %v623, %v622
        %v697 = vpack.c.b16 %v625, %v624
        %v698 = vpack.c.b16 %v627, %v626
        %v699 = vpack.c.b16 %v629, %v628
        %v700 = vpack.c.b16 %v631, %v630
        %v701 = vpack.c.b16 %v633, %v632
        %v702 = vpack.c.b16 %v635, %v634
        %v703 = vpack.c.b16 %v637, %v636
        %v704 = vpack.c.b16 %v639, %v638
        %v705 = vpack.c.b16 %v641, %v640
        %v714 = vunpack.c.l.b16 %v371
        %v715 = vunpack.c.l.b16 %v372
        %v716 = vunpack.c.l.b16 %v373
        %v717 = vunpack.c.l.b16 %v374
        %v718 = vunpack.c.l.b16 %v375
        %v719 = vunpack.c.l.b16 %v376
        %v720 = vunpack.c.l.b16 %v377
        %v721 = vunpack.c.l.b16 %v378
        %v722 = vpack.c.b16 %v715, %v714
        %v723 = vpack.c.b16 %v717, %v716
        %v724 = vpack.c.b16 %v719, %v718
        %v725 = vpack.c.b16 %v721, %v720
        %vm730 = vcmask 523264
        %v732 = vsel %vm730, %v642, 0
        %v735 = vsel %vm730, %v643, 0
        %v738 = vsel %vm730, %v644, 0
        %v741 = vsel %vm730, %v645, 0
        %v744 = vsel %vm730, %v646, 0
        %v747 = vsel %vm730, %v647, 0
        %v750 = vsel %vm730, %v648, 0
        %v753 = vsel %vm730, %v649, 0
        %v756 = vsel %vm730, %v650, 0
        %v759 = vsel %vm730, %v651, 0
        %v762 = vsel %vm730, %v652, 0
        %v765 = vsel %vm730, %v653, 0
        %v768 = vsel %vm730, %v654, 0
        %v771 = vsel %vm730, %v655, 0
        %v774 = vsel %vm730, %v656, 0
        %v777 = vsel %vm730, %v657, 0
        %v780 = vsel %vm730, %v658, 0
        %v783 = vsel %vm730, %v659, 0
        %v786 = vsel %vm730, %v660, 0
        %v789 = vsel %vm730, %v661, 0
        %v792 = vsel %vm730, %v662, 0
        %v795 = vsel %vm730, %v663, 0
        %v798 = vsel %vm730, %v664, 0
        %v801 = vsel %vm730, %v665, 0
        %v804 = vsel %vm730, %v666, 0
        %v807 = vsel %vm730, %v667, 0
        %v810 = vsel %vm730, %v668, 0
        %v813 = vsel %vm730, %v669, 0
        %v816 = vsel %vm730, %v670, 0
        %v819 = vsel %vm730, %v671, 0
        %v822 = vsel %vm730, %v672, 0
        %v825 = vsel %vm730, %v673, 0
        %v828 = vsel %vm730, %v674, 0
        %v831 = vsel %vm730, %v675, 0
        %v834 = vsel %vm730, %v676, 0
        %v837 = vsel %vm730, %v677, 0
        %v840 = vsel %vm730, %v678, 0
        %v843 = vsel %vm730, %v679, 0
        %v846 = vsel %vm730, %v680, 0
        %v849 = vsel %vm730, %v681, 0
        %v852 = vsel %vm730, %v682, 0
        %v855 = vsel %vm730, %v683, 0
        %v858 = vsel %vm730, %v684, 0
        %v861 = vsel %vm730, %v685, 0
        %v864 = vsel %vm730, %v686, 0
        %v867 = vsel %vm730, %v687, 0
        %v870 = vsel %vm730, %v688, 0
        %v873 = vsel %vm730, %v689, 0
        %v876 = vsel %vm730, %v690, 0
        %v879 = vsel %vm730, %v691, 0
        %v882 = vsel %vm730, %v692, 0
        %v885 = vsel %vm730, %v693, 0
        %v888 = vsel %vm730, %v694, 0
        %v891 = vsel %vm730, %v695, 0
        %v894 = vsel %vm730, %v696, 0
        %v897 = vsel %vm730, %v697, 0
        %v900 = vsel %vm730, %v698, 0
        %v903 = vsel %vm730, %v699, 0
        %v906 = vsel %vm730, %v700, 0
        %v909 = vsel %vm730, %v701, 0
        %v912 = vsel %vm730, %v702, 0
        %v915 = vsel %vm730, %v703, 0
        %v918 = vsel %vm730, %v704, 0
        %v921 = vsel %vm730, %v705, 0
        %923 = vmatprep.subr.bf16.mxu0 0
        %924 = vmatpush1.bf16.msra.mxu0 %v722
        %925 = vmatprep.subr.bf16.mxu0 0
        %926 = vmatpush1.bf16.msra.mxu0 %v723
        %927 = vmatprep.subr.bf16.mxu0 0
        %928 = vmatpush1.bf16.msra.mxu0 %v724
        %929 = vmatprep.subr.bf16.mxu0 0
        %930 = vmatpush1.bf16.msra.mxu0 %v725
        %931 = vmatprep.subr.bf16.mxu0 0
        %932 = vmatpush1.bf16.msra.mxu0 0
        %933 = vmatprep.subr.bf16.mxu0 0
        %934 = vmatpush1.bf16.msra.mxu0 0
        %935 = vmatprep.subr.bf16.mxu0 0
        %936 = vmatpush1.bf16.msra.mxu0 0
        %937 = vmatprep.subr.bf16.mxu0 0
        %938 = vmatpush1.bf16.msra.mxu0 0
        %939 = vmatprep.subr.bf16.mxu0 0
        %940 = vmatpush1.bf16.msra.mxu0 0
        %941 = vmatprep.subr.bf16.mxu0 0
        %942 = vmatpush1.bf16.msra.mxu0 0
        %943 = vmatprep.subr.bf16.mxu0 0
        %944 = vmatpush1.bf16.msra.mxu0 0
        %945 = vmatprep.subr.bf16.mxu0 0
        %946 = vmatpush1.bf16.msra.mxu0 0
        %947 = vmatprep.subr.bf16.mxu0 0
        %948 = vmatpush1.bf16.msra.mxu0 0
        %949 = vmatprep.subr.bf16.mxu0 0
        %950 = vmatpush1.bf16.msra.mxu0 0
        %951 = vmatprep.subr.bf16.mxu0 0
        %952 = vmatpush1.bf16.msra.mxu0 0
        %953 = vmatprep.subr.bf16.mxu0 0
        %954 = vmatpush1.bf16.msra.mxu0 0
        %955 = vmatprep.mubr.bf16.mxu0 0
        %956 = vmatmul.mubr.bf16.gmra.mrb[0].mxu0 %v732
        %v957 = vpop.f32.mrb[0].mxu0
        %v958 = vadd.f32 %v384, %v957
        %v959 = vpop.f32.mrb[0].mxu0
        %v960 = vpop.f32.mrb[0].mxu0
        %v961 = vadd.f32 %v384, %v960
        %v962 = vpop.f32.mrb[0].mxu0
        %963 = vmatprep.mubr.bf16.mxu0 0
        %964 = vmatmul.mubr.bf16.gmra.mrb[0].mxu0 %v735
        %v965 = vpop.f32.mrb[0].mxu0
        %v966 = vadd.f32 %v384, %v965
        %v967 = vpop.f32.mrb[0].mxu0
        %v968 = vpop.f32.mrb[0].mxu0
        %v969 = vadd.f32 %v384, %v968
        %v970 = vpop.f32.mrb[0].mxu0
        %971 = vmatprep.mubr.bf16.mxu0 0
        %972 = vmatmul.mubr.bf16.gmra.mrb[0].mxu0 %v738
        %v973 = vpop.f32.mrb[0].mxu0
        %v974 = vadd.f32 %v384, %v973
        %v975 = vpop.f32.mrb[0].mxu0
        %v976 = vpop.f32.mrb[0].mxu0
        %v977 = vadd.f32 %v384, %v976
        %v978 = vpop.f32.mrb[0].mxu0
        %979 = vmatprep.mubr.bf16.mxu0 0
        %980 = vmatmul.mubr.bf16.gmra.mrb[0].mxu0 %v741
        %v981 = vpop.f32.mrb[0].mxu0
        %v982 = vadd.f32 %v384, %v981
        %v983 = vpop.f32.mrb[0].mxu0
        %v984 = vpop.f32.mrb[0].mxu0
        %v985 = vadd.f32 %v384, %v984
        %v986 = vpop.f32.mrb[0].mxu0
        %987 = vmatprep.mubr.bf16.mxu0 0
        %988 = vmatmul.mubr.bf16.gmra.mrb[0].mxu0 %v744
        %v989 = vpop.f32.mrb[0].mxu0
        %v990 = vadd.f32 %v384, %v989
        %v991 = vpop.f32.mrb[0].mxu0
        %v992 = vpop.f32.mrb[0].mxu0
        %v993 = vadd.f32 %v384, %v992
        %v994 = vpop.f32.mrb[0].mxu0
        %995 = vmatprep.mubr.bf16.mxu0 0
        %996 = vmatmul.mubr.bf16.gmra.mrb[0].mxu0 %v747
        %v997 = vpop.f32.mrb[0].mxu0
        %v998 = vadd.f32 %v384, %v997
        %v999 = vpop.f32.mrb[0].mxu0
        %v1000 = vpop.f32.mrb[0].mxu0
        %v1001 = vadd.f32 %v384, %v1000
        %v1002 = vpop.f32.mrb[0].mxu0
        %1003 = vmatprep.mubr.bf16.mxu0 0
        %1004 = vmatmul.mubr.bf16.gmra.mrb[0].mxu0 %v750
        %v1005 = vpop.f32.mrb[0].mxu0
        %v1006 = vadd.f32 %v384, %v1005
        %v1007 = vpop.f32.mrb[0].mxu0
        %v1008 = vpop.f32.mrb[0].mxu0
        %v1009 = vadd.f32 %v384, %v1008
        %v1010 = vpop.f32.mrb[0].mxu0
        %1011 = vmatprep.mubr.bf16.mxu0 0
        %1012 = vmatmul.mubr.bf16.gmra.mrb[0].mxu0 %v753
        %v1013 = vpop.f32.mrb[0].mxu0
        %v1014 = vadd.f32 %v384, %v1013
        %v1015 = vpop.f32.mrb[0].mxu0
        %v1016 = vpop.f32.mrb[0].mxu0
        %v1017 = vadd.f32 %v384, %v1016
        %v1018 = vpop.f32.mrb[0].mxu0
        %1019 = vmatprep.mubr.bf16.mxu0 0
        %1020 = vmatmul.mubr.bf16.gmra.mrb[0].mxu0 %v756
        %v1021 = vpop.f32.mrb[0].mxu0
        %v1022 = vadd.f32 %v384, %v1021
        %v1023 = vpop.f32.mrb[0].mxu0
        %v1024 = vpop.f32.mrb[0].mxu0
        %v1025 = vadd.f32 %v384, %v1024
        %v1026 = vpop.f32.mrb[0].mxu0
        %1027 = vmatprep.mubr.bf16.mxu0 0
        %1028 = vmatmul.mubr.bf16.gmra.mrb[0].mxu0 %v759
        %v1029 = vpop.f32.mrb[0].mxu0
        %v1030 = vadd.f32 %v384, %v1029
        %v1031 = vpop.f32.mrb[0].mxu0
        %v1032 = vpop.f32.mrb[0].mxu0
        %v1033 = vadd.f32 %v384, %v1032
        %v1034 = vpop.f32.mrb[0].mxu0
        %1035 = vmatprep.mubr.bf16.mxu0 0
        %1036 = vmatmul.mubr.bf16.gmra.mrb[0].mxu0 %v762
        %v1037 = vpop.f32.mrb[0].mxu0
        %v1038 = vadd.f32 %v384, %v1037
        %v1039 = vpop.f32.mrb[0].mxu0
        %v1040 = vpop.f32.mrb[0].mxu0
        %v1041 = vadd.f32 %v384, %v1040
        %v1042 = vpop.f32.mrb[0].mxu0
        %1043 = vmatprep.mubr.bf16.mxu0 0
        %1044 = vmatmul.mubr.bf16.gmra.mrb[0].mxu0 %v765
        %v1045 = vpop.f32.mrb[0].mxu0
        %v1046 = vadd.f32 %v384, %v1045
        %v1047 = vpop.f32.mrb[0].mxu0
        %v1048 = vpop.f32.mrb[0].mxu0
        %v1049 = vadd.f32 %v384, %v1048
        %v1050 = vpop.f32.mrb[0].mxu0
        %1051 = vmatprep.mubr.bf16.mxu0 0
        %1052 = vmatmul.mubr.bf16.gmra.mrb[0].mxu0 %v768
        %v1053 = vpop.f32.mrb[0].mxu0
        %v1054 = vadd.f32 %v384, %v1053
        %v1055 = vpop.f32.mrb[0].mxu0
        %v1056 = vpop.f32.mrb[0].mxu0
        %v1057 = vadd.f32 %v384, %v1056
        %v1058 = vpop.f32.mrb[0].mxu0
        %1059 = vmatprep.mubr.bf16.mxu0 0
        %1060 = vmatmul.mubr.bf16.gmra.mrb[0].mxu0 %v771
        %v1061 = vpop.f32.mrb[0].mxu0
        %v1062 = vadd.f32 %v384, %v1061
        %v1063 = vpop.f32.mrb[0].mxu0
        %v1064 = vpop.f32.mrb[0].mxu0
        %v1065 = vadd.f32 %v384, %v1064
        %v1066 = vpop.f32.mrb[0].mxu0
        %1067 = vmatprep.mubr.bf16.mxu0 0
        %1068 = vmatmul.mubr.bf16.gmra.mrb[0].mxu0 %v774
        %v1069 = vpop.f32.mrb[0].mxu0
        %v1070 = vadd.f32 %v384, %v1069
        %v1071 = vpop.f32.mrb[0].mxu0
        %v1072 = vpop.f32.mrb[0].mxu0
        %v1073 = vadd.f32 %v384, %v1072
        %v1074 = vpop.f32.mrb[0].mxu0
        %1075 = vmatprep.mubr.bf16.mxu0 0
        %1076 = vmatmul.mubr.bf16.gmra.mrb[0].mxu0 %v777
        %v1077 = vpop.f32.mrb[0].mxu0
        %v1078 = vadd.f32 %v384, %v1077
        %v1079 = vpop.f32.mrb[0].mxu0
        %v1080 = vpop.f32.mrb[0].mxu0
        %v1081 = vadd.f32 %v384, %v1080
        %v1082 = vpop.f32.mrb[0].mxu0
        %1083 = vmatprep.mubr.bf16.mxu0 0
        %1084 = vmatmul.mubr.bf16.gmra.mrb[0].mxu0 %v780
        %v1085 = vpop.f32.mrb[0].mxu0
        %v1086 = vadd.f32 %v384, %v1085
        %v1087 = vpop.f32.mrb[0].mxu0
        %v1088 = vpop.f32.mrb[0].mxu0
        %v1089 = vadd.f32 %v384, %v1088
        %v1090 = vpop.f32.mrb[0].mxu0
        %1091 = vmatprep.mubr.bf16.mxu0 0
        %1092 = vmatmul.mubr.bf16.gmra.mrb[0].mxu0 %v783
        %v1093 = vpop.f32.mrb[0].mxu0
        %v1094 = vadd.f32 %v384, %v1093
        %v1095 = vpop.f32.mrb[0].mxu0
        %v1096 = vpop.f32.mrb[0].mxu0
        %v1097 = vadd.f32 %v384, %v1096
        %v1098 = vpop.f32.mrb[0].mxu0
        %1099 = vmatprep.mubr.bf16.mxu0 0
        %1100 = vmatmul.mubr.bf16.gmra.mrb[0].mxu0 %v786
        %v1101 = vpop.f32.mrb[0].mxu0
        %v1102 = vadd.f32 %v384, %v1101
        %v1103 = vpop.f32.mrb[0].mxu0
        %v1104 = vpop.f32.mrb[0].mxu0
        %v1105 = vadd.f32 %v384, %v1104
        %v1106 = vpop.f32.mrb[0].mxu0
        %1107 = vmatprep.mubr.bf16.mxu0 0
        %1108 = vmatmul.mubr.bf16.gmra.mrb[0].mxu0 %v789
        %v1109 = vpop.f32.mrb[0].mxu0
        %v1110 = vadd.f32 %v384, %v1109
        %v1111 = vpop.f32.mrb[0].mxu0
        %v1112 = vpop.f32.mrb[0].mxu0
        %v1113 = vadd.f32 %v384, %v1112
        %v1114 = vpop.f32.mrb[0].mxu0
        %1115 = vmatprep.mubr.bf16.mxu0 0
        %1116 = vmatmul.mubr.bf16.gmra.mrb[0].mxu0 %v792
        %v1117 = vpop.f32.mrb[0].mxu0
        %v1118 = vadd.f32 %v384, %v1117
        %v1119 = vpop.f32.mrb[0].mxu0
        %v1120 = vpop.f32.mrb[0].mxu0
        %v1121 = vadd.f32 %v384, %v1120
        %v1122 = vpop.f32.mrb[0].mxu0
        %1123 = vmatprep.mubr.bf16.mxu0 0
        %1124 = vmatmul.mubr.bf16.gmra.mrb[0].mxu0 %v795
        %v1125 = vpop.f32.mrb[0].mxu0
        %v1126 = vadd.f32 %v384, %v1125
        %v1127 = vpop.f32.mrb[0].mxu0
        %v1128 = vpop.f32.mrb[0].mxu0
        %v1129 = vadd.f32 %v384, %v1128
        %v1130 = vpop.f32.mrb[0].mxu0
        %1131 = vmatprep.mubr.bf16.mxu0 0
        %1132 = vmatmul.mubr.bf16.gmra.mrb[0].mxu0 %v798
        %v1133 = vpop.f32.mrb[0].mxu0
        %v1134 = vadd.f32 %v384, %v1133
        %v1135 = vpop.f32.mrb[0].mxu0
        %v1136 = vpop.f32.mrb[0].mxu0
        %v1137 = vadd.f32 %v384, %v1136
        %v1138 = vpop.f32.mrb[0].mxu0
        %1139 = vmatprep.mubr.bf16.mxu0 0
        %1140 = vmatmul.mubr.bf16.gmra.mrb[0].mxu0 %v801
        %v1141 = vpop.f32.mrb[0].mxu0
        %v1142 = vadd.f32 %v384, %v1141
        %v1143 = vpop.f32.mrb[0].mxu0
        %v1144 = vpop.f32.mrb[0].mxu0
        %v1145 = vadd.f32 %v384, %v1144
        %v1146 = vpop.f32.mrb[0].mxu0
        %1147 = vmatprep.mubr.bf16.mxu0 0
        %1148 = vmatmul.mubr.bf16.gmra.mrb[0].mxu0 %v804
        %v1149 = vpop.f32.mrb[0].mxu0
        %v1150 = vadd.f32 %v384, %v1149
        %v1151 = vpop.f32.mrb[0].mxu0
        %v1152 = vpop.f32.mrb[0].mxu0
        %v1153 = vadd.f32 %v384, %v1152
        %v1154 = vpop.f32.mrb[0].mxu0
        %1155 = vmatprep.mubr.bf16.mxu0 0
        %1156 = vmatmul.mubr.bf16.gmra.mrb[0].mxu0 %v807
        %v1157 = vpop.f32.mrb[0].mxu0
        %v1158 = vadd.f32 %v384, %v1157
        %v1159 = vpop.f32.mrb[0].mxu0
        %v1160 = vpop.f32.mrb[0].mxu0
        %v1161 = vadd.f32 %v384, %v1160
        %v1162 = vpop.f32.mrb[0].mxu0
        %1163 = vmatprep.mubr.bf16.mxu0 0
        %1164 = vmatmul.mubr.bf16.gmra.mrb[0].mxu0 %v810
        %v1165 = vpop.f32.mrb[0].mxu0
        %v1166 = vadd.f32 %v384, %v1165
        %v1167 = vpop.f32.mrb[0].mxu0
        %v1168 = vpop.f32.mrb[0].mxu0
        %v1169 = vadd.f32 %v384, %v1168
        %v1170 = vpop.f32.mrb[0].mxu0
        %1171 = vmatprep.mubr.bf16.mxu0 0
        %1172 = vmatmul.mubr.bf16.gmra.mrb[0].mxu0 %v813
        %v1173 = vpop.f32.mrb[0].mxu0
        %v1174 = vadd.f32 %v384, %v1173
        %v1175 = vpop.f32.mrb[0].mxu0
        %v1176 = vpop.f32.mrb[0].mxu0
        %v1177 = vadd.f32 %v384, %v1176
        %v1178 = vpop.f32.mrb[0].mxu0
        %1179 = vmatprep.mubr.bf16.mxu0 0
        %1180 = vmatmul.mubr.bf16.gmra.mrb[0].mxu0 %v816
        %v1181 = vpop.f32.mrb[0].mxu0
        %v1182 = vadd.f32 %v384, %v1181
        %v1183 = vpop.f32.mrb[0].mxu0
        %v1184 = vpop.f32.mrb[0].mxu0
        %v1185 = vadd.f32 %v384, %v1184
        %v1186 = vpop.f32.mrb[0].mxu0
        %1187 = vmatprep.mubr.bf16.mxu0 0
        %1188 = vmatmul.mubr.bf16.gmra.mrb[0].mxu0 %v819
        %v1189 = vpop.f32.mrb[0].mxu0
        %v1190 = vadd.f32 %v384, %v1189
        %v1191 = vpop.f32.mrb[0].mxu0
        %v1192 = vpop.f32.mrb[0].mxu0
        %v1193 = vadd.f32 %v384, %v1192
        %v1194 = vpop.f32.mrb[0].mxu0
        %1195 = vmatprep.mubr.bf16.mxu0 0
        %1196 = vmatmul.mubr.bf16.gmra.mrb[0].mxu0 %v822
        %v1197 = vpop.f32.mrb[0].mxu0
        %v1198 = vadd.f32 %v384, %v1197
        %v1199 = vpop.f32.mrb[0].mxu0
        %v1200 = vpop.f32.mrb[0].mxu0
        %v1201 = vadd.f32 %v384, %v1200
        %v1202 = vpop.f32.mrb[0].mxu0
        %1203 = vmatprep.mubr.bf16.mxu0 0
        %1204 = vmatmul.mubr.bf16.gmra.mrb[0].mxu0 %v825
        %v1205 = vpop.f32.mrb[0].mxu0
        %v1206 = vadd.f32 %v384, %v1205
        %v1207 = vpop.f32.mrb[0].mxu0
        %v1208 = vpop.f32.mrb[0].mxu0
        %v1209 = vadd.f32 %v384, %v1208
        %v1210 = vpop.f32.mrb[0].mxu0
        %1211 = vmatprep.mubr.bf16.mxu0 0
        %1212 = vmatmul.mubr.bf16.gmra.mrb[0].mxu0 %v828
        %v1213 = vpop.f32.mrb[0].mxu0
        %v1214 = vadd.f32 %v384, %v1213
        %v1215 = vpop.f32.mrb[0].mxu0
        %v1216 = vpop.f32.mrb[0].mxu0
        %v1217 = vadd.f32 %v384, %v1216
        %v1218 = vpop.f32.mrb[0].mxu0
        %1219 = vmatprep.mubr.bf16.mxu0 0
        %1220 = vmatmul.mubr.bf16.gmra.mrb[0].mxu0 %v831
        %v1221 = vpop.f32.mrb[0].mxu0
        %v1222 = vadd.f32 %v384, %v1221
        %v1223 = vpop.f32.mrb[0].mxu0
        %v1224 = vpop.f32.mrb[0].mxu0
        %v1225 = vadd.f32 %v384, %v1224
        %v1226 = vpop.f32.mrb[0].mxu0
        %1227 = vmatprep.mubr.bf16.mxu0 0
        %1228 = vmatmul.mubr.bf16.gmra.mrb[0].mxu0 %v834
        %v1229 = vpop.f32.mrb[0].mxu0
        %v1230 = vadd.f32 %v384, %v1229
        %v1231 = vpop.f32.mrb[0].mxu0
        %v1232 = vpop.f32.mrb[0].mxu0
        %v1233 = vadd.f32 %v384, %v1232
        %v1234 = vpop.f32.mrb[0].mxu0
        %1235 = vmatprep.mubr.bf16.mxu0 0
        %1236 = vmatmul.mubr.bf16.gmra.mrb[0].mxu0 %v837
        %v1237 = vpop.f32.mrb[0].mxu0
        %v1238 = vadd.f32 %v384, %v1237
        %v1239 = vpop.f32.mrb[0].mxu0
        %v1240 = vpop.f32.mrb[0].mxu0
        %v1241 = vadd.f32 %v384, %v1240
        %v1242 = vpop.f32.mrb[0].mxu0
        %1243 = vmatprep.mubr.bf16.mxu0 0
        %1244 = vmatmul.mubr.bf16.gmra.mrb[0].mxu0 %v840
        %v1245 = vpop.f32.mrb[0].mxu0
        %v1246 = vadd.f32 %v384, %v1245
        %v1247 = vpop.f32.mrb[0].mxu0
        %v1248 = vpop.f32.mrb[0].mxu0
        %v1249 = vadd.f32 %v384, %v1248
        %v1250 = vpop.f32.mrb[0].mxu0
        %1251 = vmatprep.mubr.bf16.mxu0 0
        %1252 = vmatmul.mubr.bf16.gmra.mrb[0].mxu0 %v843
        %v1253 = vpop.f32.mrb[0].mxu0
        %v1254 = vadd.f32 %v384, %v1253
        %v1255 = vpop.f32.mrb[0].mxu0
        %v1256 = vpop.f32.mrb[0].mxu0
        %v1257 = vadd.f32 %v384, %v1256
        %v1258 = vpop.f32.mrb[0].mxu0
        %1259 = vmatprep.mubr.bf16.mxu0 0
        %1260 = vmatmul.mubr.bf16.gmra.mrb[0].mxu0 %v846
        %v1261 = vpop.f32.mrb[0].mxu0
        %v1262 = vadd.f32 %v384, %v1261
        %v1263 = vpop.f32.mrb[0].mxu0
        %v1264 = vpop.f32.mrb[0].mxu0
        %v1265 = vadd.f32 %v384, %v1264
        %v1266 = vpop.f32.mrb[0].mxu0
        %1267 = vmatprep.mubr.bf16.mxu0 0
        %1268 = vmatmul.mubr.bf16.gmra.mrb[0].mxu0 %v849
        %v1269 = vpop.f32.mrb[0].mxu0
        %v1270 = vadd.f32 %v384, %v1269
        %v1271 = vpop.f32.mrb[0].mxu0
        %v1272 = vpop.f32.mrb[0].mxu0
        %v1273 = vadd.f32 %v384, %v1272
        %v1274 = vpop.f32.mrb[0].mxu0
        %1275 = vmatprep.mubr.bf16.mxu0 0
        %1276 = vmatmul.mubr.bf16.gmra.mrb[0].mxu0 %v852
        %v1277 = vpop.f32.mrb[0].mxu0
        %v1278 = vadd.f32 %v384, %v1277
        %v1279 = vpop.f32.mrb[0].mxu0
        %v1280 = vpop.f32.mrb[0].mxu0
        %v1281 = vadd.f32 %v384, %v1280
        %v1282 = vpop.f32.mrb[0].mxu0
        %1283 = vmatprep.mubr.bf16.mxu0 0
        %1284 = vmatmul.mubr.bf16.gmra.mrb[0].mxu0 %v855
        %v1285 = vpop.f32.mrb[0].mxu0
        %v1286 = vadd.f32 %v384, %v1285
        %v1287 = vpop.f32.mrb[0].mxu0
        %v1288 = vpop.f32.mrb[0].mxu0
        %v1289 = vadd.f32 %v384, %v1288
        %v1290 = vpop.f32.mrb[0].mxu0
        %1291 = vmatprep.mubr.bf16.mxu0 0
        %1292 = vmatmul.mubr.bf16.gmra.mrb[0].mxu0 %v858
        %v1293 = vpop.f32.mrb[0].mxu0
        %v1294 = vadd.f32 %v384, %v1293
        %v1295 = vpop.f32.mrb[0].mxu0
        %v1296 = vpop.f32.mrb[0].mxu0
        %v1297 = vadd.f32 %v384, %v1296
        %v1298 = vpop.f32.mrb[0].mxu0
        %1299 = vmatprep.mubr.bf16.mxu0 0
        %1300 = vmatmul.mubr.bf16.gmra.mrb[0].mxu0 %v861
        %v1301 = vpop.f32.mrb[0].mxu0
        %v1302 = vadd.f32 %v384, %v1301
        %v1303 = vpop.f32.mrb[0].mxu0
        %v1304 = vpop.f32.mrb[0].mxu0
        %v1305 = vadd.f32 %v384, %v1304
        %v1306 = vpop.f32.mrb[0].mxu0
        %1307 = vmatprep.mubr.bf16.mxu0 0
        %1308 = vmatmul.mubr.bf16.gmra.mrb[0].mxu0 %v864
        %v1309 = vpop.f32.mrb[0].mxu0
        %v1310 = vadd.f32 %v384, %v1309
        %v1311 = vpop.f32.mrb[0].mxu0
        %v1312 = vpop.f32.mrb[0].mxu0
        %v1313 = vadd.f32 %v384, %v1312
        %v1314 = vpop.f32.mrb[0].mxu0
        %1315 = vmatprep.mubr.bf16.mxu0 0
        %1316 = vmatmul.mubr.bf16.gmra.mrb[0].mxu0 %v867
        %v1317 = vpop.f32.mrb[0].mxu0
        %v1318 = vadd.f32 %v384, %v1317
        %v1319 = vpop.f32.mrb[0].mxu0
        %v1320 = vpop.f32.mrb[0].mxu0
        %v1321 = vadd.f32 %v384, %v1320
        %v1322 = vpop.f32.mrb[0].mxu0
        %1323 = vmatprep.mubr.bf16.mxu0 0
        %1324 = vmatmul.mubr.bf16.gmra.mrb[0].mxu0 %v870
        %v1325 = vpop.f32.mrb[0].mxu0
        %v1326 = vadd.f32 %v384, %v1325
        %v1327 = vpop.f32.mrb[0].mxu0
        %v1328 = vpop.f32.mrb[0].mxu0
        %v1329 = vadd.f32 %v384, %v1328
        %v1330 = vpop.f32.mrb[0].mxu0
        %1331 = vmatprep.mubr.bf16.mxu0 0
        %1332 = vmatmul.mubr.bf16.gmra.mrb[0].mxu0 %v873
        %v1333 = vpop.f32.mrb[0].mxu0
        %v1334 = vadd.f32 %v384, %v1333
        %v1335 = vpop.f32.mrb[0].mxu0
        %v1336 = vpop.f32.mrb[0].mxu0
        %v1337 = vadd.f32 %v384, %v1336
        %v1338 = vpop.f32.mrb[0].mxu0
        %1339 = vmatprep.mubr.bf16.mxu0 0
        %1340 = vmatmul.mubr.bf16.gmra.mrb[0].mxu0 %v876
        %v1341 = vpop.f32.mrb[0].mxu0
        %v1342 = vadd.f32 %v384, %v1341
        %v1343 = vpop.f32.mrb[0].mxu0
        %v1344 = vpop.f32.mrb[0].mxu0
        %v1345 = vadd.f32 %v384, %v1344
        %v1346 = vpop.f32.mrb[0].mxu0
        %1347 = vmatprep.mubr.bf16.mxu0 0
        %1348 = vmatmul.mubr.bf16.gmra.mrb[0].mxu0 %v879
        %v1349 = vpop.f32.mrb[0].mxu0
        %v1350 = vadd.f32 %v384, %v1349
        %v1351 = vpop.f32.mrb[0].mxu0
        %v1352 = vpop.f32.mrb[0].mxu0
        %v1353 = vadd.f32 %v384, %v1352
        %v1354 = vpop.f32.mrb[0].mxu0
        %1355 = vmatprep.mubr.bf16.mxu0 0
        %1356 = vmatmul.mubr.bf16.gmra.mrb[0].mxu0 %v882
        %v1357 = vpop.f32.mrb[0].mxu0
        %v1358 = vadd.f32 %v384, %v1357
        %v1359 = vpop.f32.mrb[0].mxu0
        %v1360 = vpop.f32.mrb[0].mxu0
        %v1361 = vadd.f32 %v384, %v1360
        %v1362 = vpop.f32.mrb[0].mxu0
        %1363 = vmatprep.mubr.bf16.mxu0 0
        %1364 = vmatmul.mubr.bf16.gmra.mrb[0].mxu0 %v885
        %v1365 = vpop.f32.mrb[0].mxu0
        %v1366 = vadd.f32 %v384, %v1365
        %v1367 = vpop.f32.mrb[0].mxu0
        %v1368 = vpop.f32.mrb[0].mxu0
        %v1369 = vadd.f32 %v384, %v1368
        %v1370 = vpop.f32.mrb[0].mxu0
        %1371 = vmatprep.mubr.bf16.mxu0 0
        %1372 = vmatmul.mubr.bf16.gmra.mrb[0].mxu0 %v888
        %v1373 = vpop.f32.mrb[0].mxu0
        %v1374 = vadd.f32 %v384, %v1373
        %v1375 = vpop.f32.mrb[0].mxu0
        %v1376 = vpop.f32.mrb[0].mxu0
        %v1377 = vadd.f32 %v384, %v1376
        %v1378 = vpop.f32.mrb[0].mxu0
        %1379 = vmatprep.mubr.bf16.mxu0 0
        %1380 = vmatmul.mubr.bf16.gmra.mrb[0].mxu0 %v891
        %v1381 = vpop.f32.mrb[0].mxu0
        %v1382 = vadd.f32 %v384, %v1381
        %v1383 = vpop.f32.mrb[0].mxu0
        %v1384 = vpop.f32.mrb[0].mxu0
        %v1385 = vadd.f32 %v384, %v1384
        %v1386 = vpop.f32.mrb[0].mxu0
        %1387 = vmatprep.mubr.bf16.mxu0 0
        %1388 = vmatmul.mubr.bf16.gmra.mrb[0].mxu0 %v894
        %v1389 = vpop.f32.mrb[0].mxu0
        %v1390 = vadd.f32 %v384, %v1389
        %v1391 = vpop.f32.mrb[0].mxu0
        %v1392 = vpop.f32.mrb[0].mxu0
        %v1393 = vadd.f32 %v384, %v1392
        %v1394 = vpop.f32.mrb[0].mxu0
        %1395 = vmatprep.mubr.bf16.mxu0 0
        %1396 = vmatmul.mubr.bf16.gmra.mrb[0].mxu0 %v897
        %v1397 = vpop.f32.mrb[0].mxu0
        %v1398 = vadd.f32 %v384, %v1397
        %v1399 = vpop.f32.mrb[0].mxu0
        %v1400 = vpop.f32.mrb[0].mxu0
        %v1401 = vadd.f32 %v384, %v1400
        %v1402 = vpop.f32.mrb[0].mxu0
        %1403 = vmatprep.mubr.bf16.mxu0 0
        %1404 = vmatmul.mubr.bf16.gmra.mrb[0].mxu0 %v900
        %v1405 = vpop.f32.mrb[0].mxu0
        %v1406 = vadd.f32 %v384, %v1405
        %v1407 = vpop.f32.mrb[0].mxu0
        %v1408 = vpop.f32.mrb[0].mxu0
        %v1409 = vadd.f32 %v384, %v1408
        %v1410 = vpop.f32.mrb[0].mxu0
        %1411 = vmatprep.mubr.bf16.mxu0 0
        %1412 = vmatmul.mubr.bf16.gmra.mrb[0].mxu0 %v903
        %v1413 = vpop.f32.mrb[0].mxu0
        %v1414 = vadd.f32 %v384, %v1413
        %v1415 = vpop.f32.mrb[0].mxu0
        %v1416 = vpop.f32.mrb[0].mxu0
        %v1417 = vadd.f32 %v384, %v1416
        %v1418 = vpop.f32.mrb[0].mxu0
        %1419 = vmatprep.mubr.bf16.mxu0 0
        %1420 = vmatmul.mubr.bf16.gmra.mrb[0].mxu0 %v906
        %v1421 = vpop.f32.mrb[0].mxu0
        %v1422 = vadd.f32 %v384, %v1421
        %v1423 = vpop.f32.mrb[0].mxu0
        %v1424 = vpop.f32.mrb[0].mxu0
        %v1425 = vadd.f32 %v384, %v1424
        %v1426 = vpop.f32.mrb[0].mxu0
        %1427 = vmatprep.mubr.bf16.mxu0 0
        %1428 = vmatmul.mubr.bf16.gmra.mrb[0].mxu0 %v909
        %v1429 = vpop.f32.mrb[0].mxu0
        %v1430 = vadd.f32 %v384, %v1429
        %v1431 = vpop.f32.mrb[0].mxu0
        %v1432 = vpop.f32.mrb[0].mxu0
        %v1433 = vadd.f32 %v384, %v1432
        %v1434 = vpop.f32.mrb[0].mxu0
        %1435 = vmatprep.mubr.bf16.mxu0 0
        %1436 = vmatmul.mubr.bf16.gmra.mrb[0].mxu0 %v912
        %v1437 = vpop.f32.mrb[0].mxu0
        %v1438 = vadd.f32 %v384, %v1437
        %v1439 = vpop.f32.mrb[0].mxu0
        %v1440 = vpop.f32.mrb[0].mxu0
        %v1441 = vadd.f32 %v384, %v1440
        %v1442 = vpop.f32.mrb[0].mxu0
        %1443 = vmatprep.mubr.bf16.mxu0 0
        %1444 = vmatmul.mubr.bf16.gmra.mrb[0].mxu0 %v915
        %v1445 = vpop.f32.mrb[0].mxu0
        %v1446 = vadd.f32 %v384, %v1445
        %v1447 = vpop.f32.mrb[0].mxu0
        %v1448 = vpop.f32.mrb[0].mxu0
        %v1449 = vadd.f32 %v384, %v1448
        %v1450 = vpop.f32.mrb[0].mxu0
        %1451 = vmatprep.mubr.bf16.mxu0 0
        %1452 = vmatmul.mubr.bf16.gmra.mrb[0].mxu0 %v918
        %v1453 = vpop.f32.mrb[0].mxu0
        %v1454 = vadd.f32 %v384, %v1453
        %v1455 = vpop.f32.mrb[0].mxu0
        %v1456 = vpop.f32.mrb[0].mxu0
        %v1457 = vadd.f32 %v384, %v1456
        %v1458 = vpop.f32.mrb[0].mxu0
        %1459 = vmatprep.mubr.bf16.mxu0 0
        %1460 = vmatmul.mubr.bf16.gmra.mrb[0].mxu0 %v921
        %v1461 = vpop.f32.mrb[0].mxu0
        %v1462 = vadd.f32 %v384, %v1461
        %v1463 = vpop.f32.mrb[0].mxu0
        %v1464 = vpop.f32.mrb[0].mxu0
        %v1465 = vadd.f32 %v384, %v1464
        %v1466 = vpop.f32.mrb[0].mxu0
        %1467 = vdwg.mxu0
        %v1468 = vmax.f32 %v958, 0.0
        %v1469 = vmax.f32 %v961, 0.0
        %v1470 = vmax.f32 %v966, 0.0
        %v1471 = vmax.f32 %v969, 0.0
        %v1472 = vmax.f32 %v974, 0.0
        %v1473 = vmax.f32 %v977, 0.0
        %v1474 = vmax.f32 %v982, 0.0
        %v1475 = vmax.f32 %v985, 0.0
        %v1476 = vmax.f32 %v990, 0.0
        %v1477 = vmax.f32 %v993, 0.0
        %v1478 = vmax.f32 %v998, 0.0
        %v1479 = vmax.f32 %v1001, 0.0
        %v1480 = vmax.f32 %v1006, 0.0
        %v1481 = vmax.f32 %v1009, 0.0
        %v1482 = vmax.f32 %v1014, 0.0
        %v1483 = vmax.f32 %v1017, 0.0
        %v1484 = vmax.f32 %v1022, 0.0
        %v1485 = vmax.f32 %v1025, 0.0
        %v1486 = vmax.f32 %v1030, 0.0
        %v1487 = vmax.f32 %v1033, 0.0
        %v1488 = vmax.f32 %v1038, 0.0
        %v1489 = vmax.f32 %v1041, 0.0
        %v1490 = vmax.f32 %v1046, 0.0
        %v1491 = vmax.f32 %v1049, 0.0
        %v1492 = vmax.f32 %v1054, 0.0
        %v1493 = vmax.f32 %v1057, 0.0
        %v1494 = vmax.f32 %v1062, 0.0
        %v1495 = vmax.f32 %v1065, 0.0
        %v1496 = vmax.f32 %v1070, 0.0
        %v1497 = vmax.f32 %v1073, 0.0
        %v1498 = vmax.f32 %v1078, 0.0
        %v1499 = vmax.f32 %v1081, 0.0
        %v1500 = vmax.f32 %v1086, 0.0
        %v1501 = vmax.f32 %v1089, 0.0
        %v1502 = vmax.f32 %v1094, 0.0
        %v1503 = vmax.f32 %v1097, 0.0
        %v1504 = vmax.f32 %v1102, 0.0
        %v1505 = vmax.f32 %v1105, 0.0
        %v1506 = vmax.f32 %v1110, 0.0
        %v1507 = vmax.f32 %v1113, 0.0
        %v1508 = vmax.f32 %v1118, 0.0
        %v1509 = vmax.f32 %v1121, 0.0
        %v1510 = vmax.f32 %v1126, 0.0
        %v1511 = vmax.f32 %v1129, 0.0
        %v1512 = vmax.f32 %v1134, 0.0
        %v1513 = vmax.f32 %v1137, 0.0
        %v1514 = vmax.f32 %v1142, 0.0
        %v1515 = vmax.f32 %v1145, 0.0
        %v1516 = vmax.f32 %v1150, 0.0
        %v1517 = vmax.f32 %v1153, 0.0
        %v1518 = vmax.f32 %v1158, 0.0
        %v1519 = vmax.f32 %v1161, 0.0
        %v1520 = vmax.f32 %v1166, 0.0
        %v1521 = vmax.f32 %v1169, 0.0
        %v1522 = vmax.f32 %v1174, 0.0
        %v1523 = vmax.f32 %v1177, 0.0
        %v1524 = vmax.f32 %v1182, 0.0
        %v1525 = vmax.f32 %v1185, 0.0
        %v1526 = vmax.f32 %v1190, 0.0
        %v1527 = vmax.f32 %v1193, 0.0
        %v1528 = vmax.f32 %v1198, 0.0
        %v1529 = vmax.f32 %v1201, 0.0
        %v1530 = vmax.f32 %v1206, 0.0
        %v1531 = vmax.f32 %v1209, 0.0
        %v1532 = vmax.f32 %v1214, 0.0
        %v1533 = vmax.f32 %v1217, 0.0
        %v1534 = vmax.f32 %v1222, 0.0
        %v1535 = vmax.f32 %v1225, 0.0
        %v1536 = vmax.f32 %v1230, 0.0
        %v1537 = vmax.f32 %v1233, 0.0
        %v1538 = vmax.f32 %v1238, 0.0
        %v1539 = vmax.f32 %v1241, 0.0
        %v1540 = vmax.f32 %v1246, 0.0
        %v1541 = vmax.f32 %v1249, 0.0
        %v1542 = vmax.f32 %v1254, 0.0
        %v1543 = vmax.f32 %v1257, 0.0
        %v1544 = vmax.f32 %v1262, 0.0
        %v1545 = vmax.f32 %v1265, 0.0
        %v1546 = vmax.f32 %v1270, 0.0
        %v1547 = vmax.f32 %v1273, 0.0
        %v1548 = vmax.f32 %v1278, 0.0
        %v1549 = vmax.f32 %v1281, 0.0
        %v1550 = vmax.f32 %v1286, 0.0
        %v1551 = vmax.f32 %v1289, 0.0
        %v1552 = vmax.f32 %v1294, 0.0
        %v1553 = vmax.f32 %v1297, 0.0
        %v1554 = vmax.f32 %v1302, 0.0
        %v1555 = vmax.f32 %v1305, 0.0
        %v1556 = vmax.f32 %v1310, 0.0
        %v1557 = vmax.f32 %v1313, 0.0
        %v1558 = vmax.f32 %v1318, 0.0
        %v1559 = vmax.f32 %v1321, 0.0
        %v1560 = vmax.f32 %v1326, 0.0
        %v1561 = vmax.f32 %v1329, 0.0
        %v1562 = vmax.f32 %v1334, 0.0
        %v1563 = vmax.f32 %v1337, 0.0
        %v1564 = vmax.f32 %v1342, 0.0
        %v1565 = vmax.f32 %v1345, 0.0
        %v1566 = vmax.f32 %v1350, 0.0
        %v1567 = vmax.f32 %v1353, 0.0
        %v1568 = vmax.f32 %v1358, 0.0
        %v1569 = vmax.f32 %v1361, 0.0
        %v1570 = vmax.f32 %v1366, 0.0
        %v1571 = vmax.f32 %v1369, 0.0
        %v1572 = vmax.f32 %v1374, 0.0
        %v1573 = vmax.f32 %v1377, 0.0
        %v1574 = vmax.f32 %v1382, 0.0
        %v1575 = vmax.f32 %v1385, 0.0
        %v1576 = vmax.f32 %v1390, 0.0
        %v1577 = vmax.f32 %v1393, 0.0
        %v1578 = vmax.f32 %v1398, 0.0
        %v1579 = vmax.f32 %v1401, 0.0
        %v1580 = vmax.f32 %v1406, 0.0
        %v1581 = vmax.f32 %v1409, 0.0
        %v1582 = vmax.f32 %v1414, 0.0
        %v1583 = vmax.f32 %v1417, 0.0
        %v1584 = vmax.f32 %v1422, 0.0
        %v1585 = vmax.f32 %v1425, 0.0
        %v1586 = vmax.f32 %v1430, 0.0
        %v1587 = vmax.f32 %v1433, 0.0
        %v1588 = vmax.f32 %v1438, 0.0
        %v1589 = vmax.f32 %v1441, 0.0
        %v1590 = vmax.f32 %v1446, 0.0
        %v1591 = vmax.f32 %v1449, 0.0
        %v1592 = vmax.f32 %v1454, 0.0
        %v1593 = vmax.f32 %v1457, 0.0
        %v1594 = vmax.f32 %v1462, 0.0
        %v1595 = vmax.f32 %v1465, 0.0
        %v1596 = vld [vmem:[%s4] sm:$0x1]
        %v1598 = vlaneseq
        %v1599 = vshrl.u32 %v1598, 7
        %v1600 = vsub.s32 0, %v1599
        %v1601 = vrot.slane %v1596, %v1600
        %v1603 = vmul.f32 %v1468, %v1601
        %v1604 = vmul.f32 %v1469, %v1601
        %v1605 = vmul.f32 %v1470, %v1601
        %v1606 = vmul.f32 %v1471, %v1601
        %v1607 = vmul.f32 %v1472, %v1601
        %v1608 = vmul.f32 %v1473, %v1601
        %v1609 = vmul.f32 %v1474, %v1601
        %v1610 = vmul.f32 %v1475, %v1601
        %v1611 = vmul.f32 %v1476, %v1601
        %v1612 = vmul.f32 %v1477, %v1601
        %v1613 = vmul.f32 %v1478, %v1601
        %v1614 = vmul.f32 %v1479, %v1601
        %v1615 = vmul.f32 %v1480, %v1601
        %v1616 = vmul.f32 %v1481, %v1601
        %v1617 = vmul.f32 %v1482, %v1601
        %v1618 = vmul.f32 %v1483, %v1601
        %v1619 = vmul.f32 %v1484, %v1601
        %v1620 = vmul.f32 %v1485, %v1601
        %v1621 = vmul.f32 %v1486, %v1601
        %v1622 = vmul.f32 %v1487, %v1601
        %v1623 = vmul.f32 %v1488, %v1601
        %v1624 = vmul.f32 %v1489, %v1601
        %v1625 = vmul.f32 %v1490, %v1601
        %v1626 = vmul.f32 %v1491, %v1601
        %v1627 = vmul.f32 %v1492, %v1601
        %v1628 = vmul.f32 %v1493, %v1601
        %v1629 = vmul.f32 %v1494, %v1601
        %v1630 = vmul.f32 %v1495, %v1601
        %v1631 = vmul.f32 %v1496, %v1601
        %v1632 = vmul.f32 %v1497, %v1601
        %v1633 = vmul.f32 %v1498, %v1601
        %v1634 = vmul.f32 %v1499, %v1601
        %v1635 = vmul.f32 %v1500, %v1601
        %v1636 = vmul.f32 %v1501, %v1601
        %v1637 = vmul.f32 %v1502, %v1601
        %v1638 = vmul.f32 %v1503, %v1601
        %v1639 = vmul.f32 %v1504, %v1601
        %v1640 = vmul.f32 %v1505, %v1601
        %v1641 = vmul.f32 %v1506, %v1601
        %v1642 = vmul.f32 %v1507, %v1601
        %v1643 = vmul.f32 %v1508, %v1601
        %v1644 = vmul.f32 %v1509, %v1601
        %v1645 = vmul.f32 %v1510, %v1601
        %v1646 = vmul.f32 %v1511, %v1601
        %v1647 = vmul.f32 %v1512, %v1601
        %v1648 = vmul.f32 %v1513, %v1601
        %v1649 = vmul.f32 %v1514, %v1601
        %v1650 = vmul.f32 %v1515, %v1601
        %v1651 = vmul.f32 %v1516, %v1601
        %v1652 = vmul.f32 %v1517, %v1601
        %v1653 = vmul.f32 %v1518, %v1601
        %v1654 = vmul.f32 %v1519, %v1601
        %v1655 = vmul.f32 %v1520, %v1601
        %v1656 = vmul.f32 %v1521, %v1601
        %v1657 = vmul.f32 %v1522, %v1601
        %v1658 = vmul.f32 %v1523, %v1601
        %v1659 = vmul.f32 %v1524, %v1601
        %v1660 = vmul.f32 %v1525, %v1601
        %v1661 = vmul.f32 %v1526, %v1601
        %v1662 = vmul.f32 %v1527, %v1601
        %v1663 = vmul.f32 %v1528, %v1601
        %v1664 = vmul.f32 %v1529, %v1601
        %v1665 = vmul.f32 %v1530, %v1601
        %v1666 = vmul.f32 %v1531, %v1601
        %v1667 = vmul.f32 %v1532, %v1601
        %v1668 = vmul.f32 %v1533, %v1601
        %v1669 = vmul.f32 %v1534, %v1601
        %v1670 = vmul.f32 %v1535, %v1601
        %v1671 = vmul.f32 %v1536, %v1601
        %v1672 = vmul.f32 %v1537, %v1601
        %v1673 = vmul.f32 %v1538, %v1601
        %v1674 = vmul.f32 %v1539, %v1601
        %v1675 = vmul.f32 %v1540, %v1601
        %v1676 = vmul.f32 %v1541, %v1601
        %v1677 = vmul.f32 %v1542, %v1601
        %v1678 = vmul.f32 %v1543, %v1601
        %v1679 = vmul.f32 %v1544, %v1601
        %v1680 = vmul.f32 %v1545, %v1601
        %v1681 = vmul.f32 %v1546, %v1601
        %v1682 = vmul.f32 %v1547, %v1601
        %v1683 = vmul.f32 %v1548, %v1601
        %v1684 = vmul.f32 %v1549, %v1601
        %v1685 = vmul.f32 %v1550, %v1601
        %v1686 = vmul.f32 %v1551, %v1601
        %v1687 = vmul.f32 %v1552, %v1601
        %v1688 = vmul.f32 %v1553, %v1601
        %v1689 = vmul.f32 %v1554, %v1601
        %v1690 = vmul.f32 %v1555, %v1601
        %v1691 = vmul.f32 %v1556, %v1601
        %v1692 = vmul.f32 %v1557, %v1601
        %v1693 = vmul.f32 %v1558, %v1601
        %v1694 = vmul.f32 %v1559, %v1601
        %v1695 = vmul.f32 %v1560, %v1601
        %v1696 = vmul.f32 %v1561, %v1601
        %v1697 = vmul.f32 %v1562, %v1601
        %v1698 = vmul.f32 %v1563, %v1601
        %v1699 = vmul.f32 %v1564, %v1601
        %v1700 = vmul.f32 %v1565, %v1601
        %v1701 = vmul.f32 %v1566, %v1601
        %v1702 = vmul.f32 %v1567, %v1601
        %v1703 = vmul.f32 %v1568, %v1601
        %v1704 = vmul.f32 %v1569, %v1601
        %v1705 = vmul.f32 %v1570, %v1601
        %v1706 = vmul.f32 %v1571, %v1601
        %v1707 = vmul.f32 %v1572, %v1601
        %v1708 = vmul.f32 %v1573, %v1601
        %v1709 = vmul.f32 %v1574, %v1601
        %v1710 = vmul.f32 %v1575, %v1601
        %v1711 = vmul.f32 %v1576, %v1601
        %v1712 = vmul.f32 %v1577, %v1601
        %v1713 = vmul.f32 %v1578, %v1601
        %v1714 = vmul.f32 %v1579, %v1601
        %v1715 = vmul.f32 %v1580, %v1601
        %v1716 = vmul.f32 %v1581, %v1601
        %v1717 = vmul.f32 %v1582, %v1601
        %v1718 = vmul.f32 %v1583, %v1601
        %v1719 = vmul.f32 %v1584, %v1601
        %v1720 = vmul.f32 %v1585, %v1601
        %v1721 = vmul.f32 %v1586, %v1601
        %v1722 = vmul.f32 %v1587, %v1601
        %v1723 = vmul.f32 %v1588, %v1601
        %v1724 = vmul.f32 %v1589, %v1601
        %v1725 = vmul.f32 %v1590, %v1601
        %v1726 = vmul.f32 %v1591, %v1601
        %v1727 = vmul.f32 %v1592, %v1601
        %v1728 = vmul.f32 %v1593, %v1601
        %v1729 = vmul.f32 %v1594, %v1601
        %v1730 = vmul.f32 %v1595, %v1601
        %vm1731 = vcmask 261120
        %v1732 = vsel %vm1731, %v1603, 0.0
        %1733 = vadd.xlane.f32.xlu0 %v1732
        %v1734 = vpop.xlane.xlu0 %1733
        %v1735 = vsel %vm1731, %v1604, 0.0
        %1736 = vadd.xlane.f32.xlu0 %v1735
        %v1737 = vpop.xlane.xlu0 %1736
        %v1738 = vsel %vm1731, %v1605, 0.0
        %1739 = vadd.xlane.f32.xlu0 %v1738
        %v1740 = vpop.xlane.xlu0 %1739
        %v1741 = vsel %vm1731, %v1606, 0.0
        %1742 = vadd.xlane.f32.xlu0 %v1741
        %v1743 = vpop.xlane.xlu0 %1742
        %v1744 = vsel %vm1731, %v1607, 0.0
        %1745 = vadd.xlane.f32.xlu0 %v1744
        %v1746 = vpop.xlane.xlu0 %1745
        %v1747 = vsel %vm1731, %v1608, 0.0
        %1748 = vadd.xlane.f32.xlu0 %v1747
        %v1749 = vpop.xlane.xlu0 %1748
        %v1750 = vsel %vm1731, %v1609, 0.0
        %1751 = vadd.xlane.f32.xlu0 %v1750
        %v1752 = vpop.xlane.xlu0 %1751
        %v1753 = vsel %vm1731, %v1610, 0.0
        %1754 = vadd.xlane.f32.xlu0 %v1753
        %v1755 = vpop.xlane.xlu0 %1754
        %v1756 = vsel %vm1731, %v1611, 0.0
        %1757 = vadd.xlane.f32.xlu0 %v1756
        %v1758 = vpop.xlane.xlu0 %1757
        %v1759 = vsel %vm1731, %v1612, 0.0
        %1760 = vadd.xlane.f32.xlu0 %v1759
        %v1761 = vpop.xlane.xlu0 %1760
        %v1762 = vsel %vm1731, %v1613, 0.0
        %1763 = vadd.xlane.f32.xlu0 %v1762
        %v1764 = vpop.xlane.xlu0 %1763
        %v1765 = vsel %vm1731, %v1614, 0.0
        %1766 = vadd.xlane.f32.xlu0 %v1765
        %v1767 = vpop.xlane.xlu0 %1766
        %v1768 = vsel %vm1731, %v1615, 0.0
        %1769 = vadd.xlane.f32.xlu0 %v1768
        %v1770 = vpop.xlane.xlu0 %1769
        %v1771 = vsel %vm1731, %v1616, 0.0
        %1772 = vadd.xlane.f32.xlu0 %v1771
        %v1773 = vpop.xlane.xlu0 %1772
        %v1774 = vsel %vm1731, %v1617, 0.0
        %1775 = vadd.xlane.f32.xlu0 %v1774
        %v1776 = vpop.xlane.xlu0 %1775
        %v1777 = vsel %vm1731, %v1618, 0.0
        %1778 = vadd.xlane.f32.xlu0 %v1777
        %v1779 = vpop.xlane.xlu0 %1778
        %v1780 = vsel %vm1731, %v1619, 0.0
        %1781 = vadd.xlane.f32.xlu0 %v1780
        %v1782 = vpop.xlane.xlu0 %1781
        %v1783 = vsel %vm1731, %v1620, 0.0
        %1784 = vadd.xlane.f32.xlu0 %v1783
        %v1785 = vpop.xlane.xlu0 %1784
        %v1786 = vsel %vm1731, %v1621, 0.0
        %1787 = vadd.xlane.f32.xlu0 %v1786
        %v1788 = vpop.xlane.xlu0 %1787
        %v1789 = vsel %vm1731, %v1622, 0.0
        %1790 = vadd.xlane.f32.xlu0 %v1789
        %v1791 = vpop.xlane.xlu0 %1790
        %v1792 = vsel %vm1731, %v1623, 0.0
        %1793 = vadd.xlane.f32.xlu0 %v1792
        %v1794 = vpop.xlane.xlu0 %1793
        %v1795 = vsel %vm1731, %v1624, 0.0
        %1796 = vadd.xlane.f32.xlu0 %v1795
        %v1797 = vpop.xlane.xlu0 %1796
        %v1798 = vsel %vm1731, %v1625, 0.0
        %1799 = vadd.xlane.f32.xlu0 %v1798
        %v1800 = vpop.xlane.xlu0 %1799
        %v1801 = vsel %vm1731, %v1626, 0.0
        %1802 = vadd.xlane.f32.xlu0 %v1801
        %v1803 = vpop.xlane.xlu0 %1802
        %v1804 = vsel %vm1731, %v1627, 0.0
        %1805 = vadd.xlane.f32.xlu0 %v1804
        %v1806 = vpop.xlane.xlu0 %1805
        %v1807 = vsel %vm1731, %v1628, 0.0
        %1808 = vadd.xlane.f32.xlu0 %v1807
        %v1809 = vpop.xlane.xlu0 %1808
        %v1810 = vsel %vm1731, %v1629, 0.0
        %1811 = vadd.xlane.f32.xlu0 %v1810
        %v1812 = vpop.xlane.xlu0 %1811
        %v1813 = vsel %vm1731, %v1630, 0.0
        %1814 = vadd.xlane.f32.xlu0 %v1813
        %v1815 = vpop.xlane.xlu0 %1814
        %v1816 = vsel %vm1731, %v1631, 0.0
        %1817 = vadd.xlane.f32.xlu0 %v1816
        %v1818 = vpop.xlane.xlu0 %1817
        %v1819 = vsel %vm1731, %v1632, 0.0
        %1820 = vadd.xlane.f32.xlu0 %v1819
        %v1821 = vpop.xlane.xlu0 %1820
        %v1822 = vsel %vm1731, %v1633, 0.0
        %1823 = vadd.xlane.f32.xlu0 %v1822
        %v1824 = vpop.xlane.xlu0 %1823
        %v1825 = vsel %vm1731, %v1634, 0.0
        %1826 = vadd.xlane.f32.xlu0 %v1825
        %v1827 = vpop.xlane.xlu0 %1826
        %v1828 = vsel %vm1731, %v1635, 0.0
        %1829 = vadd.xlane.f32.xlu0 %v1828
        %v1830 = vpop.xlane.xlu0 %1829
        %v1831 = vsel %vm1731, %v1636, 0.0
        %1832 = vadd.xlane.f32.xlu0 %v1831
        %v1833 = vpop.xlane.xlu0 %1832
        %v1834 = vsel %vm1731, %v1637, 0.0
        %1835 = vadd.xlane.f32.xlu0 %v1834
        %v1836 = vpop.xlane.xlu0 %1835
        %v1837 = vsel %vm1731, %v1638, 0.0
        %1838 = vadd.xlane.f32.xlu0 %v1837
        %v1839 = vpop.xlane.xlu0 %1838
        %v1840 = vsel %vm1731, %v1639, 0.0
        %1841 = vadd.xlane.f32.xlu0 %v1840
        %v1842 = vpop.xlane.xlu0 %1841
        %v1843 = vsel %vm1731, %v1640, 0.0
        %1844 = vadd.xlane.f32.xlu0 %v1843
        %v1845 = vpop.xlane.xlu0 %1844
        %v1846 = vsel %vm1731, %v1641, 0.0
        %1847 = vadd.xlane.f32.xlu0 %v1846
        %v1848 = vpop.xlane.xlu0 %1847
        %v1849 = vsel %vm1731, %v1642, 0.0
        %1850 = vadd.xlane.f32.xlu0 %v1849
        %v1851 = vpop.xlane.xlu0 %1850
        %v1852 = vsel %vm1731, %v1643, 0.0
        %1853 = vadd.xlane.f32.xlu0 %v1852
        %v1854 = vpop.xlane.xlu0 %1853
        %v1855 = vsel %vm1731, %v1644, 0.0
        %1856 = vadd.xlane.f32.xlu0 %v1855
        %v1857 = vpop.xlane.xlu0 %1856
        %v1858 = vsel %vm1731, %v1645, 0.0
        %1859 = vadd.xlane.f32.xlu0 %v1858
        %v1860 = vpop.xlane.xlu0 %1859
        %v1861 = vsel %vm1731, %v1646, 0.0
        %1862 = vadd.xlane.f32.xlu0 %v1861
        %v1863 = vpop.xlane.xlu0 %1862
        %v1864 = vsel %vm1731, %v1647, 0.0
        %1865 = vadd.xlane.f32.xlu0 %v1864
        %v1866 = vpop.xlane.xlu0 %1865
        %v1867 = vsel %vm1731, %v1648, 0.0
        %1868 = vadd.xlane.f32.xlu0 %v1867
        %v1869 = vpop.xlane.xlu0 %1868
        %v1870 = vsel %vm1731, %v1649, 0.0
        %1871 = vadd.xlane.f32.xlu0 %v1870
        %v1872 = vpop.xlane.xlu0 %1871
        %v1873 = vsel %vm1731, %v1650, 0.0
        %1874 = vadd.xlane.f32.xlu0 %v1873
        %v1875 = vpop.xlane.xlu0 %1874
        %v1876 = vsel %vm1731, %v1651, 0.0
        %1877 = vadd.xlane.f32.xlu0 %v1876
        %v1878 = vpop.xlane.xlu0 %1877
        %v1879 = vsel %vm1731, %v1652, 0.0
        %1880 = vadd.xlane.f32.xlu0 %v1879
        %v1881 = vpop.xlane.xlu0 %1880
        %v1882 = vsel %vm1731, %v1653, 0.0
        %1883 = vadd.xlane.f32.xlu0 %v1882
        %v1884 = vpop.xlane.xlu0 %1883
        %v1885 = vsel %vm1731, %v1654, 0.0
        %1886 = vadd.xlane.f32.xlu0 %v1885
        %v1887 = vpop.xlane.xlu0 %1886
        %v1888 = vsel %vm1731, %v1655, 0.0
        %1889 = vadd.xlane.f32.xlu0 %v1888
        %v1890 = vpop.xlane.xlu0 %1889
        %v1891 = vsel %vm1731, %v1656, 0.0
        %1892 = vadd.xlane.f32.xlu0 %v1891
        %v1893 = vpop.xlane.xlu0 %1892
        %v1894 = vsel %vm1731, %v1657, 0.0
        %1895 = vadd.xlane.f32.xlu0 %v1894
        %v1896 = vpop.xlane.xlu0 %1895
        %v1897 = vsel %vm1731, %v1658, 0.0
        %1898 = vadd.xlane.f32.xlu0 %v1897
        %v1899 = vpop.xlane.xlu0 %1898
        %v1900 = vsel %vm1731, %v1659, 0.0
        %1901 = vadd.xlane.f32.xlu0 %v1900
        %v1902 = vpop.xlane.xlu0 %1901
        %v1903 = vsel %vm1731, %v1660, 0.0
        %1904 = vadd.xlane.f32.xlu0 %v1903
        %v1905 = vpop.xlane.xlu0 %1904
        %v1906 = vsel %vm1731, %v1661, 0.0
        %1907 = vadd.xlane.f32.xlu0 %v1906
        %v1908 = vpop.xlane.xlu0 %1907
        %v1909 = vsel %vm1731, %v1662, 0.0
        %1910 = vadd.xlane.f32.xlu0 %v1909
        %v1911 = vpop.xlane.xlu0 %1910
        %v1912 = vsel %vm1731, %v1663, 0.0
        %1913 = vadd.xlane.f32.xlu0 %v1912
        %v1914 = vpop.xlane.xlu0 %1913
        %v1915 = vsel %vm1731, %v1664, 0.0
        %1916 = vadd.xlane.f32.xlu0 %v1915
        %v1917 = vpop.xlane.xlu0 %1916
        %v1918 = vsel %vm1731, %v1665, 0.0
        %1919 = vadd.xlane.f32.xlu0 %v1918
        %v1920 = vpop.xlane.xlu0 %1919
        %v1921 = vsel %vm1731, %v1666, 0.0
        %1922 = vadd.xlane.f32.xlu0 %v1921
        %v1923 = vpop.xlane.xlu0 %1922
        %v1924 = vsel %vm1731, %v1667, 0.0
        %1925 = vadd.xlane.f32.xlu0 %v1924
        %v1926 = vpop.xlane.xlu0 %1925
        %v1927 = vsel %vm1731, %v1668, 0.0
        %1928 = vadd.xlane.f32.xlu0 %v1927
        %v1929 = vpop.xlane.xlu0 %1928
        %v1930 = vsel %vm1731, %v1669, 0.0
        %1931 = vadd.xlane.f32.xlu0 %v1930
        %v1932 = vpop.xlane.xlu0 %1931
        %v1933 = vsel %vm1731, %v1670, 0.0
        %1934 = vadd.xlane.f32.xlu0 %v1933
        %v1935 = vpop.xlane.xlu0 %1934
        %v1936 = vsel %vm1731, %v1671, 0.0
        %1937 = vadd.xlane.f32.xlu0 %v1936
        %v1938 = vpop.xlane.xlu0 %1937
        %v1939 = vsel %vm1731, %v1672, 0.0
        %1940 = vadd.xlane.f32.xlu0 %v1939
        %v1941 = vpop.xlane.xlu0 %1940
        %v1942 = vsel %vm1731, %v1673, 0.0
        %1943 = vadd.xlane.f32.xlu0 %v1942
        %v1944 = vpop.xlane.xlu0 %1943
        %v1945 = vsel %vm1731, %v1674, 0.0
        %1946 = vadd.xlane.f32.xlu0 %v1945
        %v1947 = vpop.xlane.xlu0 %1946
        %v1948 = vsel %vm1731, %v1675, 0.0
        %1949 = vadd.xlane.f32.xlu0 %v1948
        %v1950 = vpop.xlane.xlu0 %1949
        %v1951 = vsel %vm1731, %v1676, 0.0
        %1952 = vadd.xlane.f32.xlu0 %v1951
        %v1953 = vpop.xlane.xlu0 %1952
        %v1954 = vsel %vm1731, %v1677, 0.0
        %1955 = vadd.xlane.f32.xlu0 %v1954
        %v1956 = vpop.xlane.xlu0 %1955
        %v1957 = vsel %vm1731, %v1678, 0.0
        %1958 = vadd.xlane.f32.xlu0 %v1957
        %v1959 = vpop.xlane.xlu0 %1958
        %v1960 = vsel %vm1731, %v1679, 0.0
        %1961 = vadd.xlane.f32.xlu0 %v1960
        %v1962 = vpop.xlane.xlu0 %1961
        %v1963 = vsel %vm1731, %v1680, 0.0
        %1964 = vadd.xlane.f32.xlu0 %v1963
        %v1965 = vpop.xlane.xlu0 %1964
        %v1966 = vsel %vm1731, %v1681, 0.0
        %1967 = vadd.xlane.f32.xlu0 %v1966
        %v1968 = vpop.xlane.xlu0 %1967
        %v1969 = vsel %vm1731, %v1682, 0.0
        %1970 = vadd.xlane.f32.xlu0 %v1969
        %v1971 = vpop.xlane.xlu0 %1970
        %v1972 = vsel %vm1731, %v1683, 0.0
        %1973 = vadd.xlane.f32.xlu0 %v1972
        %v1974 = vpop.xlane.xlu0 %1973
        %v1975 = vsel %vm1731, %v1684, 0.0
        %1976 = vadd.xlane.f32.xlu0 %v1975
        %v1977 = vpop.xlane.xlu0 %1976
        %v1978 = vsel %vm1731, %v1685, 0.0
        %1979 = vadd.xlane.f32.xlu0 %v1978
        %v1980 = vpop.xlane.xlu0 %1979
        %v1981 = vsel %vm1731, %v1686, 0.0
        %1982 = vadd.xlane.f32.xlu0 %v1981
        %v1983 = vpop.xlane.xlu0 %1982
        %v1984 = vsel %vm1731, %v1687, 0.0
        %1985 = vadd.xlane.f32.xlu0 %v1984
        %v1986 = vpop.xlane.xlu0 %1985
        %v1987 = vsel %vm1731, %v1688, 0.0
        %1988 = vadd.xlane.f32.xlu0 %v1987
        %v1989 = vpop.xlane.xlu0 %1988
        %v1990 = vsel %vm1731, %v1689, 0.0
        %1991 = vadd.xlane.f32.xlu0 %v1990
        %v1992 = vpop.xlane.xlu0 %1991
        %v1993 = vsel %vm1731, %v1690, 0.0
        %1994 = vadd.xlane.f32.xlu0 %v1993
        %v1995 = vpop.xlane.xlu0 %1994
        %v1996 = vsel %vm1731, %v1691, 0.0
        %1997 = vadd.xlane.f32.xlu0 %v1996
        %v1998 = vpop.xlane.xlu0 %1997
        %v1999 = vsel %vm1731, %v1692, 0.0
        %2000 = vadd.xlane.f32.xlu0 %v1999
        %v2001 = vpop.xlane.xlu0 %2000
        %v2002 = vsel %vm1731, %v1693, 0.0
        %2003 = vadd.xlane.f32.xlu0 %v2002
        %v2004 = vpop.xlane.xlu0 %2003
        %v2005 = vsel %vm1731, %v1694, 0.0
        %2006 = vadd.xlane.f32.xlu0 %v2005
        %v2007 = vpop.xlane.xlu0 %2006
        %v2008 = vsel %vm1731, %v1695, 0.0
        %2009 = vadd.xlane.f32.xlu0 %v2008
        %v2010 = vpop.xlane.xlu0 %2009
        %v2011 = vsel %vm1731, %v1696, 0.0
        %2012 = vadd.xlane.f32.xlu0 %v2011
        %v2013 = vpop.xlane.xlu0 %2012
        %v2014 = vsel %vm1731, %v1697, 0.0
        %2015 = vadd.xlane.f32.xlu0 %v2014
        %v2016 = vpop.xlane.xlu0 %2015
        %v2017 = vsel %vm1731, %v1698, 0.0
        %2018 = vadd.xlane.f32.xlu0 %v2017
        %v2019 = vpop.xlane.xlu0 %2018
        %v2020 = vsel %vm1731, %v1699, 0.0
        %2021 = vadd.xlane.f32.xlu0 %v2020
        %v2022 = vpop.xlane.xlu0 %2021
        %v2023 = vsel %vm1731, %v1700, 0.0
        %2024 = vadd.xlane.f32.xlu0 %v2023
        %v2025 = vpop.xlane.xlu0 %2024
        %v2026 = vsel %vm1731, %v1701, 0.0
        %2027 = vadd.xlane.f32.xlu0 %v2026
        %v2028 = vpop.xlane.xlu0 %2027
        %v2029 = vsel %vm1731, %v1702, 0.0
        %2030 = vadd.xlane.f32.xlu0 %v2029
        %v2031 = vpop.xlane.xlu0 %2030
        %v2032 = vsel %vm1731, %v1703, 0.0
        %2033 = vadd.xlane.f32.xlu0 %v2032
        %v2034 = vpop.xlane.xlu0 %2033
        %v2035 = vsel %vm1731, %v1704, 0.0
        %2036 = vadd.xlane.f32.xlu0 %v2035
        %v2037 = vpop.xlane.xlu0 %2036
        %v2038 = vsel %vm1731, %v1705, 0.0
        %2039 = vadd.xlane.f32.xlu0 %v2038
        %v2040 = vpop.xlane.xlu0 %2039
        %v2041 = vsel %vm1731, %v1706, 0.0
        %2042 = vadd.xlane.f32.xlu0 %v2041
        %v2043 = vpop.xlane.xlu0 %2042
        %v2044 = vsel %vm1731, %v1707, 0.0
        %2045 = vadd.xlane.f32.xlu0 %v2044
        %v2046 = vpop.xlane.xlu0 %2045
        %v2047 = vsel %vm1731, %v1708, 0.0
        %2048 = vadd.xlane.f32.xlu0 %v2047
        %v2049 = vpop.xlane.xlu0 %2048
        %v2050 = vsel %vm1731, %v1709, 0.0
        %2051 = vadd.xlane.f32.xlu0 %v2050
        %v2052 = vpop.xlane.xlu0 %2051
        %v2053 = vsel %vm1731, %v1710, 0.0
        %2054 = vadd.xlane.f32.xlu0 %v2053
        %v2055 = vpop.xlane.xlu0 %2054
        %v2056 = vsel %vm1731, %v1711, 0.0
        %2057 = vadd.xlane.f32.xlu0 %v2056
        %v2058 = vpop.xlane.xlu0 %2057
        %v2059 = vsel %vm1731, %v1712, 0.0
        %2060 = vadd.xlane.f32.xlu0 %v2059
        %v2061 = vpop.xlane.xlu0 %2060
        %v2062 = vsel %vm1731, %v1713, 0.0
        %2063 = vadd.xlane.f32.xlu0 %v2062
        %v2064 = vpop.xlane.xlu0 %2063
        %v2065 = vsel %vm1731, %v1714, 0.0
        %2066 = vadd.xlane.f32.xlu0 %v2065
        %v2067 = vpop.xlane.xlu0 %2066
        %v2068 = vsel %vm1731, %v1715, 0.0
        %2069 = vadd.xlane.f32.xlu0 %v2068
        %v2070 = vpop.xlane.xlu0 %2069
        %v2071 = vsel %vm1731, %v1716, 0.0
        %2072 = vadd.xlane.f32.xlu0 %v2071
        %v2073 = vpop.xlane.xlu0 %2072
        %v2074 = vsel %vm1731, %v1717, 0.0
        %2075 = vadd.xlane.f32.xlu0 %v2074
        %v2076 = vpop.xlane.xlu0 %2075
        %v2077 = vsel %vm1731, %v1718, 0.0
        %2078 = vadd.xlane.f32.xlu0 %v2077
        %v2079 = vpop.xlane.xlu0 %2078
        %v2080 = vsel %vm1731, %v1719, 0.0
        %2081 = vadd.xlane.f32.xlu0 %v2080
        %v2082 = vpop.xlane.xlu0 %2081
        %v2083 = vsel %vm1731, %v1720, 0.0
        %2084 = vadd.xlane.f32.xlu0 %v2083
        %v2085 = vpop.xlane.xlu0 %2084
        %v2086 = vsel %vm1731, %v1721, 0.0
        %2087 = vadd.xlane.f32.xlu0 %v2086
        %v2088 = vpop.xlane.xlu0 %2087
        %v2089 = vsel %vm1731, %v1722, 0.0
        %2090 = vadd.xlane.f32.xlu0 %v2089
        %v2091 = vpop.xlane.xlu0 %2090
        %v2092 = vsel %vm1731, %v1723, 0.0
        %2093 = vadd.xlane.f32.xlu0 %v2092
        %v2094 = vpop.xlane.xlu0 %2093
        %v2095 = vsel %vm1731, %v1724, 0.0
        %2096 = vadd.xlane.f32.xlu0 %v2095
        %v2097 = vpop.xlane.xlu0 %2096
        %v2098 = vsel %vm1731, %v1725, 0.0
        %2099 = vadd.xlane.f32.xlu0 %v2098
        %v2100 = vpop.xlane.xlu0 %2099
        %v2101 = vsel %vm1731, %v1726, 0.0
        %2102 = vadd.xlane.f32.xlu0 %v2101
        %v2103 = vpop.xlane.xlu0 %2102
        %v2104 = vsel %vm1731, %v1727, 0.0
        %2105 = vadd.xlane.f32.xlu0 %v2104
        %v2106 = vpop.xlane.xlu0 %2105
        %v2107 = vsel %vm1731, %v1728, 0.0
        %2108 = vadd.xlane.f32.xlu0 %v2107
        %v2109 = vpop.xlane.xlu0 %2108
        %v2110 = vsel %vm1731, %v1729, 0.0
        %2111 = vadd.xlane.f32.xlu0 %v2110
        %v2112 = vpop.xlane.xlu0 %2111
        %v2113 = vsel %vm1731, %v1730, 0.0
        %2114 = vadd.xlane.f32.xlu0 %v2113
        %v2115 = vpop.xlane.xlu0 %2114
        %v2116 = vld [vmem:[%s241] sm:$0xff]
        %vm2117 = vcmp.ne.s32.totalorder %v2116, 0
        %v2246 = vlaneseq
        %v2247 = vand.u32 %v2246, 127
        %v2248 = vlaneseq
        %v2249 = vshrl.u32 %v2248, 7
        %v2250 = vsub.s32 %v2247, %v2249
        %v2251 = vrot.slane %v1734, %v2250
        %v2252 = vadd.s32 %v2247, 4294967288
        %v2253 = vlaneseq
        %v2254 = vshrl.u32 %v2253, 7
        %v2255 = vsub.s32 %v2252, %v2254
        %v2256 = vrot.slane %v1737, %v2255
        %vm2257 = vcmask 130112
        %v2258 = vsel %vm2257, %v2256, %v2251
        %v2259 = vadd.s32 %v2247, 4294967280
        %v2260 = vlaneseq
        %v2261 = vshrl.u32 %v2260, 7
        %v2262 = vsub.s32 %v2259, %v2261
        %v2263 = vrot.slane %v1740, %v2262
        %vm2264 = vcmask 195712
        %v2265 = vsel %vm2264, %v2263, %v2258
        %v2266 = vadd.s32 %v2247, 4294967272
        %v2267 = vlaneseq
        %v2268 = vshrl.u32 %v2267, 7
        %v2269 = vsub.s32 %v2266, %v2268
        %v2270 = vrot.slane %v1743, %v2269
        %vm2271 = vcmask 261312
        %v2272 = vsel %vm2271, %v2270, %v2265
        %v2273 = vadd.s32 %v2247, 4294967264
        %v2274 = vlaneseq
        %v2275 = vshrl.u32 %v2274, 7
        %v2276 = vsub.s32 %v2273, %v2275
        %v2277 = vrot.slane %v1746, %v2276
        %vm2278 = vcmask 326912
        %v2279 = vsel %vm2278, %v2277, %v2272
        %v2280 = vadd.s32 %v2247, 4294967256
        %v2281 = vlaneseq
        %v2282 = vshrl.u32 %v2281, 7
        %v2283 = vsub.s32 %v2280, %v2282
        %v2284 = vrot.slane %v1749, %v2283
        %vm2285 = vcmask 392512
        %v2286 = vsel %vm2285, %v2284, %v2279
        %v2287 = vadd.s32 %v2247, 4294967248
        %v2288 = vlaneseq
        %v2289 = vshrl.u32 %v2288, 7
        %v2290 = vsub.s32 %v2287, %v2289
        %v2291 = vrot.slane %v1752, %v2290
        %vm2292 = vcmask 458112
        %v2293 = vsel %vm2292, %v2291, %v2286
        %v2294 = vadd.s32 %v2247, 4294967240
        %v2295 = vlaneseq
        %v2296 = vshrl.u32 %v2295, 7
        %v2297 = vsub.s32 %v2294, %v2296
        %v2298 = vrot.slane %v1755, %v2297
        %vm2299 = vcmask 523712
        %v2300 = vsel %vm2299, %v2298, %v2293
        %v2301 = vadd.s32 %v2247, 4294967232
        %v2302 = vlaneseq
        %v2303 = vshrl.u32 %v2302, 7
        %v2304 = vsub.s32 %v2301, %v2303
        %v2305 = vrot.slane %v1758, %v2304
        %vm2306 = vcmask 589312
        %v2307 = vsel %vm2306, %v2305, %v2300
        %v2308 = vadd.s32 %v2247, 4294967224
        %v2309 = vlaneseq
        %v2310 = vshrl.u32 %v2309, 7
        %v2311 = vsub.s32 %v2308, %v2310
        %v2312 = vrot.slane %v1761, %v2311
        %vm2313 = vcmask 654912
        %v2314 = vsel %vm2313, %v2312, %v2307
        %v2315 = vadd.s32 %v2247, 4294967216
        %v2316 = vlaneseq
        %v2317 = vshrl.u32 %v2316, 7
        %v2318 = vsub.s32 %v2315, %v2317
        %v2319 = vrot.slane %v1764, %v2318
        %vm2320 = vcmask 720512
        %v2321 = vsel %vm2320, %v2319, %v2314
        %v2322 = vadd.s32 %v2247, 4294967208
        %v2323 = vlaneseq
        %v2324 = vshrl.u32 %v2323, 7
        %v2325 = vsub.s32 %v2322, %v2324
        %v2326 = vrot.slane %v1767, %v2325
        %vm2327 = vcmask 786112
        %v2328 = vsel %vm2327, %v2326, %v2321
        %v2329 = vadd.s32 %v2247, 4294967200
        %v2330 = vlaneseq
        %v2331 = vshrl.u32 %v2330, 7
        %v2332 = vsub.s32 %v2329, %v2331
        %v2333 = vrot.slane %v1770, %v2332
        %vm2334 = vcmask 851712
        %v2335 = vsel %vm2334, %v2333, %v2328
        %v2336 = vadd.s32 %v2247, 4294967192
        %v2337 = vlaneseq
        %v2338 = vshrl.u32 %v2337, 7
        %v2339 = vsub.s32 %v2336, %v2338
        %v2340 = vrot.slane %v1773, %v2339
        %vm2341 = vcmask 917312
        %v2342 = vsel %vm2341, %v2340, %v2335
        %v2343 = vadd.s32 %v2247, 4294967184
        %v2344 = vlaneseq
        %v2345 = vshrl.u32 %v2344, 7
        %v2346 = vsub.s32 %v2343, %v2345
        %v2347 = vrot.slane %v1776, %v2346
        %vm2348 = vcmask 982912
        %v2349 = vsel %vm2348, %v2347, %v2342
        %v2350 = vadd.s32 %v2247, 4294967176
        %v2351 = vlaneseq
        %v2352 = vshrl.u32 %v2351, 7
        %v2353 = vsub.s32 %v2350, %v2352
        %v2354 = vrot.slane %v1779, %v2353
        %vm2355 = vcmask 1048512
        %v2356 = vsel %vm2355, %v2354, %v2349
        %v2357 = vlaneseq
        %v2358 = vshrl.u32 %v2357, 7
        %v2359 = vsub.s32 %v2247, %v2358
        %v2360 = vrot.slane %v1782, %v2359
        %v2361 = vlaneseq
        %v2362 = vshrl.u32 %v2361, 7
        %v2363 = vsub.s32 %v2252, %v2362
        %v2364 = vrot.slane %v1785, %v2363
        %v2365 = vsel %vm2257, %v2364, %v2360
        %v2366 = vlaneseq
        %v2367 = vshrl.u32 %v2366, 7
        %v2368 = vsub.s32 %v2259, %v2367
        %v2369 = vrot.slane %v1788, %v2368
        %v2370 = vsel %vm2264, %v2369, %v2365
        %v2371 = vlaneseq
        %v2372 = vshrl.u32 %v2371, 7
        %v2373 = vsub.s32 %v2266, %v2372
        %v2374 = vrot.slane %v1791, %v2373
        %v2375 = vsel %vm2271, %v2374, %v2370
        %v2376 = vlaneseq
        %v2377 = vshrl.u32 %v2376, 7
        %v2378 = vsub.s32 %v2273, %v2377
        %v2379 = vrot.slane %v1794, %v2378
        %v2380 = vsel %vm2278, %v2379, %v2375
        %v2381 = vlaneseq
        %v2382 = vshrl.u32 %v2381, 7
        %v2383 = vsub.s32 %v2280, %v2382
        %v2384 = vrot.slane %v1797, %v2383
        %v2385 = vsel %vm2285, %v2384, %v2380
        %v2386 = vlaneseq
        %v2387 = vshrl.u32 %v2386, 7
        %v2388 = vsub.s32 %v2287, %v2387
        %v2389 = vrot.slane %v1800, %v2388
        %v2390 = vsel %vm2292, %v2389, %v2385
        %v2391 = vlaneseq
        %v2392 = vshrl.u32 %v2391, 7
        %v2393 = vsub.s32 %v2294, %v2392
        %v2394 = vrot.slane %v1803, %v2393
        %v2395 = vsel %vm2299, %v2394, %v2390
        %v2396 = vlaneseq
        %v2397 = vshrl.u32 %v2396, 7
        %v2398 = vsub.s32 %v2301, %v2397
        %v2399 = vrot.slane %v1806, %v2398
        %v2400 = vsel %vm2306, %v2399, %v2395
        %v2401 = vlaneseq
        %v2402 = vshrl.u32 %v2401, 7
        %v2403 = vsub.s32 %v2308, %v2402
        %v2404 = vrot.slane %v1809, %v2403
        %v2405 = vsel %vm2313, %v2404, %v2400
        %v2406 = vlaneseq
        %v2407 = vshrl.u32 %v2406, 7
        %v2408 = vsub.s32 %v2315, %v2407
        %v2409 = vrot.slane %v1812, %v2408
        %v2410 = vsel %vm2320, %v2409, %v2405
        %v2411 = vlaneseq
        %v2412 = vshrl.u32 %v2411, 7
        %v2413 = vsub.s32 %v2322, %v2412
        %v2414 = vrot.slane %v1815, %v2413
        %v2415 = vsel %vm2327, %v2414, %v2410
        %v2416 = vlaneseq
        %v2417 = vshrl.u32 %v2416, 7
        %v2418 = vsub.s32 %v2329, %v2417
        %v2419 = vrot.slane %v1818, %v2418
        %v2420 = vsel %vm2334, %v2419, %v2415
        %v2421 = vlaneseq
        %v2422 = vshrl.u32 %v2421, 7
        %v2423 = vsub.s32 %v2336, %v2422
        %v2424 = vrot.slane %v1821, %v2423
        %v2425 = vsel %vm2341, %v2424, %v2420
        %v2426 = vlaneseq
        %v2427 = vshrl.u32 %v2426, 7
        %v2428 = vsub.s32 %v2343, %v2427
        %v2429 = vrot.slane %v1824, %v2428
        %v2430 = vsel %vm2348, %v2429, %v2425
        %v2431 = vlaneseq
        %v2432 = vshrl.u32 %v2431, 7
        %v2433 = vsub.s32 %v2350, %v2432
        %v2434 = vrot.slane %v1827, %v2433
        %v2435 = vsel %vm2355, %v2434, %v2430
        %v2436 = vlaneseq
        %v2437 = vshrl.u32 %v2436, 7
        %v2438 = vsub.s32 %v2247, %v2437
        %v2439 = vrot.slane %v1830, %v2438
        %v2440 = vlaneseq
        %v2441 = vshrl.u32 %v2440, 7
        %v2442 = vsub.s32 %v2252, %v2441
        %v2443 = vrot.slane %v1833, %v2442
        %v2444 = vsel %vm2257, %v2443, %v2439
        %v2445 = vlaneseq
        %v2446 = vshrl.u32 %v2445, 7
        %v2447 = vsub.s32 %v2259, %v2446
        %v2448 = vrot.slane %v1836, %v2447
        %v2449 = vsel %vm2264, %v2448, %v2444
        %v2450 = vlaneseq
        %v2451 = vshrl.u32 %v2450, 7
        %v2452 = vsub.s32 %v2266, %v2451
        %v2453 = vrot.slane %v1839, %v2452
        %v2454 = vsel %vm2271, %v2453, %v2449
        %v2455 = vlaneseq
        %v2456 = vshrl.u32 %v2455, 7
        %v2457 = vsub.s32 %v2273, %v2456
        %v2458 = vrot.slane %v1842, %v2457
        %v2459 = vsel %vm2278, %v2458, %v2454
        %v2460 = vlaneseq
        %v2461 = vshrl.u32 %v2460, 7
        %v2462 = vsub.s32 %v2280, %v2461
        %v2463 = vrot.slane %v1845, %v2462
        %v2464 = vsel %vm2285, %v2463, %v2459
        %v2465 = vlaneseq
        %v2466 = vshrl.u32 %v2465, 7
        %v2467 = vsub.s32 %v2287, %v2466
        %v2468 = vrot.slane %v1848, %v2467
        %v2469 = vsel %vm2292, %v2468, %v2464
        %v2470 = vlaneseq
        %v2471 = vshrl.u32 %v2470, 7
        %v2472 = vsub.s32 %v2294, %v2471
        %v2473 = vrot.slane %v1851, %v2472
        %v2474 = vsel %vm2299, %v2473, %v2469
        %v2475 = vlaneseq
        %v2476 = vshrl.u32 %v2475, 7
        %v2477 = vsub.s32 %v2301, %v2476
        %v2478 = vrot.slane %v1854, %v2477
        %v2479 = vsel %vm2306, %v2478, %v2474
        %v2480 = vlaneseq
        %v2481 = vshrl.u32 %v2480, 7
        %v2482 = vsub.s32 %v2308, %v2481
        %v2483 = vrot.slane %v1857, %v2482
        %v2484 = vsel %vm2313, %v2483, %v2479
        %v2485 = vlaneseq
        %v2486 = vshrl.u32 %v2485, 7
        %v2487 = vsub.s32 %v2315, %v2486
        %v2488 = vrot.slane %v1860, %v2487
        %v2489 = vsel %vm2320, %v2488, %v2484
        %v2490 = vlaneseq
        %v2491 = vshrl.u32 %v2490, 7
        %v2492 = vsub.s32 %v2322, %v2491
        %v2493 = vrot.slane %v1863, %v2492
        %v2494 = vsel %vm2327, %v2493, %v2489
        %v2495 = vlaneseq
        %v2496 = vshrl.u32 %v2495, 7
        %v2497 = vsub.s32 %v2329, %v2496
        %v2498 = vrot.slane %v1866, %v2497
        %v2499 = vsel %vm2334, %v2498, %v2494
        %v2500 = vlaneseq
        %v2501 = vshrl.u32 %v2500, 7
        %v2502 = vsub.s32 %v2336, %v2501
        %v2503 = vrot.slane %v1869, %v2502
        %v2504 = vsel %vm2341, %v2503, %v2499
        %v2505 = vlaneseq
        %v2506 = vshrl.u32 %v2505, 7
        %v2507 = vsub.s32 %v2343, %v2506
        %v2508 = vrot.slane %v1872, %v2507
        %v2509 = vsel %vm2348, %v2508, %v2504
        %v2510 = vlaneseq
        %v2511 = vshrl.u32 %v2510, 7
        %v2512 = vsub.s32 %v2350, %v2511
        %v2513 = vrot.slane %v1875, %v2512
        %v2514 = vsel %vm2355, %v2513, %v2509
        %v2515 = vlaneseq
        %v2516 = vshrl.u32 %v2515, 7
        %v2517 = vsub.s32 %v2247, %v2516
        %v2518 = vrot.slane %v1878, %v2517
        %v2519 = vlaneseq
        %v2520 = vshrl.u32 %v2519, 7
        %v2521 = vsub.s32 %v2252, %v2520
        %v2522 = vrot.slane %v1881, %v2521
        %v2523 = vsel %vm2257, %v2522, %v2518
        %v2524 = vlaneseq
        %v2525 = vshrl.u32 %v2524, 7
        %v2526 = vsub.s32 %v2259, %v2525
        %v2527 = vrot.slane %v1884, %v2526
        %v2528 = vsel %vm2264, %v2527, %v2523
        %v2529 = vlaneseq
        %v2530 = vshrl.u32 %v2529, 7
        %v2531 = vsub.s32 %v2266, %v2530
        %v2532 = vrot.slane %v1887, %v2531
        %v2533 = vsel %vm2271, %v2532, %v2528
        %v2534 = vlaneseq
        %v2535 = vshrl.u32 %v2534, 7
        %v2536 = vsub.s32 %v2273, %v2535
        %v2537 = vrot.slane %v1890, %v2536
        %v2538 = vsel %vm2278, %v2537, %v2533
        %v2539 = vlaneseq
        %v2540 = vshrl.u32 %v2539, 7
        %v2541 = vsub.s32 %v2280, %v2540
        %v2542 = vrot.slane %v1893, %v2541
        %v2543 = vsel %vm2285, %v2542, %v2538
        %v2544 = vlaneseq
        %v2545 = vshrl.u32 %v2544, 7
        %v2546 = vsub.s32 %v2287, %v2545
        %v2547 = vrot.slane %v1896, %v2546
        %v2548 = vsel %vm2292, %v2547, %v2543
        %v2549 = vlaneseq
        %v2550 = vshrl.u32 %v2549, 7
        %v2551 = vsub.s32 %v2294, %v2550
        %v2552 = vrot.slane %v1899, %v2551
        %v2553 = vsel %vm2299, %v2552, %v2548
        %v2554 = vlaneseq
        %v2555 = vshrl.u32 %v2554, 7
        %v2556 = vsub.s32 %v2301, %v2555
        %v2557 = vrot.slane %v1902, %v2556
        %v2558 = vsel %vm2306, %v2557, %v2553
        %v2559 = vlaneseq
        %v2560 = vshrl.u32 %v2559, 7
        %v2561 = vsub.s32 %v2308, %v2560
        %v2562 = vrot.slane %v1905, %v2561
        %v2563 = vsel %vm2313, %v2562, %v2558
        %v2564 = vlaneseq
        %v2565 = vshrl.u32 %v2564, 7
        %v2566 = vsub.s32 %v2315, %v2565
        %v2567 = vrot.slane %v1908, %v2566
        %v2568 = vsel %vm2320, %v2567, %v2563
        %v2569 = vlaneseq
        %v2570 = vshrl.u32 %v2569, 7
        %v2571 = vsub.s32 %v2322, %v2570
        %v2572 = vrot.slane %v1911, %v2571
        %v2573 = vsel %vm2327, %v2572, %v2568
        %v2574 = vlaneseq
        %v2575 = vshrl.u32 %v2574, 7
        %v2576 = vsub.s32 %v2329, %v2575
        %v2577 = vrot.slane %v1914, %v2576
        %v2578 = vsel %vm2334, %v2577, %v2573
        %v2579 = vlaneseq
        %v2580 = vshrl.u32 %v2579, 7
        %v2581 = vsub.s32 %v2336, %v2580
        %v2582 = vrot.slane %v1917, %v2581
        %v2583 = vsel %vm2341, %v2582, %v2578
        %v2584 = vlaneseq
        %v2585 = vshrl.u32 %v2584, 7
        %v2586 = vsub.s32 %v2343, %v2585
        %v2587 = vrot.slane %v1920, %v2586
        %v2588 = vsel %vm2348, %v2587, %v2583
        %v2589 = vlaneseq
        %v2590 = vshrl.u32 %v2589, 7
        %v2591 = vsub.s32 %v2350, %v2590
        %v2592 = vrot.slane %v1923, %v2591
        %v2593 = vsel %vm2355, %v2592, %v2588
        %v2594 = vlaneseq
        %v2595 = vshrl.u32 %v2594, 7
        %v2596 = vsub.s32 %v2247, %v2595
        %v2597 = vrot.slane %v1926, %v2596
        %v2598 = vlaneseq
        %v2599 = vshrl.u32 %v2598, 7
        %v2600 = vsub.s32 %v2252, %v2599
        %v2601 = vrot.slane %v1929, %v2600
        %v2602 = vsel %vm2257, %v2601, %v2597
        %v2603 = vlaneseq
        %v2604 = vshrl.u32 %v2603, 7
        %v2605 = vsub.s32 %v2259, %v2604
        %v2606 = vrot.slane %v1932, %v2605
        %v2607 = vsel %vm2264, %v2606, %v2602
        %v2608 = vlaneseq
        %v2609 = vshrl.u32 %v2608, 7
        %v2610 = vsub.s32 %v2266, %v2609
        %v2611 = vrot.slane %v1935, %v2610
        %v2612 = vsel %vm2271, %v2611, %v2607
        %v2613 = vlaneseq
        %v2614 = vshrl.u32 %v2613, 7
        %v2615 = vsub.s32 %v2273, %v2614
        %v2616 = vrot.slane %v1938, %v2615
        %v2617 = vsel %vm2278, %v2616, %v2612
        %v2618 = vlaneseq
        %v2619 = vshrl.u32 %v2618, 7
        %v2620 = vsub.s32 %v2280, %v2619
        %v2621 = vrot.slane %v1941, %v2620
        %v2622 = vsel %vm2285, %v2621, %v2617
        %v2623 = vlaneseq
        %v2624 = vshrl.u32 %v2623, 7
        %v2625 = vsub.s32 %v2287, %v2624
        %v2626 = vrot.slane %v1944, %v2625
        %v2627 = vsel %vm2292, %v2626, %v2622
        %v2628 = vlaneseq
        %v2629 = vshrl.u32 %v2628, 7
        %v2630 = vsub.s32 %v2294, %v2629
        %v2631 = vrot.slane %v1947, %v2630
        %v2632 = vsel %vm2299, %v2631, %v2627
        %v2633 = vlaneseq
        %v2634 = vshrl.u32 %v2633, 7
        %v2635 = vsub.s32 %v2301, %v2634
        %v2636 = vrot.slane %v1950, %v2635
        %v2637 = vsel %vm2306, %v2636, %v2632
        %v2638 = vlaneseq
        %v2639 = vshrl.u32 %v2638, 7
        %v2640 = vsub.s32 %v2308, %v2639
        %v2641 = vrot.slane %v1953, %v2640
        %v2642 = vsel %vm2313, %v2641, %v2637
        %v2643 = vlaneseq
        %v2644 = vshrl.u32 %v2643, 7
        %v2645 = vsub.s32 %v2315, %v2644
        %v2646 = vrot.slane %v1956, %v2645
        %v2647 = vsel %vm2320, %v2646, %v2642
        %v2648 = vlaneseq
        %v2649 = vshrl.u32 %v2648, 7
        %v2650 = vsub.s32 %v2322, %v2649
        %v2651 = vrot.slane %v1959, %v2650
        %v2652 = vsel %vm2327, %v2651, %v2647
        %v2653 = vlaneseq
        %v2654 = vshrl.u32 %v2653, 7
        %v2655 = vsub.s32 %v2329, %v2654
        %v2656 = vrot.slane %v1962, %v2655
        %v2657 = vsel %vm2334, %v2656, %v2652
        %v2658 = vlaneseq
        %v2659 = vshrl.u32 %v2658, 7
        %v2660 = vsub.s32 %v2336, %v2659
        %v2661 = vrot.slane %v1965, %v2660
        %v2662 = vsel %vm2341, %v2661, %v2657
        %v2663 = vlaneseq
        %v2664 = vshrl.u32 %v2663, 7
        %v2665 = vsub.s32 %v2343, %v2664
        %v2666 = vrot.slane %v1968, %v2665
        %v2667 = vsel %vm2348, %v2666, %v2662
        %v2668 = vlaneseq
        %v2669 = vshrl.u32 %v2668, 7
        %v2670 = vsub.s32 %v2350, %v2669
        %v2671 = vrot.slane %v1971, %v2670
        %v2672 = vsel %vm2355, %v2671, %v2667
        %v2673 = vlaneseq
        %v2674 = vshrl.u32 %v2673, 7
        %v2675 = vsub.s32 %v2247, %v2674
        %v2676 = vrot.slane %v1974, %v2675
        %v2677 = vlaneseq
        %v2678 = vshrl.u32 %v2677, 7
        %v2679 = vsub.s32 %v2252, %v2678
        %v2680 = vrot.slane %v1977, %v2679
        %v2681 = vsel %vm2257, %v2680, %v2676
        %v2682 = vlaneseq
        %v2683 = vshrl.u32 %v2682, 7
        %v2684 = vsub.s32 %v2259, %v2683
        %v2685 = vrot.slane %v1980, %v2684
        %v2686 = vsel %vm2264, %v2685, %v2681
        %v2687 = vlaneseq
        %v2688 = vshrl.u32 %v2687, 7
        %v2689 = vsub.s32 %v2266, %v2688
        %v2690 = vrot.slane %v1983, %v2689
        %v2691 = vsel %vm2271, %v2690, %v2686
        %v2692 = vlaneseq
        %v2693 = vshrl.u32 %v2692, 7
        %v2694 = vsub.s32 %v2273, %v2693
        %v2695 = vrot.slane %v1986, %v2694
        %v2696 = vsel %vm2278, %v2695, %v2691
        %v2697 = vlaneseq
        %v2698 = vshrl.u32 %v2697, 7
        %v2699 = vsub.s32 %v2280, %v2698
        %v2700 = vrot.slane %v1989, %v2699
        %v2701 = vsel %vm2285, %v2700, %v2696
        %v2702 = vlaneseq
        %v2703 = vshrl.u32 %v2702, 7
        %v2704 = vsub.s32 %v2287, %v2703
        %v2705 = vrot.slane %v1992, %v2704
        %v2706 = vsel %vm2292, %v2705, %v2701
        %v2707 = vlaneseq
        %v2708 = vshrl.u32 %v2707, 7
        %v2709 = vsub.s32 %v2294, %v2708
        %v2710 = vrot.slane %v1995, %v2709
        %v2711 = vsel %vm2299, %v2710, %v2706
        %v2712 = vlaneseq
        %v2713 = vshrl.u32 %v2712, 7
        %v2714 = vsub.s32 %v2301, %v2713
        %v2715 = vrot.slane %v1998, %v2714
        %v2716 = vsel %vm2306, %v2715, %v2711
        %v2717 = vlaneseq
        %v2718 = vshrl.u32 %v2717, 7
        %v2719 = vsub.s32 %v2308, %v2718
        %v2720 = vrot.slane %v2001, %v2719
        %v2721 = vsel %vm2313, %v2720, %v2716
        %v2722 = vlaneseq
        %v2723 = vshrl.u32 %v2722, 7
        %v2724 = vsub.s32 %v2315, %v2723
        %v2725 = vrot.slane %v2004, %v2724
        %v2726 = vsel %vm2320, %v2725, %v2721
        %v2727 = vlaneseq
        %v2728 = vshrl.u32 %v2727, 7
        %v2729 = vsub.s32 %v2322, %v2728
        %v2730 = vrot.slane %v2007, %v2729
        %v2731 = vsel %vm2327, %v2730, %v2726
        %v2732 = vlaneseq
        %v2733 = vshrl.u32 %v2732, 7
        %v2734 = vsub.s32 %v2329, %v2733
        %v2735 = vrot.slane %v2010, %v2734
        %v2736 = vsel %vm2334, %v2735, %v2731
        %v2737 = vlaneseq
        %v2738 = vshrl.u32 %v2737, 7
        %v2739 = vsub.s32 %v2336, %v2738
        %v2740 = vrot.slane %v2013, %v2739
        %v2741 = vsel %vm2341, %v2740, %v2736
        %v2742 = vlaneseq
        %v2743 = vshrl.u32 %v2742, 7
        %v2744 = vsub.s32 %v2343, %v2743
        %v2745 = vrot.slane %v2016, %v2744
        %v2746 = vsel %vm2348, %v2745, %v2741
        %v2747 = vlaneseq
        %v2748 = vshrl.u32 %v2747, 7
        %v2749 = vsub.s32 %v2350, %v2748
        %v2750 = vrot.slane %v2019, %v2749
        %v2751 = vsel %vm2355, %v2750, %v2746
        %v2752 = vlaneseq
        %v2753 = vshrl.u32 %v2752, 7
        %v2754 = vsub.s32 %v2247, %v2753
        %v2755 = vrot.slane %v2022, %v2754
        %v2756 = vlaneseq
        %v2757 = vshrl.u32 %v2756, 7
        %v2758 = vsub.s32 %v2252, %v2757
        %v2759 = vrot.slane %v2025, %v2758
        %v2760 = vsel %vm2257, %v2759, %v2755
        %v2761 = vlaneseq
        %v2762 = vshrl.u32 %v2761, 7
        %v2763 = vsub.s32 %v2259, %v2762
        %v2764 = vrot.slane %v2028, %v2763
        %v2765 = vsel %vm2264, %v2764, %v2760
        %v2766 = vlaneseq
        %v2767 = vshrl.u32 %v2766, 7
        %v2768 = vsub.s32 %v2266, %v2767
        %v2769 = vrot.slane %v2031, %v2768
        %v2770 = vsel %vm2271, %v2769, %v2765
        %v2771 = vlaneseq
        %v2772 = vshrl.u32 %v2771, 7
        %v2773 = vsub.s32 %v2273, %v2772
        %v2774 = vrot.slane %v2034, %v2773
        %v2775 = vsel %vm2278, %v2774, %v2770
        %v2776 = vlaneseq
        %v2777 = vshrl.u32 %v2776, 7
        %v2778 = vsub.s32 %v2280, %v2777
        %v2779 = vrot.slane %v2037, %v2778
        %v2780 = vsel %vm2285, %v2779, %v2775
        %v2781 = vlaneseq
        %v2782 = vshrl.u32 %v2781, 7
        %v2783 = vsub.s32 %v2287, %v2782
        %v2784 = vrot.slane %v2040, %v2783
        %v2785 = vsel %vm2292, %v2784, %v2780
        %v2786 = vlaneseq
        %v2787 = vshrl.u32 %v2786, 7
        %v2788 = vsub.s32 %v2294, %v2787
        %v2789 = vrot.slane %v2043, %v2788
        %v2790 = vsel %vm2299, %v2789, %v2785
        %v2791 = vlaneseq
        %v2792 = vshrl.u32 %v2791, 7
        %v2793 = vsub.s32 %v2301, %v2792
        %v2794 = vrot.slane %v2046, %v2793
        %v2795 = vsel %vm2306, %v2794, %v2790
        %v2796 = vlaneseq
        %v2797 = vshrl.u32 %v2796, 7
        %v2798 = vsub.s32 %v2308, %v2797
        %v2799 = vrot.slane %v2049, %v2798
        %v2800 = vsel %vm2313, %v2799, %v2795
        %v2801 = vlaneseq
        %v2802 = vshrl.u32 %v2801, 7
        %v2803 = vsub.s32 %v2315, %v2802
        %v2804 = vrot.slane %v2052, %v2803
        %v2805 = vsel %vm2320, %v2804, %v2800
        %v2806 = vlaneseq
        %v2807 = vshrl.u32 %v2806, 7
        %v2808 = vsub.s32 %v2322, %v2807
        %v2809 = vrot.slane %v2055, %v2808
        %v2810 = vsel %vm2327, %v2809, %v2805
        %v2811 = vlaneseq
        %v2812 = vshrl.u32 %v2811, 7
        %v2813 = vsub.s32 %v2329, %v2812
        %v2814 = vrot.slane %v2058, %v2813
        %v2815 = vsel %vm2334, %v2814, %v2810
        %v2816 = vlaneseq
        %v2817 = vshrl.u32 %v2816, 7
        %v2818 = vsub.s32 %v2336, %v2817
        %v2819 = vrot.slane %v2061, %v2818
        %v2820 = vsel %vm2341, %v2819, %v2815
        %v2821 = vlaneseq
        %v2822 = vshrl.u32 %v2821, 7
        %v2823 = vsub.s32 %v2343, %v2822
        %v2824 = vrot.slane %v2064, %v2823
        %v2825 = vsel %vm2348, %v2824, %v2820
        %v2826 = vlaneseq
        %v2827 = vshrl.u32 %v2826, 7
        %v2828 = vsub.s32 %v2350, %v2827
        %v2829 = vrot.slane %v2067, %v2828
        %v2830 = vsel %vm2355, %v2829, %v2825
        %v2831 = vlaneseq
        %v2832 = vshrl.u32 %v2831, 7
        %v2833 = vsub.s32 %v2247, %v2832
        %v2834 = vrot.slane %v2070, %v2833
        %v2835 = vlaneseq
        %v2836 = vshrl.u32 %v2835, 7
        %v2837 = vsub.s32 %v2252, %v2836
        %v2838 = vrot.slane %v2073, %v2837
        %v2839 = vsel %vm2257, %v2838, %v2834
        %v2840 = vlaneseq
        %v2841 = vshrl.u32 %v2840, 7
        %v2842 = vsub.s32 %v2259, %v2841
        %v2843 = vrot.slane %v2076, %v2842
        %v2844 = vsel %vm2264, %v2843, %v2839
        %v2845 = vlaneseq
        %v2846 = vshrl.u32 %v2845, 7
        %v2847 = vsub.s32 %v2266, %v2846
        %v2848 = vrot.slane %v2079, %v2847
        %v2849 = vsel %vm2271, %v2848, %v2844
        %v2850 = vlaneseq
        %v2851 = vshrl.u32 %v2850, 7
        %v2852 = vsub.s32 %v2273, %v2851
        %v2853 = vrot.slane %v2082, %v2852
        %v2854 = vsel %vm2278, %v2853, %v2849
        %v2855 = vlaneseq
        %v2856 = vshrl.u32 %v2855, 7
        %v2857 = vsub.s32 %v2280, %v2856
        %v2858 = vrot.slane %v2085, %v2857
        %v2859 = vsel %vm2285, %v2858, %v2854
        %v2860 = vlaneseq
        %v2861 = vshrl.u32 %v2860, 7
        %v2862 = vsub.s32 %v2287, %v2861
        %v2863 = vrot.slane %v2088, %v2862
        %v2864 = vsel %vm2292, %v2863, %v2859
        %v2865 = vlaneseq
        %v2866 = vshrl.u32 %v2865, 7
        %v2867 = vsub.s32 %v2294, %v2866
        %v2868 = vrot.slane %v2091, %v2867
        %v2869 = vsel %vm2299, %v2868, %v2864
        %v2870 = vlaneseq
        %v2871 = vshrl.u32 %v2870, 7
        %v2872 = vsub.s32 %v2301, %v2871
        %v2873 = vrot.slane %v2094, %v2872
        %v2874 = vsel %vm2306, %v2873, %v2869
        %v2875 = vlaneseq
        %v2876 = vshrl.u32 %v2875, 7
        %v2877 = vsub.s32 %v2308, %v2876
        %v2878 = vrot.slane %v2097, %v2877
        %v2879 = vsel %vm2313, %v2878, %v2874
        %v2880 = vlaneseq
        %v2881 = vshrl.u32 %v2880, 7
        %v2882 = vsub.s32 %v2315, %v2881
        %v2883 = vrot.slane %v2100, %v2882
        %v2884 = vsel %vm2320, %v2883, %v2879
        %v2885 = vlaneseq
        %v2886 = vshrl.u32 %v2885, 7
        %v2887 = vsub.s32 %v2322, %v2886
        %v2888 = vrot.slane %v2103, %v2887
        %v2889 = vsel %vm2327, %v2888, %v2884
        %v2890 = vlaneseq
        %v2891 = vshrl.u32 %v2890, 7
        %v2892 = vsub.s32 %v2329, %v2891
        %v2893 = vrot.slane %v2106, %v2892
        %v2894 = vsel %vm2334, %v2893, %v2889
        %v2895 = vlaneseq
        %v2896 = vshrl.u32 %v2895, 7
        %v2897 = vsub.s32 %v2336, %v2896
        %v2898 = vrot.slane %v2109, %v2897
        %v2899 = vsel %vm2341, %v2898, %v2894
        %v2900 = vlaneseq
        %v2901 = vshrl.u32 %v2900, 7
        %v2902 = vsub.s32 %v2343, %v2901
        %v2903 = vrot.slane %v2112, %v2902
        %v2904 = vsel %vm2348, %v2903, %v2899
        %v2905 = vlaneseq
        %v2906 = vshrl.u32 %v2905, 7
        %v2907 = vsub.s32 %v2350, %v2906
        %v2908 = vrot.slane %v2115, %v2907
        %v2909 = vsel %vm2355, %v2908, %v2904
        %vm2910 = vcmask 1041409
        %v2911 = vsel %vm2910, %v2435, %v2356
        %vm2912 = vcmask 1042434
        %v2913 = vsel %vm2912, %v2514, %v2911
        %vm2914 = vcmask 1043459
        %v2915 = vsel %vm2914, %v2593, %v2913
        %vm2916 = vcmask 1044484
        %v2917 = vsel %vm2916, %v2672, %v2915
        %vm2918 = vcmask 1045509
        %v2919 = vsel %vm2918, %v2751, %v2917
        %vm2920 = vcmask 1046534
        %v2921 = vsel %vm2920, %v2830, %v2919
        %vm2922 = vcmask 1047559
        %v2923 = vsel %vm2922, %v2909, %v2921
        %v2925 = vsel %vm2117, -inf, %v2923
        %2926 = vmax.xlane.f32.xlu0 %v2925
        %v2927 = vpop.xlane.xlu0 %2926
        %v2928 = vsub.f32 %v2925, %v2927
        %v2929 = vmul.f32 %v2928, 1.442695
        %v2930 = vpow.pop %v2929
        %2931 = vadd.xlane.f32.xlu0 %v2930
        %v2932 = vpop.xlane.xlu0 %2931
        %v2933 = vrcp.pop %v2932
        %v2934 = vmul.f32 %v2932, %v2933
        %v2935 = vsub.f32 2.0, %v2934
        %v2936 = vmul.f32 %v2933, %v2935
        %v2937 = vmul.f32 %v2930, %v2936
        %2938 = vst [vmem:[%s231] sm:$0xff] %v2937
        %s2939 = sand.u32 %s142, 1
        %s2940 = scalar_lea.sflag [#allocation3], %s2939
        %s2941 = sand.u32 %s142, 1
        %s2942 = smul.addr %s2941, 8
        %s2943 = scalar_lea.vmem [#allocation2], %s2942
        // Predicated region
        $region41: #{tpu_custom_call.1} parent=39 // pred_check
          %p2944 = pneg %p152
        $region42: #{tpu_custom_call.1} parent=39 // pred_check_branch
          %2946 = sbr.rel (%p2944) target = $region44
        $region43: #{tpu_custom_call.1} parent=39 // pred_region
          %s2948 = ssub.s32 128, 128
          %2949 = vsyncadd %s2940, %s2948
          %s2950 = smul.addr %s19, 128
          %s2951 = scalar_lea.hbm %s5, %s2950
          %s2953 = sshll.u32 %s2943, 4
          %s2954 = int_to_ptr.vmem [resolvable:$true] %s2953
          %2956 = dma.vmem_to_hbm [thread:$0]  %s2954, 128, %s2951, %s2940
        $region44: #{tpu_custom_call.1} parent=39 // pred_fallthru
          _
      $region40: #{tpu_custom_call.1} parent=5 // pred_fallthru
        _
      %p2957 = scmp.le.s32.totalorder 2, %s14
      // Predicated region
      $region45: #{tpu_custom_call.1} parent=5 // pred_check
        %p2958 = pneg %p2957
      $region46: #{tpu_custom_call.1} parent=5 // pred_check_branch
        %2960 = sbr.rel (%p2958) target = $region48
      $region47: #{tpu_custom_call.1} parent=5 // pred_region
        %s2961 = ssub.s32 %s14, 2
        // Predicated region
        $region49: #{tpu_custom_call.1} parent=47 // pred_check
          %p2962 = pneg %p158
        $region50: #{tpu_custom_call.1} parent=47 // pred_check_branch
          %2964 = sbr.rel (%p2962) target = $region52
        $region51: #{tpu_custom_call.1} parent=47 // pred_region
          %s2965 = sand.u32 %s143, 1
          %s2966 = scalar_lea.sflag [#allocation3], %s2965
          %s2967 = sand.u32 %s143, 1
          %s2968 = smul.addr %s2967, 8
          %s2969 = scalar_lea.vmem [#allocation2], %s2968
          %2970 = dma.done %s2966, 128
        $region52: #{tpu_custom_call.1} parent=47 // pred_fallthru
          _
      $region48: #{tpu_custom_call.1} parent=5 // pred_fallthru
        _
    $region6: #{tpu_custom_call.1} parent=1 // loop_footer
      %s18 = sadd.s32 1, %s14
    $region7: #{tpu_custom_call.1} parent=1 // loop_footer_branch
      %13 = sbr.rel target = $region3
    $region8: #{tpu_custom_call.1} parent=1 // loop_exit
      _
    %2971 = vsyncpa [#allocation3], 1
    %s2972 = scalar_lea.sflag [#allocation3], 1
    %2973 = vsyncpa %s2972, 1

</llo_original>
